<compile_context>
chip_gen: v6e
topology: v6e:2x2x1
jax: 0.10.0
libtpu: 0.0.40
codegen_flags: <defaults>
</compile_context>

<pallas_src>
import functools

import jax
import jax.numpy as jnp
from jax.experimental import pallas as pl
from jax.experimental.pallas import tpu as pltpu


def _conv_bn_silu_kernel(x_ref, w_ref, bias_ref, o_ref, *, K, Wp):
    # x_ref:    (L, C1)         bf16  one padded image, spatial flattened (L = Hp*Wp + K-1)
    # w_ref:    (K*K, C1, C2P)  bf16  conv weights with BN scale folded in, Cout padded to 128
    # bias_ref: (1, C2P)        f32   folded BN bias (beta - mean*scale)
    # o_ref:    (R, C2P)        bf16  R = H*Wp output rows (cols w >= W are garbage, sliced off)
    R, C2P = o_ref.shape
    acc = jnp.zeros((R, C2P), jnp.float32)
    # K*K taps: each tap is a contiguous row-offset slice of x_ref, so every term is a
    # clean MXU dot with no relayout / no lane concat (static unroll; 9 taps for k=3).
    for t in range(K * K):
        ki, kj = t // K, t % K
        off = ki * Wp + kj
        acc = acc + jnp.dot(x_ref[off:off + R, :], w_ref[t],
                            preferred_element_type=jnp.float32)
    y = acc + bias_ref[...]               # folded BatchNorm bias (f32)
    # TODO(synk): bf16 epilogue would be ~2x cheaper on v6e/v7x VPU/EUP; f32 kept for v5e + accuracy.
    y = y * jax.nn.sigmoid(y)             # SiLU (EUP)
    o_ref[...] = y.astype(o_ref.dtype)


def conv_bn_silu(x_nchw, weight, bn_gamma, bn_beta, bn_mean, bn_var, eps=1e-5):
    """Inference Conv->BN->SiLU. x_nchw: (N,C1,H,W) f32; weight: (C2,C1,K,K) OIHW."""
    N, C1, H, W = x_nchw.shape
    C2, C1w, K, K2 = weight.shape
    assert C1w == C1 and K == K2
    assert K % 2 == 1, "only odd k / stride=1 / dilation=1 / groups=1 implemented"
    pad = K // 2
    Hp, Wp = H + 2 * pad, W + 2 * pad
    R = H * Wp                  # rows computed per image (incl. Wp-W garbage cols per row)
    L = Hp * Wp + (K - 1)       # input rows per image (+K-1 so every tap slice is in-bounds)

    # ---- input: NCHW -> NHWC, cast to bf16 EARLY, zero-pad, flatten spatial ----
    x = jnp.transpose(x_nchw, (0, 2, 3, 1)).astype(jnp.bfloat16)        # (N,H,W,C1)
    x = jnp.pad(x, ((0, 0), (pad, pad), (pad, pad), (0, 0)))            # (N,Hp,Wp,C1)
    x = x.reshape(N, Hp * Wp, C1)
    x = jnp.pad(x, ((0, 0), (0, K - 1), (0, 0)))                        # (N,L,C1)

    # ---- weights: OIHW -> (K*K, C1, C2P); fold BN scale in f32; pad Cout to 128 lanes ----
    scale = (bn_gamma / jnp.sqrt(bn_var + eps)).astype(jnp.float32)     # (C2,)
    bias = (bn_beta - bn_mean * scale).astype(jnp.float32)
    w = jnp.transpose(weight, (2, 3, 1, 0)) * scale[None, None, None, :]  # (K,K,C1,C2) f32
    C2P = ((C2 + 127) // 128) * 128
    w = jnp.pad(w.reshape(K * K, C1, C2), ((0, 0), (0, 0), (0, C2P - C2))).astype(jnp.bfloat16)
    bias_p = jnp.pad(bias, (0, C2P - C2)).reshape(1, C2P)
    # NOTE: for production C1 >= 32 the contraction/lane fill of the MXU is fine; the demo's
    # C1=4 underfills lanes but is test-scale only.

    # ---- VMEM budget per grid step (double-buffered pipeline) & advisory cost ----
    x_blk, w_blk = L * C1 * 2, K * K * C1 * C2P * 2
    b_blk, o_blk = C2P * 4, R * C2P * 2
    acc_bytes = R * C2P * 4
    needed = 2 * (x_blk + w_blk + b_blk + o_blk) + acc_bytes
    # never below the 32 MiB default; cap at 64 MiB so the limit is also valid on v7x
    vmem_limit = int(max(32 << 20, min(2 * needed + (4 << 20), 64 << 20)))

    cost = pl.CostEstimate(
        flops=int(2 * N * R * K * K * C1 * C2P),
        transcendentals=int(N * R * C2P),
        bytes_accessed=int(N * x_blk + w_blk + b_blk + N * o_blk),
    )

    kernel = functools.partial(_conv_bn_silu_kernel, K=K, Wp=Wp)
    out = pl.pallas_call(
        kernel,
        out_shape=jax.ShapeDtypeStruct((N, R, C2P), jnp.bfloat16),
        grid_spec=pltpu.PrefetchScalarGridSpec(
            num_scalar_prefetch=0,
            grid=(N,),     # demo N=2: even number of parallel tiles for v7x's 2 TensorCores
            in_specs=[
                pl.BlockSpec((None, L, C1), lambda n: (n, 0, 0)),      # per-image slab
                pl.BlockSpec((K * K, C1, C2P), lambda n: (0, 0, 0)),   # grid-invariant weights
                pl.BlockSpec((1, C2P), lambda n: (0, 0)),              # grid-invariant bias
                # NOTE: the invariant blocks could take pipeline_mode=pl.Buffered(1) to drop the
                # redundant second buffer; left at the default for lowering portability.
            ],
            out_specs=pl.BlockSpec((None, R, C2P), lambda n: (n, 0, 0)),
        ),
        compiler_params=pltpu.CompilerParams(
            dimension_semantics=("parallel",),
            vmem_limit_bytes=vmem_limit),
        cost_estimate=cost,
    )(x, w, bias_p)

    # ---- strip garbage columns / padded channels, back to PyTorch NCHW f32 ----
    # (If the downstream consumer accepts NHWC/bf16, return `out_nhwc` directly and skip this.)
    out_nhwc = out.reshape(N, H, Wp, C2P)[:, :, :W, :C2]
    return jnp.transpose(out_nhwc, (0, 3, 1, 2)).astype(jnp.float32)


def _reference(x_nchw, weight, bn_gamma, bn_beta, bn_mean, bn_var, eps=1e-5):
    """Pure-JAX reference (lax.conv) for correctness checking."""
    y = jax.lax.conv_general_dilated(
        x_nchw, weight, window_strides=(1, 1), padding="SAME",
        dimension_numbers=("NCHW", "OIHW", "NCHW"))
    scale = bn_gamma / jnp.sqrt(bn_var + eps)
    bias = bn_beta - bn_mean * scale
    y = y * scale[None, :, None, None] + bias[None, :, None, None]
    return y * jax.nn.sigmoid(y)


if __name__ == "__main__":
    # Module config: Conv(c1=4, c2=8, k=3, s=1) -> autopad=1, groups=1, dilation=1, SiLU.
    N, C1, C2, H, W, K = 2, 4, 8, 16, 16, 3

    key = jax.random.PRNGKey(0)
    kx, kw, kg, kb, km, kv = jax.random.split(key, 6)

    x = jax.random.normal(kx, (N, C1, H, W), dtype=jnp.float32)
    weight = jax.random.normal(kw, (C2, C1, K, K), dtype=jnp.float32) * 0.1
    bn_gamma = 1.0 + 0.1 * jax.random.normal(kg, (C2,), dtype=jnp.float32)
    bn_beta = 0.1 * jax.random.normal(kb, (C2,), dtype=jnp.float32)
    bn_mean = 0.05 * jax.random.normal(km, (C2,), dtype=jnp.float32)
    bn_var = jnp.abs(1.0 + 0.1 * jax.random.normal(kv, (C2,), dtype=jnp.float32))

    out = conv_bn_silu(x, weight, bn_gamma, bn_beta, bn_mean, bn_var)
    out = jax.block_until_ready(out)

    ref = _reference(x, weight, bn_gamma, bn_beta, bn_mean, bn_var)
    assert out.shape == (N, C2, H, W)
    # bf16 matmul operands + bf16 kernel output (f32 accumulation): loosened tolerance.
    assert jnp.allclose(out, ref, atol=3e-2, rtol=3e-2), "mismatch vs reference"

    print("KERNEL_OK")
</pallas_src>

<mosaic_0001>
module attributes {stable_mosaic.version = 11 : i64} {
  func.func @_conv_bn_silu_kernel(%arg0: i32, %arg1: memref<1x326x4xbf16, #tpu.memory_space<vmem>>, %arg2: memref<9x4x128xbf16, #tpu.memory_space<vmem>>, %arg3: memref<1x128xf32, #tpu.memory_space<vmem>>, %arg4: memref<1x288x128xbf16, #tpu.memory_space<vmem>>) attributes {dimension_semantics = [#tpu.dimension_semantics<parallel>], iteration_bounds = array<i64: 2>, scalar_prefetch = 0 : i64, scratch_operands = 0 : i64, tpu.core_type = #tpu.core_type<tc>, window_params = [{transform_indices = @transform_0, window_bounds = array<i64: 1, 326, 4>}, {pipeline_mode = #tpu.pipeline_mode<synchronous>, transform_indices = @transform_1, window_bounds = array<i64: 9, 4, 128>}, {pipeline_mode = #tpu.pipeline_mode<synchronous>, transform_indices = @transform_2, window_bounds = array<i64: 1, 128>}, {transform_indices = @transform_3, window_bounds = array<i64: 1, 288, 128>}]} {
    %cst = arith.constant 0.000000e+00 : f32
    %0 = vector.broadcast %cst : f32 to vector<288x128xf32>
    %c0 = arith.constant 0 : index
    %c0_0 = arith.constant 0 : index
    %c0_1 = arith.constant 0 : index
    %1 = vector.load %arg1[%c0, %c0_0, %c0_1] : memref<1x326x4xbf16, #tpu.memory_space<vmem>>, vector<1x288x4xbf16>
    %2 = vector.shape_cast %1 : vector<1x288x4xbf16> to vector<288x4xbf16>
    %c0_2 = arith.constant 0 : index
    %c0_3 = arith.constant 0 : index
    %c0_4 = arith.constant 0 : index
    %3 = vector.load %arg2[%c0_2, %c0_3, %c0_4] : memref<9x4x128xbf16, #tpu.memory_space<vmem>>, vector<1x4x128xbf16>
    %4 = vector.shape_cast %3 : vector<1x4x128xbf16> to vector<4x128xbf16>
    %cst_5 = arith.constant dense<0.000000e+00> : vector<288x128xf32>
    %5 = tpu.matmul %2, %4, %cst_5 {dimension_numbers = #tpu.dot_dimension_numbers<[1], [0], [0], [1], [0, 0, 1, 1], [], []>} : vector<288x4xbf16>, vector<4x128xbf16>, vector<288x128xf32> -> vector<288x128xf32>
    %6 = arith.addf %0, %5 : vector<288x128xf32>
    %c0_6 = arith.constant 0 : index
    %c1 = arith.constant 1 : index
    %c0_7 = arith.constant 0 : index
    %7 = vector.load %arg1[%c0_6, %c1, %c0_7] : memref<1x326x4xbf16, #tpu.memory_space<vmem>>, vector<1x288x4xbf16>
    %8 = vector.shape_cast %7 : vector<1x288x4xbf16> to vector<288x4xbf16>
    %c1_8 = arith.constant 1 : index
    %c0_9 = arith.constant 0 : index
    %c0_10 = arith.constant 0 : index
    %9 = vector.load %arg2[%c1_8, %c0_9, %c0_10] : memref<9x4x128xbf16, #tpu.memory_space<vmem>>, vector<1x4x128xbf16>
    %10 = vector.shape_cast %9 : vector<1x4x128xbf16> to vector<4x128xbf16>
    %cst_11 = arith.constant dense<0.000000e+00> : vector<288x128xf32>
    %11 = tpu.matmul %8, %10, %cst_11 {dimension_numbers = #tpu.dot_dimension_numbers<[1], [0], [0], [1], [0, 0, 1, 1], [], []>} : vector<288x4xbf16>, vector<4x128xbf16>, vector<288x128xf32> -> vector<288x128xf32>
    %12 = arith.addf %6, %11 : vector<288x128xf32>
    %c0_12 = arith.constant 0 : index
    %c2 = arith.constant 2 : index
    %c0_13 = arith.constant 0 : index
    %13 = vector.load %arg1[%c0_12, %c2, %c0_13] : memref<1x326x4xbf16, #tpu.memory_space<vmem>>, vector<1x288x4xbf16>
    %14 = vector.shape_cast %13 : vector<1x288x4xbf16> to vector<288x4xbf16>
    %c2_14 = arith.constant 2 : index
    %c0_15 = arith.constant 0 : index
    %c0_16 = arith.constant 0 : index
    %15 = vector.load %arg2[%c2_14, %c0_15, %c0_16] : memref<9x4x128xbf16, #tpu.memory_space<vmem>>, vector<1x4x128xbf16>
    %16 = vector.shape_cast %15 : vector<1x4x128xbf16> to vector<4x128xbf16>
    %cst_17 = arith.constant dense<0.000000e+00> : vector<288x128xf32>
    %17 = tpu.matmul %14, %16, %cst_17 {dimension_numbers = #tpu.dot_dimension_numbers<[1], [0], [0], [1], [0, 0, 1, 1], [], []>} : vector<288x4xbf16>, vector<4x128xbf16>, vector<288x128xf32> -> vector<288x128xf32>
    %18 = arith.addf %12, %17 : vector<288x128xf32>
    %c0_18 = arith.constant 0 : index
    %c18 = arith.constant 18 : index
    %c0_19 = arith.constant 0 : index
    %19 = vector.load %arg1[%c0_18, %c18, %c0_19] : memref<1x326x4xbf16, #tpu.memory_space<vmem>>, vector<1x288x4xbf16>
    %20 = vector.shape_cast %19 : vector<1x288x4xbf16> to vector<288x4xbf16>
    %c3 = arith.constant 3 : index
    %c0_20 = arith.constant 0 : index
    %c0_21 = arith.constant 0 : index
    %21 = vector.load %arg2[%c3, %c0_20, %c0_21] : memref<9x4x128xbf16, #tpu.memory_space<vmem>>, vector<1x4x128xbf16>
    %22 = vector.shape_cast %21 : vector<1x4x128xbf16> to vector<4x128xbf16>
    %cst_22 = arith.constant dense<0.000000e+00> : vector<288x128xf32>
    %23 = tpu.matmul %20, %22, %cst_22 {dimension_numbers = #tpu.dot_dimension_numbers<[1], [0], [0], [1], [0, 0, 1, 1], [], []>} : vector<288x4xbf16>, vector<4x128xbf16>, vector<288x128xf32> -> vector<288x128xf32>
    %24 = arith.addf %18, %23 : vector<288x128xf32>
    %c0_23 = arith.constant 0 : index
    %c19 = arith.constant 19 : index
    %c0_24 = arith.constant 0 : index
    %25 = vector.load %arg1[%c0_23, %c19, %c0_24] : memref<1x326x4xbf16, #tpu.memory_space<vmem>>, vector<1x288x4xbf16>
    %26 = vector.shape_cast %25 : vector<1x288x4xbf16> to vector<288x4xbf16>
    %c4 = arith.constant 4 : index
    %c0_25 = arith.constant 0 : index
    %c0_26 = arith.constant 0 : index
    %27 = vector.load %arg2[%c4, %c0_25, %c0_26] : memref<9x4x128xbf16, #tpu.memory_space<vmem>>, vector<1x4x128xbf16>
    %28 = vector.shape_cast %27 : vector<1x4x128xbf16> to vector<4x128xbf16>
    %cst_27 = arith.constant dense<0.000000e+00> : vector<288x128xf32>
    %29 = tpu.matmul %26, %28, %cst_27 {dimension_numbers = #tpu.dot_dimension_numbers<[1], [0], [0], [1], [0, 0, 1, 1], [], []>} : vector<288x4xbf16>, vector<4x128xbf16>, vector<288x128xf32> -> vector<288x128xf32>
    %30 = arith.addf %24, %29 : vector<288x128xf32>
    %c0_28 = arith.constant 0 : index
    %c20 = arith.constant 20 : index
    %c0_29 = arith.constant 0 : index
    %31 = vector.load %arg1[%c0_28, %c20, %c0_29] : memref<1x326x4xbf16, #tpu.memory_space<vmem>>, vector<1x288x4xbf16>
    %32 = vector.shape_cast %31 : vector<1x288x4xbf16> to vector<288x4xbf16>
    %c5 = arith.constant 5 : index
    %c0_30 = arith.constant 0 : index
    %c0_31 = arith.constant 0 : index
    %33 = vector.load %arg2[%c5, %c0_30, %c0_31] : memref<9x4x128xbf16, #tpu.memory_space<vmem>>, vector<1x4x128xbf16>
    %34 = vector.shape_cast %33 : vector<1x4x128xbf16> to vector<4x128xbf16>
    %cst_32 = arith.constant dense<0.000000e+00> : vector<288x128xf32>
    %35 = tpu.matmul %32, %34, %cst_32 {dimension_numbers = #tpu.dot_dimension_numbers<[1], [0], [0], [1], [0, 0, 1, 1], [], []>} : vector<288x4xbf16>, vector<4x128xbf16>, vector<288x128xf32> -> vector<288x128xf32>
    %36 = arith.addf %30, %35 : vector<288x128xf32>
    %c0_33 = arith.constant 0 : index
    %c36 = arith.constant 36 : index
    %c0_34 = arith.constant 0 : index
    %37 = vector.load %arg1[%c0_33, %c36, %c0_34] : memref<1x326x4xbf16, #tpu.memory_space<vmem>>, vector<1x288x4xbf16>
    %38 = vector.shape_cast %37 : vector<1x288x4xbf16> to vector<288x4xbf16>
    %c6 = arith.constant 6 : index
    %c0_35 = arith.constant 0 : index
    %c0_36 = arith.constant 0 : index
    %39 = vector.load %arg2[%c6, %c0_35, %c0_36] : memref<9x4x128xbf16, #tpu.memory_space<vmem>>, vector<1x4x128xbf16>
    %40 = vector.shape_cast %39 : vector<1x4x128xbf16> to vector<4x128xbf16>
    %cst_37 = arith.constant dense<0.000000e+00> : vector<288x128xf32>
    %41 = tpu.matmul %38, %40, %cst_37 {dimension_numbers = #tpu.dot_dimension_numbers<[1], [0], [0], [1], [0, 0, 1, 1], [], []>} : vector<288x4xbf16>, vector<4x128xbf16>, vector<288x128xf32> -> vector<288x128xf32>
    %42 = arith.addf %36, %41 : vector<288x128xf32>
    %c0_38 = arith.constant 0 : index
    %c37 = arith.constant 37 : index
    %c0_39 = arith.constant 0 : index
    %43 = vector.load %arg1[%c0_38, %c37, %c0_39] : memref<1x326x4xbf16, #tpu.memory_space<vmem>>, vector<1x288x4xbf16>
    %44 = vector.shape_cast %43 : vector<1x288x4xbf16> to vector<288x4xbf16>
    %c7 = arith.constant 7 : index
    %c0_40 = arith.constant 0 : index
    %c0_41 = arith.constant 0 : index
    %45 = vector.load %arg2[%c7, %c0_40, %c0_41] : memref<9x4x128xbf16, #tpu.memory_space<vmem>>, vector<1x4x128xbf16>
    %46 = vector.shape_cast %45 : vector<1x4x128xbf16> to vector<4x128xbf16>
    %cst_42 = arith.constant dense<0.000000e+00> : vector<288x128xf32>
    %47 = tpu.matmul %44, %46, %cst_42 {dimension_numbers = #tpu.dot_dimension_numbers<[1], [0], [0], [1], [0, 0, 1, 1], [], []>} : vector<288x4xbf16>, vector<4x128xbf16>, vector<288x128xf32> -> vector<288x128xf32>
    %48 = arith.addf %42, %47 : vector<288x128xf32>
    %c0_43 = arith.constant 0 : index
    %c38 = arith.constant 38 : index
    %c0_44 = arith.constant 0 : index
    %49 = vector.load %arg1[%c0_43, %c38, %c0_44] : memref<1x326x4xbf16, #tpu.memory_space<vmem>>, vector<1x288x4xbf16>
    %50 = vector.shape_cast %49 : vector<1x288x4xbf16> to vector<288x4xbf16>
    %c8 = arith.constant 8 : index
    %c0_45 = arith.constant 0 : index
    %c0_46 = arith.constant 0 : index
    %51 = vector.load %arg2[%c8, %c0_45, %c0_46] : memref<9x4x128xbf16, #tpu.memory_space<vmem>>, vector<1x4x128xbf16>
    %52 = vector.shape_cast %51 : vector<1x4x128xbf16> to vector<4x128xbf16>
    %cst_47 = arith.constant dense<0.000000e+00> : vector<288x128xf32>
    %53 = tpu.matmul %50, %52, %cst_47 {dimension_numbers = #tpu.dot_dimension_numbers<[1], [0], [0], [1], [0, 0, 1, 1], [], []>} : vector<288x4xbf16>, vector<4x128xbf16>, vector<288x128xf32> -> vector<288x128xf32>
    %54 = arith.addf %48, %53 : vector<288x128xf32>
    %c0_48 = arith.constant 0 : index
    %c0_49 = arith.constant 0 : index
    %55 = vector.load %arg3[%c0_48, %c0_49] : memref<1x128xf32, #tpu.memory_space<vmem>>, vector<1x128xf32>
    %56 = vector.broadcast %55 : vector<1x128xf32> to vector<288x128xf32>
    %57 = arith.addf %54, %56 : vector<288x128xf32>
    %58 = arith.negf %57 : vector<288x128xf32>
    %59 = math.exp %58 : vector<288x128xf32>
    %cst_50 = arith.constant 1.000000e+00 : f32
    %60 = vector.broadcast %cst_50 : f32 to vector<288x128xf32>
    %61 = arith.addf %60, %59 : vector<288x128xf32>
    %62 = arith.divf %60, %61 : vector<288x128xf32>
    %63 = arith.mulf %57, %62 : vector<288x128xf32>
    %64 = arith.truncf %63 : vector<288x128xf32> to vector<288x128xbf16>
    %c0_51 = arith.constant 0 : index
    %c0_52 = arith.constant 0 : index
    %c0_53 = arith.constant 0 : index
    %65 = vector.load %arg4[%c0_51, %c0_52, %c0_53] : memref<1x288x128xbf16, #tpu.memory_space<vmem>>, vector<1x288x128xbf16>
    %66 = vector.shape_cast %65 : vector<1x288x128xbf16> to vector<288x128xbf16>
    %67 = vector.shape_cast %64 : vector<288x128xbf16> to vector<1x288x128xbf16>
    tpu.vector_store %arg4[%c0_51, %c0_52, %c0_53], %67 {strides = array<i32>} : memref<1x288x128xbf16, #tpu.memory_space<vmem>>, vector<1x288x128xbf16>,
    return
  }
  func.func @transform_0(%arg0: i32) -> (i32, i32, i32) {
    %c0_i32 = arith.constant 0 : i32
    %c0_i32_0 = arith.constant 0 : i32
    %c0_i32_1 = arith.constant 0 : i32
    return %arg0, %c0_i32, %c0_i32_0 : i32, i32, i32
  }
  func.func @transform_1(%arg0: i32) -> (i32, i32, i32) {
    %c0_i32 = arith.constant 0 : i32
    %c0_i32_0 = arith.constant 0 : i32
    %c0_i32_1 = arith.constant 0 : i32
    %c0_i32_2 = arith.constant 0 : i32
    return %c0_i32, %c0_i32_0, %c0_i32_1 : i32, i32, i32
  }
  func.func @transform_2(%arg0: i32) -> (i32, i32) {
    %c0_i32 = arith.constant 0 : i32
    %c0_i32_0 = arith.constant 0 : i32
    %c0_i32_1 = arith.constant 0 : i32
    return %c0_i32, %c0_i32_0 : i32, i32
  }
  func.func @transform_3(%arg0: i32) -> (i32, i32, i32) {
    %c0_i32 = arith.constant 0 : i32
    %c0_i32_0 = arith.constant 0 : i32
    %c0_i32_1 = arith.constant 0 : i32
    return %arg0, %c0_i32, %c0_i32_0 : i32, i32, i32
  }
}

</mosaic_0001>

<llo_original>
// kernel: tpu_custom_call.1
$region0: #{tpu_custom_call.1}
  #allocation0 [shape = 'u32[]', space=smem, size = 0x4, offset = 0x4, fixed_abs, tag = 'smem constant byte address 0x4 - core index']
  #allocation1 [shape = 'u32[144,128]{1,0:T(1,128)}', space=vmem, size = 0x12000, scoped, tag = 'internal scratch']
  %s0 = inlined_call_operand.vmem [shape: bf16[2,326,4], index: 0, kind: input, shape index: {}]
  %s1 = inlined_call_operand.vmem [shape: bf16[9,4,128], index: 1, kind: input, shape index: {}]
  %s2 = inlined_call_operand.vmem [shape: f32[1,128], index: 2, kind: input, shape index: {}]
  %s3 = inlined_call_operand.hbm [shape: bf16[2,288,128], index: 3, kind: output, shape index: {}]
  %s4 = sld [smem:[#allocation0]]
  $region45: #{tpu_custom_call.1} parent=0
    _
  %s6 = ssub.s32 1, %s4
  %s7 = scalar_select 0, %s6, %s4
  $region1: #{tpu_custom_call.1} parent=0
    #allocation2 [shape = 'u8[147456]{0}', space=vmem, size = 0x24000, scoped, tag = 'output window, operand 0']
    #allocation3 [shape = 's32[2]{0}', space=sflag, size = 0x8, scoped, tag = 'scoped memory for tpu_custom_call.1']
    %8 = vsyncpa [#allocation3], 0
    %s9 = scalar_lea.sflag [#allocation3], 1
    %10 = vsyncpa %s9, 0
    loop: start=0, step=1, limit=4
    $region2: #{tpu_custom_call.1} parent=1 // loop_pre_header
      _
    $region3: #{tpu_custom_call.1} parent=1 // loop_header
      %s12 = sphi 0, %s16
      %p13 = scmp.ge.s32.totalorder %s12, 4
      %s22 = sphi 0, %s24
      %s25 = sphi 0, %s22
      %s26 = sphi 0, %s25
      %s42 = sphi 0, %s26
      %s46 = sphi 0, %s46
      %s48 = sphi 0, %s46
      %s49 = sphi 0, %s48
      %s63 = sphi 0, %s49
      %s67 = sphi 0, %s67
      %s69 = sphi 0, %s67
      %s70 = sphi 0, %s69
      %s84 = sphi 0, %s70
      %s90 = sphi 0, %s92
      %s93 = sphi 0, %s90
      %s94 = sphi 0, %s93
      %s110 = sphi 0, %s94
    $region4: #{tpu_custom_call.1} parent=1 // loop_header_branch
      %15 = sbr.rel (%p13) target = $region8
    $region5: #{tpu_custom_call.1} parent=1 // loop_body
      %s17 = ssub.s32 %s12, 1
      %s18 = ssub.s32 %s12, 2
      %s19 = sadd.s32 %s12, 1
      %s20 = ssub.s32 %s12, %s19
      %p21 = scmp.eq.s32.totalorder %s20, 0
      %s23 = sadd.s32 %s22, 1
      %s24 = scalar_select %p21, %s22, %s23
      %p27 = pneg %p21
      %p28 = scmp.eq.s32.totalorder %s12, 1
      %p29 = por %p27, %p28
      %p30 = scmp.ne.s32.totalorder %s22, %s25
      %p31 = scmp.eq.s32.totalorder %s12, 0
      %p32 = por %p30, %p31
      %p33 = scmp.ne.s32.totalorder %s22, %s25
      %p34 = scmp.eq.s32.totalorder %s17, 1
      %p35 = por %p33, %p34
      %p36 = scmp.ne.s32.totalorder %s25, %s26
      %p37 = scmp.eq.s32.totalorder %s17, 0
      %p38 = por %p36, %p37
      %p39 = scmp.ne.s32.totalorder %s25, %s26
      %p40 = scmp.eq.s32.totalorder %s18, 1
      %p41 = por %p39, %p40
      %p43 = scmp.ne.s32.totalorder %s26, %s42
      %p44 = scmp.eq.s32.totalorder %s18, 0
      %p45 = por %p43, %p44
      %s47 = sadd.s32 %s46, 1
      %p50 = scmp.eq.s32.totalorder %s12, 1
      %p51 = scmp.ne.s32.totalorder %s46, %s48
      %p52 = scmp.eq.s32.totalorder %s12, 0
      %p53 = por %p51, %p52
      %p54 = scmp.ne.s32.totalorder %s46, %s48
      %p55 = scmp.eq.s32.totalorder %s17, 1
      %p56 = por %p54, %p55
      %p57 = scmp.ne.s32.totalorder %s48, %s49
      %p58 = scmp.eq.s32.totalorder %s17, 0
      %p59 = por %p57, %p58
      %p60 = scmp.ne.s32.totalorder %s48, %s49
      %p61 = scmp.eq.s32.totalorder %s18, 1
      %p62 = por %p60, %p61
      %p64 = scmp.ne.s32.totalorder %s49, %s63
      %p65 = scmp.eq.s32.totalorder %s18, 0
      %p66 = por %p64, %p65
      %s68 = sadd.s32 %s67, 1
      %p71 = scmp.eq.s32.totalorder %s12, 1
      %p72 = scmp.ne.s32.totalorder %s67, %s69
      %p73 = scmp.eq.s32.totalorder %s12, 0
      %p74 = por %p72, %p73
      %p75 = scmp.ne.s32.totalorder %s67, %s69
      %p76 = scmp.eq.s32.totalorder %s17, 1
      %p77 = por %p75, %p76
      %p78 = scmp.ne.s32.totalorder %s69, %s70
      %p79 = scmp.eq.s32.totalorder %s17, 0
      %p80 = por %p78, %p79
      %p81 = scmp.ne.s32.totalorder %s69, %s70
      %p82 = scmp.eq.s32.totalorder %s18, 1
      %p83 = por %p81, %p82
      %p85 = scmp.ne.s32.totalorder %s70, %s84
      %p86 = scmp.eq.s32.totalorder %s18, 0
      %p87 = por %p85, %p86
      %s88 = ssub.s32 %s12, %s19
      %p89 = scmp.eq.s32.totalorder %s88, 0
      %s91 = sadd.s32 %s90, 1
      %s92 = scalar_select %p89, %s90, %s91
      %p95 = pneg %p89
      %p96 = scmp.eq.s32.totalorder %s12, 1
      %p97 = por %p95, %p96
      %p98 = scmp.ne.s32.totalorder %s90, %s93
      %p99 = scmp.eq.s32.totalorder %s12, 0
      %p100 = por %p98, %p99
      %p101 = scmp.ne.s32.totalorder %s90, %s93
      %p102 = scmp.eq.s32.totalorder %s17, 1
      %p103 = por %p101, %p102
      %p104 = scmp.ne.s32.totalorder %s93, %s94
      %p105 = scmp.eq.s32.totalorder %s17, 0
      %p106 = por %p104, %p105
      %p107 = scmp.ne.s32.totalorder %s93, %s94
      %p108 = scmp.eq.s32.totalorder %s18, 1
      %p109 = por %p107, %p108
      %p111 = scmp.ne.s32.totalorder %s94, %s110
      %p112 = scmp.eq.s32.totalorder %s18, 0
      %p113 = por %p111, %p112
      %p114 = scmp.le.s32.totalorder 1, %s12
      %p115 = scmp.lt.s32.totalorder %s12, 3
      %p116 = pnand %p114, %p115
      %p117 = pneg %p116
      // Predicated region
      $region9: #{tpu_custom_call.1} parent=5 // pred_check
        _
      $region10: #{tpu_custom_call.1} parent=5 // pred_check_branch
        %119 = sbr.rel (%p116) target = $region12
      $region11: #{tpu_custom_call.1} parent=5 // pred_region
        %s120 = ssub.s32 %s12, 1
        // Predicated region
        $region13: #{tpu_custom_call.1} parent=11 // pred_check
          %p121 = pneg %p59
        $region14: #{tpu_custom_call.1} parent=11 // pred_check_branch
          %123 = sbr.rel (%p121) target = $region16
        $region15: #{tpu_custom_call.1} parent=11 // pred_region
          _
        $region16: #{tpu_custom_call.1} parent=11 // pred_fallthru
          _
        // Predicated region
        $region17: #{tpu_custom_call.1} parent=11 // pred_check
          %p124 = pneg %p80
        $region18: #{tpu_custom_call.1} parent=11 // pred_check_branch
          %126 = sbr.rel (%p124) target = $region20
        $region19: #{tpu_custom_call.1} parent=11 // pred_region
          _
        $region20: #{tpu_custom_call.1} parent=11 // pred_fallthru
          _
      $region12: #{tpu_custom_call.1} parent=5 // pred_fallthru
        _
      %p127 = scmp.lt.s32.totalorder %s12, 2
      // Predicated region
      $region21: #{tpu_custom_call.1} parent=5 // pred_check
        %p128 = pneg %p127
      $region22: #{tpu_custom_call.1} parent=5 // pred_check_branch
        %130 = sbr.rel (%p128) target = $region24
      $region23: #{tpu_custom_call.1} parent=5 // pred_region
        // Predicated region
        $region25: #{tpu_custom_call.1} parent=23 // pred_check
          %p131 = pneg %p32
        $region26: #{tpu_custom_call.1} parent=23 // pred_check_branch
          %133 = sbr.rel (%p131) target = $region28
        $region27: #{tpu_custom_call.1} parent=23 // pred_region
          %p134 = scmp.lt.s32.totalorder %s12, 1
          %s135 = scalar_select %p134, %s12, 1
          %s136 = smul.addr %s135, 41
          %s137 = smul.addr %s136, 4
          %s138 = scalar_lea.vmem %s0, %s137
        $region28: #{tpu_custom_call.1} parent=23 // pred_fallthru
          _
      $region24: #{tpu_custom_call.1} parent=5 // pred_fallthru
        _
      %p139 = scmp.le.s32.totalorder 1, %s12
      %p140 = scmp.lt.s32.totalorder %s12, 3
      %p141 = pnand %p139, %p140
      %p142 = pneg %p141
      // Predicated region
      $region29: #{tpu_custom_call.1} parent=5 // pred_check
        _
      $region30: #{tpu_custom_call.1} parent=5 // pred_check_branch
        %144 = sbr.rel (%p141) target = $region32
      $region31: #{tpu_custom_call.1} parent=5 // pred_region
        %s145 = ssub.s32 %s12, 1
        %p146 = scmp.lt.s32.totalorder %s17, 1
        %s147 = scalar_select %p146, %s17, 1
        %s148 = smul.addr %s147, 41
        %s149 = smul.addr %s148, 4
        %s150 = scalar_lea.vmem %s0, %s149
        %p151 = pneg %p38
        %p152 = pneg %p35
        %p153 = pneg %p59
        %p154 = pneg %p56
        %p155 = pneg %p80
        %p156 = pneg %p77
        %p157 = pneg %p106
        %p158 = pneg %p103
        %s159 = sand.u32 %s93, 1
        %s160 = scalar_lea.sflag [#allocation3], %s159
        %s161 = sand.u32 %s93, 1
        %s162 = smul.addr %s161, 144
        %s163 = scalar_lea.vmem [#allocation2], %s162
        %p164 = scmp.lt.s32.totalorder %s17, 1
        %s165 = scalar_select %p164, %s17, 1
        %s166 = smul.addr %s165, 41
        %s167 = smul.addr %s166, 4
        %s168 = scalar_lea.vmem %s0, %s167
        %v170 = vld [vmem:[%s168] sm:$0xf]
        %v171 = vld [vmem:[%s168 + $0x4] sm:$0xf]
        %v172 = vld [vmem:[%s168 + $0x8] sm:$0xf]
        %v173 = vld [vmem:[%s168 + $0xc] sm:$0xf]
        %v174 = vld [vmem:[%s168 + $0x10] sm:$0xf]
        %v175 = vld [vmem:[%s168 + $0x14] sm:$0xf]
        %v176 = vld [vmem:[%s168 + $0x18] sm:$0xf]
        %v177 = vld [vmem:[%s168 + $0x1c] sm:$0xf]
        %v178 = vld [vmem:[%s168 + $0x20] sm:$0xf]
        %v179 = vld [vmem:[%s168 + $0x24] sm:$0xf]
        %v180 = vld [vmem:[%s168 + $0x28] sm:$0xf]
        %v181 = vld [vmem:[%s168 + $0x2c] sm:$0xf]
        %v182 = vld [vmem:[%s168 + $0x30] sm:$0xf]
        %v183 = vld [vmem:[%s168 + $0x34] sm:$0xf]
        %v184 = vld [vmem:[%s168 + $0x38] sm:$0xf]
        %v185 = vld [vmem:[%s168 + $0x3c] sm:$0xf]
        %v186 = vld [vmem:[%s168 + $0x40] sm:$0xf]
        %v187 = vld [vmem:[%s168 + $0x44] sm:$0xf]
        %v188 = vld [vmem:[%s168 + $0x48] sm:$0xf]
        %v189 = vld [vmem:[%s168 + $0x4c] sm:$0xf]
        %v190 = vld [vmem:[%s168 + $0x50] sm:$0xf]
        %v191 = vld [vmem:[%s168 + $0x54] sm:$0xf]
        %v192 = vld [vmem:[%s168 + $0x58] sm:$0xf]
        %v193 = vld [vmem:[%s168 + $0x5c] sm:$0xf]
        %v194 = vld [vmem:[%s168 + $0x60] sm:$0xf]
        %v195 = vld [vmem:[%s168 + $0x64] sm:$0xf]
        %v196 = vld [vmem:[%s168 + $0x68] sm:$0xf]
        %v197 = vld [vmem:[%s168 + $0x6c] sm:$0xf]
        %v198 = vld [vmem:[%s168 + $0x70] sm:$0xf]
        %v199 = vld [vmem:[%s168 + $0x74] sm:$0xf]
        %v200 = vld [vmem:[%s168 + $0x78] sm:$0xf]
        %v201 = vld [vmem:[%s168 + $0x7c] sm:$0xf]
        %v202 = vld [vmem:[%s168 + $0x80] sm:$0xf]
        %v203 = vld [vmem:[%s168 + $0x84] sm:$0xf]
        %v204 = vld [vmem:[%s168 + $0x88] sm:$0xf]
        %v205 = vld [vmem:[%s168 + $0x8c] sm:$0xf]
        %v206 = vld [vmem:[%s1] sm:$0x3]
        %v207 = vld [vmem:[%s168 + $0x90] sm:$0x1]
        %s208 = scalar_lea.vmem %s1, 2
        %v209 = vld [vmem:[%s208] sm:$0x3]
        %v247 = vunpack.c.l.b16 %v170
        %v248 = vunpack.c.l.b16 %v171
        %v249 = vunpack.c.l.b16 %v172
        %v250 = vunpack.c.l.b16 %v173
        %v251 = vunpack.c.l.b16 %v174
        %v252 = vunpack.c.l.b16 %v175
        %v253 = vunpack.c.l.b16 %v176
        %v254 = vunpack.c.l.b16 %v177
        %v255 = vunpack.c.l.b16 %v178
        %v256 = vunpack.c.l.b16 %v179
        %v257 = vunpack.c.l.b16 %v180
        %v258 = vunpack.c.l.b16 %v181
        %v259 = vunpack.c.l.b16 %v182
        %v260 = vunpack.c.l.b16 %v183
        %v261 = vunpack.c.l.b16 %v184
        %v262 = vunpack.c.l.b16 %v185
        %v263 = vunpack.c.l.b16 %v186
        %v264 = vunpack.c.l.b16 %v187
        %v265 = vunpack.c.l.b16 %v188
        %v266 = vunpack.c.l.b16 %v189
        %v267 = vunpack.c.l.b16 %v190
        %v268 = vunpack.c.l.b16 %v191
        %v269 = vunpack.c.l.b16 %v192
        %v270 = vunpack.c.l.b16 %v193
        %v271 = vunpack.c.l.b16 %v194
        %v272 = vunpack.c.l.b16 %v195
        %v273 = vunpack.c.l.b16 %v196
        %v274 = vunpack.c.l.b16 %v197
        %v275 = vunpack.c.l.b16 %v198
        %v276 = vunpack.c.l.b16 %v199
        %v277 = vunpack.c.l.b16 %v200
        %v278 = vunpack.c.l.b16 %v201
        %v279 = vunpack.c.l.b16 %v202
        %v280 = vunpack.c.l.b16 %v203
        %v281 = vunpack.c.l.b16 %v204
        %v282 = vunpack.c.l.b16 %v205
        %v283 = vunpack.c.l.b16 %v207
        %v284 = vpack.c.b16 %v248, %v247
        %v285 = vpack.c.b16 %v250, %v249
        %v286 = vpack.c.b16 %v252, %v251
        %v287 = vpack.c.b16 %v254, %v253
        %v288 = vpack.c.b16 %v256, %v255
        %v289 = vpack.c.b16 %v258, %v257
        %v290 = vpack.c.b16 %v260, %v259
        %v291 = vpack.c.b16 %v262, %v261
        %v292 = vpack.c.b16 %v264, %v263
        %v293 = vpack.c.b16 %v266, %v265
        %v294 = vpack.c.b16 %v268, %v267
        %v295 = vpack.c.b16 %v270, %v269
        %v296 = vpack.c.b16 %v272, %v271
        %v297 = vpack.c.b16 %v274, %v273
        %v298 = vpack.c.b16 %v276, %v275
        %v299 = vpack.c.b16 %v278, %v277
        %v300 = vpack.c.b16 %v280, %v279
        %v301 = vpack.c.b16 %v282, %v281
        %v302 = vpack.c.b16 %v283, %v283
        %vm303 = vsmask.f32 7424
        %v305 = vshrl.u32 %v284, 16
        %v307 = vshll.u32 %v284, 16
        %v309 = vrot.slane %v307, 1
        %v310 = vor.u32 %v305, %v309
        %v312 = vshll.u32 %v285, 16
        %v314 = vrot.slane %v312, 1
        %v315 = vsel %vm303, %v310, %v314
        %v316 = vshrl.u32 %v285, 16
        %v318 = vor.u32 %v316, %v314
        %v320 = vshll.u32 %v286, 16
        %v322 = vrot.slane %v320, 1
        %v323 = vsel %vm303, %v318, %v322
        %v324 = vshrl.u32 %v286, 16
        %v326 = vor.u32 %v324, %v322
        %v328 = vshll.u32 %v287, 16
        %v330 = vrot.slane %v328, 1
        %v331 = vsel %vm303, %v326, %v330
        %v332 = vshrl.u32 %v287, 16
        %v334 = vor.u32 %v332, %v330
        %v336 = vshll.u32 %v288, 16
        %v338 = vrot.slane %v336, 1
        %v339 = vsel %vm303, %v334, %v338
        %v340 = vshrl.u32 %v288, 16
        %v342 = vor.u32 %v340, %v338
        %v344 = vshll.u32 %v289, 16
        %v346 = vrot.slane %v344, 1
        %v347 = vsel %vm303, %v342, %v346
        %v348 = vshrl.u32 %v289, 16
        %v350 = vor.u32 %v348, %v346
        %v352 = vshll.u32 %v290, 16
        %v354 = vrot.slane %v352, 1
        %v355 = vsel %vm303, %v350, %v354
        %v356 = vshrl.u32 %v290, 16
        %v358 = vor.u32 %v356, %v354
        %v360 = vshll.u32 %v291, 16
        %v362 = vrot.slane %v360, 1
        %v363 = vsel %vm303, %v358, %v362
        %v364 = vshrl.u32 %v291, 16
        %v366 = vor.u32 %v364, %v362
        %v368 = vshll.u32 %v292, 16
        %v370 = vrot.slane %v368, 1
        %v371 = vsel %vm303, %v366, %v370
        %v372 = vshrl.u32 %v292, 16
        %v374 = vor.u32 %v372, %v370
        %v376 = vshll.u32 %v293, 16
        %v378 = vrot.slane %v376, 1
        %v379 = vsel %vm303, %v374, %v378
        %v380 = vshrl.u32 %v293, 16
        %v382 = vor.u32 %v380, %v378
        %v384 = vshll.u32 %v294, 16
        %v386 = vrot.slane %v384, 1
        %v387 = vsel %vm303, %v382, %v386
        %v388 = vshrl.u32 %v294, 16
        %v390 = vor.u32 %v388, %v386
        %v392 = vshll.u32 %v295, 16
        %v394 = vrot.slane %v392, 1
        %v395 = vsel %vm303, %v390, %v394
        %v396 = vshrl.u32 %v295, 16
        %v398 = vor.u32 %v396, %v394
        %v400 = vshll.u32 %v296, 16
        %v402 = vrot.slane %v400, 1
        %v403 = vsel %vm303, %v398, %v402
        %v404 = vshrl.u32 %v296, 16
        %v406 = vor.u32 %v404, %v402
        %v408 = vshll.u32 %v297, 16
        %v410 = vrot.slane %v408, 1
        %v411 = vsel %vm303, %v406, %v410
        %v412 = vshrl.u32 %v297, 16
        %v414 = vor.u32 %v412, %v410
        %v416 = vshll.u32 %v298, 16
        %v418 = vrot.slane %v416, 1
        %v419 = vsel %vm303, %v414, %v418
        %v420 = vshrl.u32 %v298, 16
        %v422 = vor.u32 %v420, %v418
        %v424 = vshll.u32 %v299, 16
        %v426 = vrot.slane %v424, 1
        %v427 = vsel %vm303, %v422, %v426
        %v428 = vshrl.u32 %v299, 16
        %v430 = vor.u32 %v428, %v426
        %v432 = vshll.u32 %v300, 16
        %v434 = vrot.slane %v432, 1
        %v435 = vsel %vm303, %v430, %v434
        %v436 = vshrl.u32 %v300, 16
        %v438 = vor.u32 %v436, %v434
        %v440 = vshll.u32 %v301, 16
        %v442 = vrot.slane %v440, 1
        %v443 = vsel %vm303, %v438, %v442
        %v444 = vshrl.u32 %v301, 16
        %v446 = vor.u32 %v444, %v442
        %v448 = vshll.u32 %v302, 16
        %v450 = vrot.slane %v448, 1
        %v451 = vsel %vm303, %v446, %v450
        %vm452 = vcmask 31744
        %v454 = vsel %vm452, %v315, 0
        %v457 = vsel %vm452, %v323, 0
        %v460 = vsel %vm452, %v331, 0
        %v463 = vsel %vm452, %v339, 0
        %v466 = vsel %vm452, %v347, 0
        %v469 = vsel %vm452, %v355, 0
        %v472 = vsel %vm452, %v363, 0
        %v475 = vsel %vm452, %v371, 0
        %v478 = vsel %vm452, %v379, 0
        %v481 = vsel %vm452, %v387, 0
        %v484 = vsel %vm452, %v395, 0
        %v487 = vsel %vm452, %v403, 0
        %v490 = vsel %vm452, %v411, 0
        %v493 = vsel %vm452, %v419, 0
        %v496 = vsel %vm452, %v427, 0
        %v499 = vsel %vm452, %v435, 0
        %v502 = vsel %vm452, %v443, 0
        %v505 = vsel %vm452, %v451, 0
        %vm507 = vcmask 1041408
        %v509 = vsel %vm507, %v209, 0
        %511 = vmatprep.subr.bf16.mxu0 0
        %512 = vmatpush1.bf16.msra.mxu0 0
        %513 = vmatprep.subr.bf16.mxu0 0
        %514 = vmatpush1.bf16.msra.mxu0 0
        %515 = vmatprep.subr.bf16.mxu0 0
        %516 = vmatpush1.bf16.msra.mxu0 0
        %517 = vmatprep.subr.bf16.mxu0 0
        %518 = vmatpush1.bf16.msra.mxu0 0
        %519 = vmatprep.subr.bf16.mxu0 0
        %520 = vmatpush1.bf16.msra.mxu0 0
        %521 = vmatprep.subr.bf16.mxu0 0
        %522 = vmatpush1.bf16.msra.mxu0 0
        %523 = vmatprep.subr.bf16.mxu0 0
        %524 = vmatpush1.bf16.msra.mxu0 0
        %525 = vmatprep.subr.bf16.mxu0 0
        %526 = vmatpush1.bf16.msra.mxu0 %v509
        %527 = vmatprep.subr.bf16.mxu0 0
        %528 = vmatpush2.bf16.msra.mxu0 0
        %529 = vmatprep.subr.bf16.mxu0 0
        %530 = vmatpush2.bf16.msra.mxu0 0
        %531 = vmatprep.subr.bf16.mxu0 0
        %532 = vmatpush2.bf16.msra.mxu0 0
        %533 = vmatprep.subr.bf16.mxu0 0
        %534 = vmatpush2.bf16.msra.mxu0 0
        %535 = vmatprep.subr.bf16.mxu0 0
        %536 = vmatpush2.bf16.msra.mxu0 0
        %537 = vmatprep.subr.bf16.mxu0 0
        %538 = vmatpush2.bf16.msra.mxu0 0
        %539 = vmatprep.subr.bf16.mxu0 0
        %540 = vmatpush2.bf16.msra.mxu0 0
        %541 = vmatprep.subr.bf16.mxu0 0
        %542 = vmatpush2.bf16.msra.mxu0 0
        %543 = vmatprep.mubr.bf16.mxu0 0
        %544 = vmatmul.mubr.bf16.gmra.mxu0 %v454
        %v545 = vpop.f32.mrf.mxu0
        %v546 = vadd.f32 0.0, %v545
        %v547 = vpop.f32.mrf.mxu0
        %v548 = vpop.f32.mrf.mxu0
        %v549 = vadd.f32 0.0, %v548
        %v550 = vpop.f32.mrf.mxu0
        %551 = vmatprep.mubr.bf16.mxu0 0
        %552 = vmatmul.mubr.bf16.gmra.mxu0 %v457
        %v553 = vpop.f32.mrf.mxu0
        %v554 = vadd.f32 0.0, %v553
        %v555 = vpop.f32.mrf.mxu0
        %v556 = vpop.f32.mrf.mxu0
        %v557 = vadd.f32 0.0, %v556
        %v558 = vpop.f32.mrf.mxu0
        %559 = vmatprep.mubr.bf16.mxu0 0
        %560 = vmatmul.mubr.bf16.gmra.mxu0 %v460
        %v561 = vpop.f32.mrf.mxu0
        %v562 = vadd.f32 0.0, %v561
        %v563 = vpop.f32.mrf.mxu0
        %v564 = vpop.f32.mrf.mxu0
        %v565 = vadd.f32 0.0, %v564
        %v566 = vpop.f32.mrf.mxu0
        %567 = vmatprep.mubr.bf16.mxu0 0
        %568 = vmatmul.mubr.bf16.gmra.mxu0 %v463
        %v569 = vpop.f32.mrf.mxu0
        %v570 = vadd.f32 0.0, %v569
        %v571 = vpop.f32.mrf.mxu0
        %v572 = vpop.f32.mrf.mxu0
        %v573 = vadd.f32 0.0, %v572
        %v574 = vpop.f32.mrf.mxu0
        %575 = vmatprep.mubr.bf16.mxu0 0
        %576 = vmatmul.mubr.bf16.gmra.mxu0 %v466
        %v577 = vpop.f32.mrf.mxu0
        %v578 = vadd.f32 0.0, %v577
        %v579 = vpop.f32.mrf.mxu0
        %v580 = vpop.f32.mrf.mxu0
        %v581 = vadd.f32 0.0, %v580
        %v582 = vpop.f32.mrf.mxu0
        %583 = vmatprep.mubr.bf16.mxu0 0
        %584 = vmatmul.mubr.bf16.gmra.mxu0 %v469
        %v585 = vpop.f32.mrf.mxu0
        %v586 = vadd.f32 0.0, %v585
        %v587 = vpop.f32.mrf.mxu0
        %v588 = vpop.f32.mrf.mxu0
        %v589 = vadd.f32 0.0, %v588
        %v590 = vpop.f32.mrf.mxu0
        %591 = vmatprep.mubr.bf16.mxu0 0
        %592 = vmatmul.mubr.bf16.gmra.mxu0 %v472
        %v593 = vpop.f32.mrf.mxu0
        %v594 = vadd.f32 0.0, %v593
        %v595 = vpop.f32.mrf.mxu0
        %v596 = vpop.f32.mrf.mxu0
        %v597 = vadd.f32 0.0, %v596
        %v598 = vpop.f32.mrf.mxu0
        %599 = vmatprep.mubr.bf16.mxu0 0
        %600 = vmatmul.mubr.bf16.gmra.mxu0 %v475
        %v601 = vpop.f32.mrf.mxu0
        %v602 = vadd.f32 0.0, %v601
        %v603 = vpop.f32.mrf.mxu0
        %v604 = vpop.f32.mrf.mxu0
        %v605 = vadd.f32 0.0, %v604
        %v606 = vpop.f32.mrf.mxu0
        %607 = vmatprep.mubr.bf16.mxu0 0
        %608 = vmatmul.mubr.bf16.gmra.mxu0 %v478
        %v609 = vpop.f32.mrf.mxu0
        %v610 = vadd.f32 0.0, %v609
        %v611 = vpop.f32.mrf.mxu0
        %v612 = vpop.f32.mrf.mxu0
        %v613 = vadd.f32 0.0, %v612
        %v614 = vpop.f32.mrf.mxu0
        %615 = vmatprep.mubr.bf16.mxu0 0
        %616 = vmatmul.mubr.bf16.gmra.mxu0 %v481
        %v617 = vpop.f32.mrf.mxu0
        %v618 = vadd.f32 0.0, %v617
        %v619 = vpop.f32.mrf.mxu0
        %v620 = vpop.f32.mrf.mxu0
        %v621 = vadd.f32 0.0, %v620
        %v622 = vpop.f32.mrf.mxu0
        %623 = vmatprep.mubr.bf16.mxu0 0
        %624 = vmatmul.mubr.bf16.gmra.mxu0 %v484
        %v625 = vpop.f32.mrf.mxu0
        %v626 = vadd.f32 0.0, %v625
        %v627 = vpop.f32.mrf.mxu0
        %v628 = vpop.f32.mrf.mxu0
        %v629 = vadd.f32 0.0, %v628
        %v630 = vpop.f32.mrf.mxu0
        %631 = vmatprep.mubr.bf16.mxu0 0
        %632 = vmatmul.mubr.bf16.gmra.mxu0 %v487
        %v633 = vpop.f32.mrf.mxu0
        %v634 = vadd.f32 0.0, %v633
        %v635 = vpop.f32.mrf.mxu0
        %v636 = vpop.f32.mrf.mxu0
        %v637 = vadd.f32 0.0, %v636
        %v638 = vpop.f32.mrf.mxu0
        %639 = vmatprep.mubr.bf16.mxu0 0
        %640 = vmatmul.mubr.bf16.gmra.mxu0 %v490
        %v641 = vpop.f32.mrf.mxu0
        %v642 = vadd.f32 0.0, %v641
        %v643 = vpop.f32.mrf.mxu0
        %v644 = vpop.f32.mrf.mxu0
        %v645 = vadd.f32 0.0, %v644
        %v646 = vpop.f32.mrf.mxu0
        %647 = vmatprep.mubr.bf16.mxu0 0
        %648 = vmatmul.mubr.bf16.gmra.mxu0 %v493
        %v649 = vpop.f32.mrf.mxu0
        %v650 = vadd.f32 0.0, %v649
        %v651 = vpop.f32.mrf.mxu0
        %v652 = vpop.f32.mrf.mxu0
        %v653 = vadd.f32 0.0, %v652
        %v654 = vpop.f32.mrf.mxu0
        %655 = vmatprep.mubr.bf16.mxu0 0
        %656 = vmatmul.mubr.bf16.gmra.mxu0 %v496
        %v657 = vpop.f32.mrf.mxu0
        %v658 = vadd.f32 0.0, %v657
        %v659 = vpop.f32.mrf.mxu0
        %v660 = vpop.f32.mrf.mxu0
        %v661 = vadd.f32 0.0, %v660
        %v662 = vpop.f32.mrf.mxu0
        %663 = vmatprep.mubr.bf16.mxu0 0
        %664 = vmatmul.mubr.bf16.gmra.mxu0 %v499
        %v665 = vpop.f32.mrf.mxu0
        %v666 = vadd.f32 0.0, %v665
        %v667 = vpop.f32.mrf.mxu0
        %v668 = vpop.f32.mrf.mxu0
        %v669 = vadd.f32 0.0, %v668
        %v670 = vpop.f32.mrf.mxu0
        %671 = vmatprep.mubr.bf16.mxu0 0
        %672 = vmatmul.mubr.bf16.gmra.mxu0 %v502
        %v673 = vpop.f32.mrf.mxu0
        %v674 = vadd.f32 0.0, %v673
        %v675 = vpop.f32.mrf.mxu0
        %v676 = vpop.f32.mrf.mxu0
        %v677 = vadd.f32 0.0, %v676
        %v678 = vpop.f32.mrf.mxu0
        %679 = vmatprep.mubr.bf16.mxu0 0
        %680 = vmatmul.mubr.bf16.gmra.mxu0 %v505
        %v681 = vpop.f32.mrf.mxu0
        %v682 = vadd.f32 0.0, %v681
        %v683 = vpop.f32.mrf.mxu0
        %v684 = vpop.f32.mrf.mxu0
        %v685 = vadd.f32 0.0, %v684
        %v686 = vpop.f32.mrf.mxu0
        %687 = vdwg.mxu0
        %v688 = vsel %vm452, %v284, 0
        %v690 = vsel %vm452, %v285, 0
        %v692 = vsel %vm452, %v286, 0
        %v694 = vsel %vm452, %v287, 0
        %v696 = vsel %vm452, %v288, 0
        %v698 = vsel %vm452, %v289, 0
        %v700 = vsel %vm452, %v290, 0
        %v702 = vsel %vm452, %v291, 0
        %v704 = vsel %vm452, %v292, 0
        %v706 = vsel %vm452, %v293, 0
        %v708 = vsel %vm452, %v294, 0
        %v710 = vsel %vm452, %v295, 0
        %v712 = vsel %vm452, %v296, 0
        %v714 = vsel %vm452, %v297, 0
        %v716 = vsel %vm452, %v298, 0
        %v718 = vsel %vm452, %v299, 0
        %v720 = vsel %vm452, %v300, 0
        %v722 = vsel %vm452, %v301, 0
        %v725 = vsel %vm507, %v206, 0
        %727 = vmatprep.subr.bf16.mxu0 0
        %728 = vmatpush1.bf16.msra.mxu0 0
        %729 = vmatprep.subr.bf16.mxu0 0
        %730 = vmatpush1.bf16.msra.mxu0 0
        %731 = vmatprep.subr.bf16.mxu0 0
        %732 = vmatpush1.bf16.msra.mxu0 0
        %733 = vmatprep.subr.bf16.mxu0 0
        %734 = vmatpush1.bf16.msra.mxu0 0
        %735 = vmatprep.subr.bf16.mxu0 0
        %736 = vmatpush1.bf16.msra.mxu0 0
        %737 = vmatprep.subr.bf16.mxu0 0
        %738 = vmatpush1.bf16.msra.mxu0 0
        %739 = vmatprep.subr.bf16.mxu0 0
        %740 = vmatpush1.bf16.msra.mxu0 0
        %741 = vmatprep.subr.bf16.mxu0 0
        %742 = vmatpush1.bf16.msra.mxu0 %v725
        %743 = vmatprep.subr.bf16.mxu0 0
        %744 = vmatpush2.bf16.msra.mxu0 0
        %745 = vmatprep.subr.bf16.mxu0 0
        %746 = vmatpush2.bf16.msra.mxu0 0
        %747 = vmatprep.subr.bf16.mxu0 0
        %748 = vmatpush2.bf16.msra.mxu0 0
        %749 = vmatprep.subr.bf16.mxu0 0
        %750 = vmatpush2.bf16.msra.mxu0 0
        %751 = vmatprep.subr.bf16.mxu0 0
        %752 = vmatpush2.bf16.msra.mxu0 0
        %753 = vmatprep.subr.bf16.mxu0 0
        %754 = vmatpush2.bf16.msra.mxu0 0
        %755 = vmatprep.subr.bf16.mxu0 0
        %756 = vmatpush2.bf16.msra.mxu0 0
        %757 = vmatprep.subr.bf16.mxu0 0
        %758 = vmatpush2.bf16.msra.mxu0 0
        %759 = vmatprep.mubr.bf16.mxu0 0
        %760 = vmatmul.mubr.bf16.gmra.mxu0 %v688
        %v761 = vpop.f32.mrf.mxu0
        %v762 = vadd.f32 %v546, %v761
        %v763 = vpop.f32.mrf.mxu0
        %v764 = vpop.f32.mrf.mxu0
        %v765 = vadd.f32 %v549, %v764
        %v766 = vpop.f32.mrf.mxu0
        %767 = vmatprep.mubr.bf16.mxu0 0
        %768 = vmatmul.mubr.bf16.gmra.mxu0 %v690
        %v769 = vpop.f32.mrf.mxu0
        %v770 = vadd.f32 %v554, %v769
        %v771 = vpop.f32.mrf.mxu0
        %v772 = vpop.f32.mrf.mxu0
        %v773 = vadd.f32 %v557, %v772
        %v774 = vpop.f32.mrf.mxu0
        %775 = vmatprep.mubr.bf16.mxu0 0
        %776 = vmatmul.mubr.bf16.gmra.mxu0 %v692
        %v777 = vpop.f32.mrf.mxu0
        %v778 = vadd.f32 %v562, %v777
        %v779 = vpop.f32.mrf.mxu0
        %v780 = vpop.f32.mrf.mxu0
        %v781 = vadd.f32 %v565, %v780
        %v782 = vpop.f32.mrf.mxu0
        %783 = vmatprep.mubr.bf16.mxu0 0
        %784 = vmatmul.mubr.bf16.gmra.mxu0 %v694
        %v785 = vpop.f32.mrf.mxu0
        %v786 = vadd.f32 %v570, %v785
        %v787 = vpop.f32.mrf.mxu0
        %v788 = vpop.f32.mrf.mxu0
        %v789 = vadd.f32 %v573, %v788
        %v790 = vpop.f32.mrf.mxu0
        %791 = vmatprep.mubr.bf16.mxu0 0
        %792 = vmatmul.mubr.bf16.gmra.mxu0 %v696
        %v793 = vpop.f32.mrf.mxu0
        %v794 = vadd.f32 %v578, %v793
        %v795 = vpop.f32.mrf.mxu0
        %v796 = vpop.f32.mrf.mxu0
        %v797 = vadd.f32 %v581, %v796
        %v798 = vpop.f32.mrf.mxu0
        %799 = vmatprep.mubr.bf16.mxu0 0
        %800 = vmatmul.mubr.bf16.gmra.mxu0 %v698
        %v801 = vpop.f32.mrf.mxu0
        %v802 = vadd.f32 %v586, %v801
        %v803 = vpop.f32.mrf.mxu0
        %v804 = vpop.f32.mrf.mxu0
        %v805 = vadd.f32 %v589, %v804
        %v806 = vpop.f32.mrf.mxu0
        %807 = vmatprep.mubr.bf16.mxu0 0
        %808 = vmatmul.mubr.bf16.gmra.mxu0 %v700
        %v809 = vpop.f32.mrf.mxu0
        %v810 = vadd.f32 %v594, %v809
        %v811 = vpop.f32.mrf.mxu0
        %v812 = vpop.f32.mrf.mxu0
        %v813 = vadd.f32 %v597, %v812
        %v814 = vpop.f32.mrf.mxu0
        %815 = vmatprep.mubr.bf16.mxu0 0
        %816 = vmatmul.mubr.bf16.gmra.mxu0 %v702
        %v817 = vpop.f32.mrf.mxu0
        %v818 = vadd.f32 %v602, %v817
        %v819 = vpop.f32.mrf.mxu0
        %v820 = vpop.f32.mrf.mxu0
        %v821 = vadd.f32 %v605, %v820
        %v822 = vpop.f32.mrf.mxu0
        %823 = vmatprep.mubr.bf16.mxu0 0
        %824 = vmatmul.mubr.bf16.gmra.mxu0 %v704
        %v825 = vpop.f32.mrf.mxu0
        %v826 = vadd.f32 %v610, %v825
        %v827 = vpop.f32.mrf.mxu0
        %v828 = vpop.f32.mrf.mxu0
        %v829 = vadd.f32 %v613, %v828
        %v830 = vpop.f32.mrf.mxu0
        %831 = vmatprep.mubr.bf16.mxu0 0
        %832 = vmatmul.mubr.bf16.gmra.mxu0 %v706
        %v833 = vpop.f32.mrf.mxu0
        %v834 = vadd.f32 %v618, %v833
        %v835 = vpop.f32.mrf.mxu0
        %v836 = vpop.f32.mrf.mxu0
        %v837 = vadd.f32 %v621, %v836
        %v838 = vpop.f32.mrf.mxu0
        %839 = vmatprep.mubr.bf16.mxu0 0
        %840 = vmatmul.mubr.bf16.gmra.mxu0 %v708
        %v841 = vpop.f32.mrf.mxu0
        %v842 = vadd.f32 %v626, %v841
        %v843 = vpop.f32.mrf.mxu0
        %v844 = vpop.f32.mrf.mxu0
        %v845 = vadd.f32 %v629, %v844
        %v846 = vpop.f32.mrf.mxu0
        %847 = vmatprep.mubr.bf16.mxu0 0
        %848 = vmatmul.mubr.bf16.gmra.mxu0 %v710
        %v849 = vpop.f32.mrf.mxu0
        %v850 = vadd.f32 %v634, %v849
        %v851 = vpop.f32.mrf.mxu0
        %v852 = vpop.f32.mrf.mxu0
        %v853 = vadd.f32 %v637, %v852
        %v854 = vpop.f32.mrf.mxu0
        %855 = vmatprep.mubr.bf16.mxu0 0
        %856 = vmatmul.mubr.bf16.gmra.mxu0 %v712
        %v857 = vpop.f32.mrf.mxu0
        %v858 = vadd.f32 %v642, %v857
        %v859 = vpop.f32.mrf.mxu0
        %v860 = vpop.f32.mrf.mxu0
        %v861 = vadd.f32 %v645, %v860
        %v862 = vpop.f32.mrf.mxu0
        %863 = vmatprep.mubr.bf16.mxu0 0
        %864 = vmatmul.mubr.bf16.gmra.mxu0 %v714
        %v865 = vpop.f32.mrf.mxu0
        %v866 = vadd.f32 %v650, %v865
        %v867 = vpop.f32.mrf.mxu0
        %v868 = vpop.f32.mrf.mxu0
        %v869 = vadd.f32 %v653, %v868
        %v870 = vpop.f32.mrf.mxu0
        %871 = vmatprep.mubr.bf16.mxu0 0
        %872 = vmatmul.mubr.bf16.gmra.mxu0 %v716
        %v873 = vpop.f32.mrf.mxu0
        %v874 = vadd.f32 %v658, %v873
        %v875 = vpop.f32.mrf.mxu0
        %v876 = vpop.f32.mrf.mxu0
        %v877 = vadd.f32 %v661, %v876
        %v878 = vpop.f32.mrf.mxu0
        %879 = vmatprep.mubr.bf16.mxu0 0
        %880 = vmatmul.mubr.bf16.gmra.mxu0 %v718
        %v881 = vpop.f32.mrf.mxu0
        %v882 = vadd.f32 %v666, %v881
        %v883 = vpop.f32.mrf.mxu0
        %v884 = vpop.f32.mrf.mxu0
        %v885 = vadd.f32 %v669, %v884
        %v886 = vpop.f32.mrf.mxu0
        %887 = vmatprep.mubr.bf16.mxu0 0
        %888 = vmatmul.mubr.bf16.gmra.mxu0 %v720
        %v889 = vpop.f32.mrf.mxu0
        %v890 = vadd.f32 %v674, %v889
        %v891 = vpop.f32.mrf.mxu0
        %v892 = vpop.f32.mrf.mxu0
        %v893 = vadd.f32 %v677, %v892
        %v894 = vpop.f32.mrf.mxu0
        %895 = vmatprep.mubr.bf16.mxu0 0
        %896 = vmatmul.mubr.bf16.gmra.mxu0 %v722
        %v897 = vpop.f32.mrf.mxu0
        %v898 = vadd.f32 %v682, %v897
        %v899 = vpop.f32.mrf.mxu0
        %v900 = vpop.f32.mrf.mxu0
        %v901 = vadd.f32 %v685, %v900
        %v902 = vpop.f32.mrf.mxu0
        %903 = vdwg.mxu0
        %v904 = vld [vmem:[%s168] sm:$0xe]
        %s905 = scalar_lea.vmem %s1, 4
        %v906 = vld [vmem:[%s905] sm:$0x3]
        %v908 = vunpack.c.l.b16 %v904
        %v909 = vpack.c.b16 %v248, %v908
        %vm910 = vcmask 1046528
        %v911 = vrot.slane %v909, 1
        %v912 = vrot.slane %v285, 1
        %v913 = vsel %vm910, %v911, %v912
        %v914 = vrot.slane %v286, 1
        %v915 = vsel %vm910, %v912, %v914
        %v916 = vrot.slane %v287, 1
        %v917 = vsel %vm910, %v914, %v916
        %v918 = vrot.slane %v288, 1
        %v919 = vsel %vm910, %v916, %v918
        %v920 = vrot.slane %v289, 1
        %v921 = vsel %vm910, %v918, %v920
        %v922 = vrot.slane %v290, 1
        %v923 = vsel %vm910, %v920, %v922
        %v924 = vrot.slane %v291, 1
        %v925 = vsel %vm910, %v922, %v924
        %v926 = vrot.slane %v292, 1
        %v927 = vsel %vm910, %v924, %v926
        %v928 = vrot.slane %v293, 1
        %v929 = vsel %vm910, %v926, %v928
        %v930 = vrot.slane %v294, 1
        %v931 = vsel %vm910, %v928, %v930
        %v932 = vrot.slane %v295, 1
        %v933 = vsel %vm910, %v930, %v932
        %v934 = vrot.slane %v296, 1
        %v935 = vsel %vm910, %v932, %v934
        %v936 = vrot.slane %v297, 1
        %v937 = vsel %vm910, %v934, %v936
        %v938 = vrot.slane %v298, 1
        %v939 = vsel %vm910, %v936, %v938
        %v940 = vrot.slane %v299, 1
        %v941 = vsel %vm910, %v938, %v940
        %v942 = vrot.slane %v300, 1
        %v943 = vsel %vm910, %v940, %v942
        %v944 = vrot.slane %v301, 1
        %v945 = vsel %vm910, %v942, %v944
        %v946 = vrot.slane %v302, 1
        %v947 = vsel %vm910, %v944, %v946
        %v949 = vsel %vm452, %v913, 0
        %v952 = vsel %vm452, %v915, 0
        %v955 = vsel %vm452, %v917, 0
        %v958 = vsel %vm452, %v919, 0
        %v961 = vsel %vm452, %v921, 0
        %v964 = vsel %vm452, %v923, 0
        %v967 = vsel %vm452, %v925, 0
        %v970 = vsel %vm452, %v927, 0
        %v973 = vsel %vm452, %v929, 0
        %v976 = vsel %vm452, %v931, 0
        %v979 = vsel %vm452, %v933, 0
        %v982 = vsel %vm452, %v935, 0
        %v985 = vsel %vm452, %v937, 0
        %v988 = vsel %vm452, %v939, 0
        %v991 = vsel %vm452, %v941, 0
        %v994 = vsel %vm452, %v943, 0
        %v997 = vsel %vm452, %v945, 0
        %v1000 = vsel %vm452, %v947, 0
        %v1003 = vsel %vm507, %v906, 0
        %1005 = vmatprep.subr.bf16.mxu0 0
        %1006 = vmatpush1.bf16.msra.mxu0 0
        %1007 = vmatprep.subr.bf16.mxu0 0
        %1008 = vmatpush1.bf16.msra.mxu0 0
        %1009 = vmatprep.subr.bf16.mxu0 0
        %1010 = vmatpush1.bf16.msra.mxu0 0
        %1011 = vmatprep.subr.bf16.mxu0 0
        %1012 = vmatpush1.bf16.msra.mxu0 0
        %1013 = vmatprep.subr.bf16.mxu0 0
        %1014 = vmatpush1.bf16.msra.mxu0 0
        %1015 = vmatprep.subr.bf16.mxu0 0
        %1016 = vmatpush1.bf16.msra.mxu0 0
        %1017 = vmatprep.subr.bf16.mxu0 0
        %1018 = vmatpush1.bf16.msra.mxu0 0
        %1019 = vmatprep.subr.bf16.mxu0 0
        %1020 = vmatpush1.bf16.msra.mxu0 %v1003
        %1021 = vmatprep.subr.bf16.mxu0 0
        %1022 = vmatpush2.bf16.msra.mxu0 0
        %1023 = vmatprep.subr.bf16.mxu0 0
        %1024 = vmatpush2.bf16.msra.mxu0 0
        %1025 = vmatprep.subr.bf16.mxu0 0
        %1026 = vmatpush2.bf16.msra.mxu0 0
        %1027 = vmatprep.subr.bf16.mxu0 0
        %1028 = vmatpush2.bf16.msra.mxu0 0
        %1029 = vmatprep.subr.bf16.mxu0 0
        %1030 = vmatpush2.bf16.msra.mxu0 0
        %1031 = vmatprep.subr.bf16.mxu0 0
        %1032 = vmatpush2.bf16.msra.mxu0 0
        %1033 = vmatprep.subr.bf16.mxu0 0
        %1034 = vmatpush2.bf16.msra.mxu0 0
        %1035 = vmatprep.subr.bf16.mxu0 0
        %1036 = vmatpush2.bf16.msra.mxu0 0
        %1037 = vmatprep.mubr.bf16.mxu0 0
        %1038 = vmatmul.mubr.bf16.gmra.mxu0 %v949
        %v1039 = vpop.f32.mrf.mxu0
        %v1040 = vadd.f32 0.0, %v1039
        %v1041 = vpop.f32.mrf.mxu0
        %v1042 = vpop.f32.mrf.mxu0
        %v1043 = vadd.f32 0.0, %v1042
        %v1044 = vpop.f32.mrf.mxu0
        %1045 = vmatprep.mubr.bf16.mxu0 0
        %1046 = vmatmul.mubr.bf16.gmra.mxu0 %v952
        %v1047 = vpop.f32.mrf.mxu0
        %v1048 = vadd.f32 0.0, %v1047
        %v1049 = vpop.f32.mrf.mxu0
        %v1050 = vpop.f32.mrf.mxu0
        %v1051 = vadd.f32 0.0, %v1050
        %v1052 = vpop.f32.mrf.mxu0
        %1053 = vmatprep.mubr.bf16.mxu0 0
        %1054 = vmatmul.mubr.bf16.gmra.mxu0 %v955
        %v1055 = vpop.f32.mrf.mxu0
        %v1056 = vadd.f32 0.0, %v1055
        %v1057 = vpop.f32.mrf.mxu0
        %v1058 = vpop.f32.mrf.mxu0
        %v1059 = vadd.f32 0.0, %v1058
        %v1060 = vpop.f32.mrf.mxu0
        %1061 = vmatprep.mubr.bf16.mxu0 0
        %1062 = vmatmul.mubr.bf16.gmra.mxu0 %v958
        %v1063 = vpop.f32.mrf.mxu0
        %v1064 = vadd.f32 0.0, %v1063
        %v1065 = vpop.f32.mrf.mxu0
        %v1066 = vpop.f32.mrf.mxu0
        %v1067 = vadd.f32 0.0, %v1066
        %v1068 = vpop.f32.mrf.mxu0
        %1069 = vmatprep.mubr.bf16.mxu0 0
        %1070 = vmatmul.mubr.bf16.gmra.mxu0 %v961
        %v1071 = vpop.f32.mrf.mxu0
        %v1072 = vadd.f32 0.0, %v1071
        %v1073 = vpop.f32.mrf.mxu0
        %v1074 = vpop.f32.mrf.mxu0
        %v1075 = vadd.f32 0.0, %v1074
        %v1076 = vpop.f32.mrf.mxu0
        %1077 = vmatprep.mubr.bf16.mxu0 0
        %1078 = vmatmul.mubr.bf16.gmra.mxu0 %v964
        %v1079 = vpop.f32.mrf.mxu0
        %v1080 = vadd.f32 0.0, %v1079
        %v1081 = vpop.f32.mrf.mxu0
        %v1082 = vpop.f32.mrf.mxu0
        %v1083 = vadd.f32 0.0, %v1082
        %v1084 = vpop.f32.mrf.mxu0
        %1085 = vmatprep.mubr.bf16.mxu0 0
        %1086 = vmatmul.mubr.bf16.gmra.mxu0 %v967
        %v1087 = vpop.f32.mrf.mxu0
        %v1088 = vadd.f32 0.0, %v1087
        %v1089 = vpop.f32.mrf.mxu0
        %v1090 = vpop.f32.mrf.mxu0
        %v1091 = vadd.f32 0.0, %v1090
        %v1092 = vpop.f32.mrf.mxu0
        %1093 = vmatprep.mubr.bf16.mxu0 0
        %1094 = vmatmul.mubr.bf16.gmra.mxu0 %v970
        %v1095 = vpop.f32.mrf.mxu0
        %v1096 = vadd.f32 0.0, %v1095
        %v1097 = vpop.f32.mrf.mxu0
        %v1098 = vpop.f32.mrf.mxu0
        %v1099 = vadd.f32 0.0, %v1098
        %v1100 = vpop.f32.mrf.mxu0
        %1101 = vmatprep.mubr.bf16.mxu0 0
        %1102 = vmatmul.mubr.bf16.gmra.mxu0 %v973
        %v1103 = vpop.f32.mrf.mxu0
        %v1104 = vadd.f32 0.0, %v1103
        %v1105 = vpop.f32.mrf.mxu0
        %v1106 = vpop.f32.mrf.mxu0
        %v1107 = vadd.f32 0.0, %v1106
        %v1108 = vpop.f32.mrf.mxu0
        %1109 = vmatprep.mubr.bf16.mxu0 0
        %1110 = vmatmul.mubr.bf16.gmra.mxu0 %v976
        %v1111 = vpop.f32.mrf.mxu0
        %v1112 = vadd.f32 0.0, %v1111
        %v1113 = vpop.f32.mrf.mxu0
        %v1114 = vpop.f32.mrf.mxu0
        %v1115 = vadd.f32 0.0, %v1114
        %v1116 = vpop.f32.mrf.mxu0
        %1117 = vmatprep.mubr.bf16.mxu0 0
        %1118 = vmatmul.mubr.bf16.gmra.mxu0 %v979
        %v1119 = vpop.f32.mrf.mxu0
        %v1120 = vadd.f32 0.0, %v1119
        %v1121 = vpop.f32.mrf.mxu0
        %v1122 = vpop.f32.mrf.mxu0
        %v1123 = vadd.f32 0.0, %v1122
        %v1124 = vpop.f32.mrf.mxu0
        %1125 = vmatprep.mubr.bf16.mxu0 0
        %1126 = vmatmul.mubr.bf16.gmra.mxu0 %v982
        %v1127 = vpop.f32.mrf.mxu0
        %v1128 = vadd.f32 0.0, %v1127
        %v1129 = vpop.f32.mrf.mxu0
        %v1130 = vpop.f32.mrf.mxu0
        %v1131 = vadd.f32 0.0, %v1130
        %v1132 = vpop.f32.mrf.mxu0
        %1133 = vmatprep.mubr.bf16.mxu0 0
        %1134 = vmatmul.mubr.bf16.gmra.mxu0 %v985
        %v1135 = vpop.f32.mrf.mxu0
        %v1136 = vadd.f32 0.0, %v1135
        %v1137 = vpop.f32.mrf.mxu0
        %v1138 = vpop.f32.mrf.mxu0
        %v1139 = vadd.f32 0.0, %v1138
        %v1140 = vpop.f32.mrf.mxu0
        %1141 = vmatprep.mubr.bf16.mxu0 0
        %1142 = vmatmul.mubr.bf16.gmra.mxu0 %v988
        %v1143 = vpop.f32.mrf.mxu0
        %v1144 = vadd.f32 0.0, %v1143
        %v1145 = vpop.f32.mrf.mxu0
        %v1146 = vpop.f32.mrf.mxu0
        %v1147 = vadd.f32 0.0, %v1146
        %v1148 = vpop.f32.mrf.mxu0
        %1149 = vmatprep.mubr.bf16.mxu0 0
        %1150 = vmatmul.mubr.bf16.gmra.mxu0 %v991
        %v1151 = vpop.f32.mrf.mxu0
        %v1152 = vadd.f32 0.0, %v1151
        %v1153 = vpop.f32.mrf.mxu0
        %v1154 = vpop.f32.mrf.mxu0
        %v1155 = vadd.f32 0.0, %v1154
        %v1156 = vpop.f32.mrf.mxu0
        %1157 = vmatprep.mubr.bf16.mxu0 0
        %1158 = vmatmul.mubr.bf16.gmra.mxu0 %v994
        %v1159 = vpop.f32.mrf.mxu0
        %v1160 = vadd.f32 0.0, %v1159
        %v1161 = vpop.f32.mrf.mxu0
        %v1162 = vpop.f32.mrf.mxu0
        %v1163 = vadd.f32 0.0, %v1162
        %v1164 = vpop.f32.mrf.mxu0
        %1165 = vmatprep.mubr.bf16.mxu0 0
        %1166 = vmatmul.mubr.bf16.gmra.mxu0 %v997
        %v1167 = vpop.f32.mrf.mxu0
        %v1168 = vadd.f32 0.0, %v1167
        %v1169 = vpop.f32.mrf.mxu0
        %v1170 = vpop.f32.mrf.mxu0
        %v1171 = vadd.f32 0.0, %v1170
        %v1172 = vpop.f32.mrf.mxu0
        %1173 = vmatprep.mubr.bf16.mxu0 0
        %1174 = vmatmul.mubr.bf16.gmra.mxu0 %v1000
        %v1175 = vpop.f32.mrf.mxu0
        %v1176 = vadd.f32 0.0, %v1175
        %v1177 = vpop.f32.mrf.mxu0
        %v1178 = vpop.f32.mrf.mxu0
        %v1179 = vadd.f32 0.0, %v1178
        %v1180 = vpop.f32.mrf.mxu0
        %1181 = vdwg.mxu0
        %v1182 = vadd.f32 %v762, %v1040
        %v1183 = vadd.f32 %v765, %v1043
        %v1184 = vadd.f32 %v770, %v1048
        %v1185 = vadd.f32 %v773, %v1051
        %v1186 = vadd.f32 %v778, %v1056
        %v1187 = vadd.f32 %v781, %v1059
        %v1188 = vadd.f32 %v786, %v1064
        %v1189 = vadd.f32 %v789, %v1067
        %v1190 = vadd.f32 %v794, %v1072
        %v1191 = vadd.f32 %v797, %v1075
        %v1192 = vadd.f32 %v802, %v1080
        %v1193 = vadd.f32 %v805, %v1083
        %v1194 = vadd.f32 %v810, %v1088
        %v1195 = vadd.f32 %v813, %v1091
        %v1196 = vadd.f32 %v818, %v1096
        %v1197 = vadd.f32 %v821, %v1099
        %v1198 = vadd.f32 %v826, %v1104
        %v1199 = vadd.f32 %v829, %v1107
        %v1200 = vadd.f32 %v834, %v1112
        %v1201 = vadd.f32 %v837, %v1115
        %v1202 = vadd.f32 %v842, %v1120
        %v1203 = vadd.f32 %v845, %v1123
        %v1204 = vadd.f32 %v850, %v1128
        %v1205 = vadd.f32 %v853, %v1131
        %v1206 = vadd.f32 %v858, %v1136
        %v1207 = vadd.f32 %v861, %v1139
        %v1208 = vadd.f32 %v866, %v1144
        %v1209 = vadd.f32 %v869, %v1147
        %v1210 = vadd.f32 %v874, %v1152
        %v1211 = vadd.f32 %v877, %v1155
        %v1212 = vadd.f32 %v882, %v1160
        %v1213 = vadd.f32 %v885, %v1163
        %v1214 = vadd.f32 %v890, %v1168
        %v1215 = vadd.f32 %v893, %v1171
        %v1216 = vadd.f32 %v898, %v1176
        %v1217 = vadd.f32 %v901, %v1179
        %v1218 = vld [vmem:[%s168 + $0x8] sm:$0xe]
        %v1219 = vld [vmem:[%s168 + $0xc] sm:$0xf]
        %v1220 = vld [vmem:[%s168 + $0x10] sm:$0xf]
        %v1221 = vld [vmem:[%s168 + $0x14] sm:$0xf]
        %v1222 = vld [vmem:[%s168 + $0x18] sm:$0xf]
        %v1223 = vld [vmem:[%s168 + $0x1c] sm:$0xf]
        %v1224 = vld [vmem:[%s168 + $0x20] sm:$0xf]
        %v1225 = vld [vmem:[%s168 + $0x24] sm:$0xf]
        %v1226 = vld [vmem:[%s168 + $0x28] sm:$0xf]
        %v1227 = vld [vmem:[%s168 + $0x2c] sm:$0xf]
        %v1228 = vld [vmem:[%s168 + $0x30] sm:$0xf]
        %v1229 = vld [vmem:[%s168 + $0x34] sm:$0xf]
        %v1230 = vld [vmem:[%s168 + $0x38] sm:$0xf]
        %v1231 = vld [vmem:[%s168 + $0x3c] sm:$0xf]
        %v1232 = vld [vmem:[%s168 + $0x40] sm:$0xf]
        %v1233 = vld [vmem:[%s168 + $0x44] sm:$0xf]
        %v1234 = vld [vmem:[%s168 + $0x48] sm:$0xf]
        %v1235 = vld [vmem:[%s168 + $0x4c] sm:$0xf]
        %v1236 = vld [vmem:[%s168 + $0x50] sm:$0xf]
        %v1237 = vld [vmem:[%s168 + $0x54] sm:$0xf]
        %v1238 = vld [vmem:[%s168 + $0x58] sm:$0xf]
        %v1239 = vld [vmem:[%s168 + $0x5c] sm:$0xf]
        %v1240 = vld [vmem:[%s168 + $0x60] sm:$0xf]
        %v1241 = vld [vmem:[%s168 + $0x64] sm:$0xf]
        %v1242 = vld [vmem:[%s168 + $0x68] sm:$0xf]
        %v1243 = vld [vmem:[%s168 + $0x6c] sm:$0xf]
        %v1244 = vld [vmem:[%s168 + $0x70] sm:$0xf]
        %v1245 = vld [vmem:[%s168 + $0x74] sm:$0xf]
        %v1246 = vld [vmem:[%s168 + $0x78] sm:$0xf]
        %v1247 = vld [vmem:[%s168 + $0x7c] sm:$0xf]
        %v1248 = vld [vmem:[%s168 + $0x80] sm:$0xf]
        %v1249 = vld [vmem:[%s168 + $0x84] sm:$0xf]
        %v1250 = vld [vmem:[%s168 + $0x88] sm:$0xf]
        %v1251 = vld [vmem:[%s168 + $0x8c] sm:$0xf]
        %v1252 = vld [vmem:[%s168 + $0x90] sm:$0xf]
        %v1253 = vld [vmem:[%s168 + $0x94] sm:$0xf]
        %v1254 = vld [vmem:[%s168 + $0x98] sm:$0x1]
        %s1255 = scalar_lea.vmem %s1, 6
        %v1256 = vld [vmem:[%s1255] sm:$0x3]
        %v1294 = vunpack.c.l.b16 %v1218
        %v1295 = vunpack.c.l.b16 %v1219
        %v1296 = vunpack.c.l.b16 %v1220
        %v1297 = vunpack.c.l.b16 %v1221
        %v1298 = vunpack.c.l.b16 %v1222
        %v1299 = vunpack.c.l.b16 %v1223
        %v1300 = vunpack.c.l.b16 %v1224
        %v1301 = vunpack.c.l.b16 %v1225
        %v1302 = vunpack.c.l.b16 %v1226
        %v1303 = vunpack.c.l.b16 %v1227
        %v1304 = vunpack.c.l.b16 %v1228
        %v1305 = vunpack.c.l.b16 %v1229
        %v1306 = vunpack.c.l.b16 %v1230
        %v1307 = vunpack.c.l.b16 %v1231
        %v1308 = vunpack.c.l.b16 %v1232
        %v1309 = vunpack.c.l.b16 %v1233
        %v1310 = vunpack.c.l.b16 %v1234
        %v1311 = vunpack.c.l.b16 %v1235
        %v1312 = vunpack.c.l.b16 %v1236
        %v1313 = vunpack.c.l.b16 %v1237
        %v1314 = vunpack.c.l.b16 %v1238
        %v1315 = vunpack.c.l.b16 %v1239
        %v1316 = vunpack.c.l.b16 %v1240
        %v1317 = vunpack.c.l.b16 %v1241
        %v1318 = vunpack.c.l.b16 %v1242
        %v1319 = vunpack.c.l.b16 %v1243
        %v1320 = vunpack.c.l.b16 %v1244
        %v1321 = vunpack.c.l.b16 %v1245
        %v1322 = vunpack.c.l.b16 %v1246
        %v1323 = vunpack.c.l.b16 %v1247
        %v1324 = vunpack.c.l.b16 %v1248
        %v1325 = vunpack.c.l.b16 %v1249
        %v1326 = vunpack.c.l.b16 %v1250
        %v1327 = vunpack.c.l.b16 %v1251
        %v1328 = vunpack.c.l.b16 %v1252
        %v1329 = vunpack.c.l.b16 %v1253
        %v1330 = vunpack.c.l.b16 %v1254
        %v1331 = vpack.c.b16 %v1295, %v1294
        %v1332 = vpack.c.b16 %v1297, %v1296
        %v1333 = vpack.c.b16 %v1299, %v1298
        %v1334 = vpack.c.b16 %v1301, %v1300
        %v1335 = vpack.c.b16 %v1303, %v1302
        %v1336 = vpack.c.b16 %v1305, %v1304
        %v1337 = vpack.c.b16 %v1307, %v1306
        %v1338 = vpack.c.b16 %v1309, %v1308
        %v1339 = vpack.c.b16 %v1311, %v1310
        %v1340 = vpack.c.b16 %v1313, %v1312
        %v1341 = vpack.c.b16 %v1315, %v1314
        %v1342 = vpack.c.b16 %v1317, %v1316
        %v1343 = vpack.c.b16 %v1319, %v1318
        %v1344 = vpack.c.b16 %v1321, %v1320
        %v1345 = vpack.c.b16 %v1323, %v1322
        %v1346 = vpack.c.b16 %v1325, %v1324
        %v1347 = vpack.c.b16 %v1327, %v1326
        %v1348 = vpack.c.b16 %v1329, %v1328
        %v1349 = vpack.c.b16 %v1330, %v1330
        %v1350 = vrot.slane %v1331, 1
        %v1351 = vrot.slane %v1332, 1
        %v1352 = vsel %vm910, %v1350, %v1351
        %v1353 = vrot.slane %v1333, 1
        %v1354 = vsel %vm910, %v1351, %v1353
        %v1355 = vrot.slane %v1334, 1
        %v1356 = vsel %vm910, %v1353, %v1355
        %v1357 = vrot.slane %v1335, 1
        %v1358 = vsel %vm910, %v1355, %v1357
        %v1359 = vrot.slane %v1336, 1
        %v1360 = vsel %vm910, %v1357, %v1359
        %v1361 = vrot.slane %v1337, 1
        %v1362 = vsel %vm910, %v1359, %v1361
        %v1363 = vrot.slane %v1338, 1
        %v1364 = vsel %vm910, %v1361, %v1363
        %v1365 = vrot.slane %v1339, 1
        %v1366 = vsel %vm910, %v1363, %v1365
        %v1367 = vrot.slane %v1340, 1
        %v1368 = vsel %vm910, %v1365, %v1367
        %v1369 = vrot.slane %v1341, 1
        %v1370 = vsel %vm910, %v1367, %v1369
        %v1371 = vrot.slane %v1342, 1
        %v1372 = vsel %vm910, %v1369, %v1371
        %v1373 = vrot.slane %v1343, 1
        %v1374 = vsel %vm910, %v1371, %v1373
        %v1375 = vrot.slane %v1344, 1
        %v1376 = vsel %vm910, %v1373, %v1375
        %v1377 = vrot.slane %v1345, 1
        %v1378 = vsel %vm910, %v1375, %v1377
        %v1379 = vrot.slane %v1346, 1
        %v1380 = vsel %vm910, %v1377, %v1379
        %v1381 = vrot.slane %v1347, 1
        %v1382 = vsel %vm910, %v1379, %v1381
        %v1383 = vrot.slane %v1348, 1
        %v1384 = vsel %vm910, %v1381, %v1383
        %v1385 = vrot.slane %v1349, 1
        %v1386 = vsel %vm910, %v1383, %v1385
        %v1388 = vsel %vm452, %v1352, 0
        %v1391 = vsel %vm452, %v1354, 0
        %v1394 = vsel %vm452, %v1356, 0
        %v1397 = vsel %vm452, %v1358, 0
        %v1400 = vsel %vm452, %v1360, 0
        %v1403 = vsel %vm452, %v1362, 0
        %v1406 = vsel %vm452, %v1364, 0
        %v1409 = vsel %vm452, %v1366, 0
        %v1412 = vsel %vm452, %v1368, 0
        %v1415 = vsel %vm452, %v1370, 0
        %v1418 = vsel %vm452, %v1372, 0
        %v1421 = vsel %vm452, %v1374, 0
        %v1424 = vsel %vm452, %v1376, 0
        %v1427 = vsel %vm452, %v1378, 0
        %v1430 = vsel %vm452, %v1380, 0
        %v1433 = vsel %vm452, %v1382, 0
        %v1436 = vsel %vm452, %v1384, 0
        %v1439 = vsel %vm452, %v1386, 0
        %v1442 = vsel %vm507, %v1256, 0
        %1444 = vmatprep.subr.bf16.mxu0 0
        %1445 = vmatpush1.bf16.msra.mxu0 0
        %1446 = vmatprep.subr.bf16.mxu0 0
        %1447 = vmatpush1.bf16.msra.mxu0 0
        %1448 = vmatprep.subr.bf16.mxu0 0
        %1449 = vmatpush1.bf16.msra.mxu0 0
        %1450 = vmatprep.subr.bf16.mxu0 0
        %1451 = vmatpush1.bf16.msra.mxu0 0
        %1452 = vmatprep.subr.bf16.mxu0 0
        %1453 = vmatpush1.bf16.msra.mxu0 0
        %1454 = vmatprep.subr.bf16.mxu0 0
        %1455 = vmatpush1.bf16.msra.mxu0 0
        %1456 = vmatprep.subr.bf16.mxu0 0
        %1457 = vmatpush1.bf16.msra.mxu0 0
        %1458 = vmatprep.subr.bf16.mxu0 0
        %1459 = vmatpush1.bf16.msra.mxu0 %v1442
        %1460 = vmatprep.subr.bf16.mxu0 0
        %1461 = vmatpush2.bf16.msra.mxu0 0
        %1462 = vmatprep.subr.bf16.mxu0 0
        %1463 = vmatpush2.bf16.msra.mxu0 0
        %1464 = vmatprep.subr.bf16.mxu0 0
        %1465 = vmatpush2.bf16.msra.mxu0 0
        %1466 = vmatprep.subr.bf16.mxu0 0
        %1467 = vmatpush2.bf16.msra.mxu0 0
        %1468 = vmatprep.subr.bf16.mxu0 0
        %1469 = vmatpush2.bf16.msra.mxu0 0
        %1470 = vmatprep.subr.bf16.mxu0 0
        %1471 = vmatpush2.bf16.msra.mxu0 0
        %1472 = vmatprep.subr.bf16.mxu0 0
        %1473 = vmatpush2.bf16.msra.mxu0 0
        %1474 = vmatprep.subr.bf16.mxu0 0
        %1475 = vmatpush2.bf16.msra.mxu0 0
        %1476 = vmatprep.mubr.bf16.mxu0 0
        %1477 = vmatmul.mubr.bf16.gmra.mxu0 %v1388
        %v1478 = vpop.f32.mrf.mxu0
        %v1479 = vadd.f32 0.0, %v1478
        %v1480 = vpop.f32.mrf.mxu0
        %v1481 = vpop.f32.mrf.mxu0
        %v1482 = vadd.f32 0.0, %v1481
        %v1483 = vpop.f32.mrf.mxu0
        %1484 = vmatprep.mubr.bf16.mxu0 0
        %1485 = vmatmul.mubr.bf16.gmra.mxu0 %v1391
        %v1486 = vpop.f32.mrf.mxu0
        %v1487 = vadd.f32 0.0, %v1486
        %v1488 = vpop.f32.mrf.mxu0
        %v1489 = vpop.f32.mrf.mxu0
        %v1490 = vadd.f32 0.0, %v1489
        %v1491 = vpop.f32.mrf.mxu0
        %1492 = vmatprep.mubr.bf16.mxu0 0
        %1493 = vmatmul.mubr.bf16.gmra.mxu0 %v1394
        %v1494 = vpop.f32.mrf.mxu0
        %v1495 = vadd.f32 0.0, %v1494
        %v1496 = vpop.f32.mrf.mxu0
        %v1497 = vpop.f32.mrf.mxu0
        %v1498 = vadd.f32 0.0, %v1497
        %v1499 = vpop.f32.mrf.mxu0
        %1500 = vmatprep.mubr.bf16.mxu0 0
        %1501 = vmatmul.mubr.bf16.gmra.mxu0 %v1397
        %v1502 = vpop.f32.mrf.mxu0
        %v1503 = vadd.f32 0.0, %v1502
        %v1504 = vpop.f32.mrf.mxu0
        %v1505 = vpop.f32.mrf.mxu0
        %v1506 = vadd.f32 0.0, %v1505
        %v1507 = vpop.f32.mrf.mxu0
        %1508 = vmatprep.mubr.bf16.mxu0 0
        %1509 = vmatmul.mubr.bf16.gmra.mxu0 %v1400
        %v1510 = vpop.f32.mrf.mxu0
        %v1511 = vadd.f32 0.0, %v1510
        %v1512 = vpop.f32.mrf.mxu0
        %v1513 = vpop.f32.mrf.mxu0
        %v1514 = vadd.f32 0.0, %v1513
        %v1515 = vpop.f32.mrf.mxu0
        %1516 = vmatprep.mubr.bf16.mxu0 0
        %1517 = vmatmul.mubr.bf16.gmra.mxu0 %v1403
        %v1518 = vpop.f32.mrf.mxu0
        %v1519 = vadd.f32 0.0, %v1518
        %v1520 = vpop.f32.mrf.mxu0
        %v1521 = vpop.f32.mrf.mxu0
        %v1522 = vadd.f32 0.0, %v1521
        %v1523 = vpop.f32.mrf.mxu0
        %1524 = vmatprep.mubr.bf16.mxu0 0
        %1525 = vmatmul.mubr.bf16.gmra.mxu0 %v1406
        %v1526 = vpop.f32.mrf.mxu0
        %v1527 = vadd.f32 0.0, %v1526
        %v1528 = vpop.f32.mrf.mxu0
        %v1529 = vpop.f32.mrf.mxu0
        %v1530 = vadd.f32 0.0, %v1529
        %v1531 = vpop.f32.mrf.mxu0
        %1532 = vmatprep.mubr.bf16.mxu0 0
        %1533 = vmatmul.mubr.bf16.gmra.mxu0 %v1409
        %v1534 = vpop.f32.mrf.mxu0
        %v1535 = vadd.f32 0.0, %v1534
        %v1536 = vpop.f32.mrf.mxu0
        %v1537 = vpop.f32.mrf.mxu0
        %v1538 = vadd.f32 0.0, %v1537
        %v1539 = vpop.f32.mrf.mxu0
        %1540 = vmatprep.mubr.bf16.mxu0 0
        %1541 = vmatmul.mubr.bf16.gmra.mxu0 %v1412
        %v1542 = vpop.f32.mrf.mxu0
        %v1543 = vadd.f32 0.0, %v1542
        %v1544 = vpop.f32.mrf.mxu0
        %v1545 = vpop.f32.mrf.mxu0
        %v1546 = vadd.f32 0.0, %v1545
        %v1547 = vpop.f32.mrf.mxu0
        %1548 = vmatprep.mubr.bf16.mxu0 0
        %1549 = vmatmul.mubr.bf16.gmra.mxu0 %v1415
        %v1550 = vpop.f32.mrf.mxu0
        %v1551 = vadd.f32 0.0, %v1550
        %v1552 = vpop.f32.mrf.mxu0
        %v1553 = vpop.f32.mrf.mxu0
        %v1554 = vadd.f32 0.0, %v1553
        %v1555 = vpop.f32.mrf.mxu0
        %1556 = vmatprep.mubr.bf16.mxu0 0
        %1557 = vmatmul.mubr.bf16.gmra.mxu0 %v1418
        %v1558 = vpop.f32.mrf.mxu0
        %v1559 = vadd.f32 0.0, %v1558
        %v1560 = vpop.f32.mrf.mxu0
        %v1561 = vpop.f32.mrf.mxu0
        %v1562 = vadd.f32 0.0, %v1561
        %v1563 = vpop.f32.mrf.mxu0
        %1564 = vmatprep.mubr.bf16.mxu0 0
        %1565 = vmatmul.mubr.bf16.gmra.mxu0 %v1421
        %v1566 = vpop.f32.mrf.mxu0
        %v1567 = vadd.f32 0.0, %v1566
        %v1568 = vpop.f32.mrf.mxu0
        %v1569 = vpop.f32.mrf.mxu0
        %v1570 = vadd.f32 0.0, %v1569
        %v1571 = vpop.f32.mrf.mxu0
        %1572 = vmatprep.mubr.bf16.mxu0 0
        %1573 = vmatmul.mubr.bf16.gmra.mxu0 %v1424
        %v1574 = vpop.f32.mrf.mxu0
        %v1575 = vadd.f32 0.0, %v1574
        %v1576 = vpop.f32.mrf.mxu0
        %v1577 = vpop.f32.mrf.mxu0
        %v1578 = vadd.f32 0.0, %v1577
        %v1579 = vpop.f32.mrf.mxu0
        %1580 = vmatprep.mubr.bf16.mxu0 0
        %1581 = vmatmul.mubr.bf16.gmra.mxu0 %v1427
        %v1582 = vpop.f32.mrf.mxu0
        %v1583 = vadd.f32 0.0, %v1582
        %v1584 = vpop.f32.mrf.mxu0
        %v1585 = vpop.f32.mrf.mxu0
        %v1586 = vadd.f32 0.0, %v1585
        %v1587 = vpop.f32.mrf.mxu0
        %1588 = vmatprep.mubr.bf16.mxu0 0
        %1589 = vmatmul.mubr.bf16.gmra.mxu0 %v1430
        %v1590 = vpop.f32.mrf.mxu0
        %v1591 = vadd.f32 0.0, %v1590
        %v1592 = vpop.f32.mrf.mxu0
        %v1593 = vpop.f32.mrf.mxu0
        %v1594 = vadd.f32 0.0, %v1593
        %v1595 = vpop.f32.mrf.mxu0
        %1596 = vmatprep.mubr.bf16.mxu0 0
        %1597 = vmatmul.mubr.bf16.gmra.mxu0 %v1433
        %v1598 = vpop.f32.mrf.mxu0
        %v1599 = vadd.f32 0.0, %v1598
        %v1600 = vpop.f32.mrf.mxu0
        %v1601 = vpop.f32.mrf.mxu0
        %v1602 = vadd.f32 0.0, %v1601
        %v1603 = vpop.f32.mrf.mxu0
        %1604 = vmatprep.mubr.bf16.mxu0 0
        %1605 = vmatmul.mubr.bf16.gmra.mxu0 %v1436
        %v1606 = vpop.f32.mrf.mxu0
        %v1607 = vadd.f32 0.0, %v1606
        %v1608 = vpop.f32.mrf.mxu0
        %v1609 = vpop.f32.mrf.mxu0
        %v1610 = vadd.f32 0.0, %v1609
        %v1611 = vpop.f32.mrf.mxu0
        %1612 = vmatprep.mubr.bf16.mxu0 0
        %1613 = vmatmul.mubr.bf16.gmra.mxu0 %v1439
        %v1614 = vpop.f32.mrf.mxu0
        %v1615 = vadd.f32 0.0, %v1614
        %v1616 = vpop.f32.mrf.mxu0
        %v1617 = vpop.f32.mrf.mxu0
        %v1618 = vadd.f32 0.0, %v1617
        %v1619 = vpop.f32.mrf.mxu0
        %1620 = vdwg.mxu0
        %v1621 = vadd.f32 %v1182, %v1479
        %v1622 = vadd.f32 %v1183, %v1482
        %v1623 = vadd.f32 %v1184, %v1487
        %v1624 = vadd.f32 %v1185, %v1490
        %v1625 = vadd.f32 %v1186, %v1495
        %v1626 = vadd.f32 %v1187, %v1498
        %v1627 = vadd.f32 %v1188, %v1503
        %v1628 = vadd.f32 %v1189, %v1506
        %v1629 = vadd.f32 %v1190, %v1511
        %v1630 = vadd.f32 %v1191, %v1514
        %v1631 = vadd.f32 %v1192, %v1519
        %v1632 = vadd.f32 %v1193, %v1522
        %v1633 = vadd.f32 %v1194, %v1527
        %v1634 = vadd.f32 %v1195, %v1530
        %v1635 = vadd.f32 %v1196, %v1535
        %v1636 = vadd.f32 %v1197, %v1538
        %v1637 = vadd.f32 %v1198, %v1543
        %v1638 = vadd.f32 %v1199, %v1546
        %v1639 = vadd.f32 %v1200, %v1551
        %v1640 = vadd.f32 %v1201, %v1554
        %v1641 = vadd.f32 %v1202, %v1559
        %v1642 = vadd.f32 %v1203, %v1562
        %v1643 = vadd.f32 %v1204, %v1567
        %v1644 = vadd.f32 %v1205, %v1570
        %v1645 = vadd.f32 %v1206, %v1575
        %v1646 = vadd.f32 %v1207, %v1578
        %v1647 = vadd.f32 %v1208, %v1583
        %v1648 = vadd.f32 %v1209, %v1586
        %v1649 = vadd.f32 %v1210, %v1591
        %v1650 = vadd.f32 %v1211, %v1594
        %v1651 = vadd.f32 %v1212, %v1599
        %v1652 = vadd.f32 %v1213, %v1602
        %v1653 = vadd.f32 %v1214, %v1607
        %v1654 = vadd.f32 %v1215, %v1610
        %v1655 = vadd.f32 %v1216, %v1615
        %v1656 = vadd.f32 %v1217, %v1618
        %v1657 = vld [vmem:[%s168 + $0x98] sm:$0x3]
        %s1658 = scalar_lea.vmem %s1, 8
        %v1659 = vld [vmem:[%s1658] sm:$0x3]
        %v1661 = vunpack.c.l.b16 %v1657
        %v1662 = vpack.c.b16 %v1661, %v1661
        %vm1663 = vsmask.f32 6400
        %v1665 = vshrl.u32 %v1331, 16
        %v1667 = vrot.slane %v1665, 1
        %v1668 = vshll.u32 %v1331, 16
        %v1670 = vrot.slane %v1668, 2
        %v1671 = vor.u32 %v1667, %v1670
        %v1673 = vshrl.u32 %v1332, 16
        %v1675 = vrot.slane %v1673, 1
        %v1676 = vshll.u32 %v1332, 16
        %v1678 = vrot.slane %v1676, 2
        %v1679 = vor.u32 %v1675, %v1678
        %v1680 = vsel %vm1663, %v1671, %v1679
        %v1682 = vshrl.u32 %v1333, 16
        %v1684 = vrot.slane %v1682, 1
        %v1685 = vshll.u32 %v1333, 16
        %v1687 = vrot.slane %v1685, 2
        %v1688 = vor.u32 %v1684, %v1687
        %v1689 = vsel %vm1663, %v1679, %v1688
        %v1691 = vshrl.u32 %v1334, 16
        %v1693 = vrot.slane %v1691, 1
        %v1694 = vshll.u32 %v1334, 16
        %v1696 = vrot.slane %v1694, 2
        %v1697 = vor.u32 %v1693, %v1696
        %v1698 = vsel %vm1663, %v1688, %v1697
        %v1700 = vshrl.u32 %v1335, 16
        %v1702 = vrot.slane %v1700, 1
        %v1703 = vshll.u32 %v1335, 16
        %v1705 = vrot.slane %v1703, 2
        %v1706 = vor.u32 %v1702, %v1705
        %v1707 = vsel %vm1663, %v1697, %v1706
        %v1709 = vshrl.u32 %v1336, 16
        %v1711 = vrot.slane %v1709, 1
        %v1712 = vshll.u32 %v1336, 16
        %v1714 = vrot.slane %v1712, 2
        %v1715 = vor.u32 %v1711, %v1714
        %v1716 = vsel %vm1663, %v1706, %v1715
        %v1718 = vshrl.u32 %v1337, 16
        %v1720 = vrot.slane %v1718, 1
        %v1721 = vshll.u32 %v1337, 16
        %v1723 = vrot.slane %v1721, 2
        %v1724 = vor.u32 %v1720, %v1723
        %v1725 = vsel %vm1663, %v1715, %v1724
        %v1727 = vshrl.u32 %v1338, 16
        %v1729 = vrot.slane %v1727, 1
        %v1730 = vshll.u32 %v1338, 16
        %v1732 = vrot.slane %v1730, 2
        %v1733 = vor.u32 %v1729, %v1732
        %v1734 = vsel %vm1663, %v1724, %v1733
        %v1736 = vshrl.u32 %v1339, 16
        %v1738 = vrot.slane %v1736, 1
        %v1739 = vshll.u32 %v1339, 16
        %v1741 = vrot.slane %v1739, 2
        %v1742 = vor.u32 %v1738, %v1741
        %v1743 = vsel %vm1663, %v1733, %v1742
        %v1745 = vshrl.u32 %v1340, 16
        %v1747 = vrot.slane %v1745, 1
        %v1748 = vshll.u32 %v1340, 16
        %v1750 = vrot.slane %v1748, 2
        %v1751 = vor.u32 %v1747, %v1750
        %v1752 = vsel %vm1663, %v1742, %v1751
        %v1754 = vshrl.u32 %v1341, 16
        %v1756 = vrot.slane %v1754, 1
        %v1757 = vshll.u32 %v1341, 16
        %v1759 = vrot.slane %v1757, 2
        %v1760 = vor.u32 %v1756, %v1759
        %v1761 = vsel %vm1663, %v1751, %v1760
        %v1763 = vshrl.u32 %v1342, 16
        %v1765 = vrot.slane %v1763, 1
        %v1766 = vshll.u32 %v1342, 16
        %v1768 = vrot.slane %v1766, 2
        %v1769 = vor.u32 %v1765, %v1768
        %v1770 = vsel %vm1663, %v1760, %v1769
        %v1772 = vshrl.u32 %v1343, 16
        %v1774 = vrot.slane %v1772, 1
        %v1775 = vshll.u32 %v1343, 16
        %v1777 = vrot.slane %v1775, 2
        %v1778 = vor.u32 %v1774, %v1777
        %v1779 = vsel %vm1663, %v1769, %v1778
        %v1781 = vshrl.u32 %v1344, 16
        %v1783 = vrot.slane %v1781, 1
        %v1784 = vshll.u32 %v1344, 16
        %v1786 = vrot.slane %v1784, 2
        %v1787 = vor.u32 %v1783, %v1786
        %v1788 = vsel %vm1663, %v1778, %v1787
        %v1790 = vshrl.u32 %v1345, 16
        %v1792 = vrot.slane %v1790, 1
        %v1793 = vshll.u32 %v1345, 16
        %v1795 = vrot.slane %v1793, 2
        %v1796 = vor.u32 %v1792, %v1795
        %v1797 = vsel %vm1663, %v1787, %v1796
        %v1799 = vshrl.u32 %v1346, 16
        %v1801 = vrot.slane %v1799, 1
        %v1802 = vshll.u32 %v1346, 16
        %v1804 = vrot.slane %v1802, 2
        %v1805 = vor.u32 %v1801, %v1804
        %v1806 = vsel %vm1663, %v1796, %v1805
        %v1808 = vshrl.u32 %v1347, 16
        %v1810 = vrot.slane %v1808, 1
        %v1811 = vshll.u32 %v1347, 16
        %v1813 = vrot.slane %v1811, 2
        %v1814 = vor.u32 %v1810, %v1813
        %v1815 = vsel %vm1663, %v1805, %v1814
        %v1817 = vshrl.u32 %v1348, 16
        %v1819 = vrot.slane %v1817, 1
        %v1820 = vshll.u32 %v1348, 16
        %v1822 = vrot.slane %v1820, 2
        %v1823 = vor.u32 %v1819, %v1822
        %v1824 = vsel %vm1663, %v1814, %v1823
        %v1826 = vshrl.u32 %v1662, 16
        %v1828 = vrot.slane %v1826, 1
        %v1829 = vshll.u32 %v1662, 16
        %v1831 = vrot.slane %v1829, 2
        %v1832 = vor.u32 %v1828, %v1831
        %v1833 = vsel %vm1663, %v1823, %v1832
        %v1835 = vsel %vm452, %v1680, 0
        %v1838 = vsel %vm452, %v1689, 0
        %v1841 = vsel %vm452, %v1698, 0
        %v1844 = vsel %vm452, %v1707, 0
        %v1847 = vsel %vm452, %v1716, 0
        %v1850 = vsel %vm452, %v1725, 0
        %v1853 = vsel %vm452, %v1734, 0
        %v1856 = vsel %vm452, %v1743, 0
        %v1859 = vsel %vm452, %v1752, 0
        %v1862 = vsel %vm452, %v1761, 0
        %v1865 = vsel %vm452, %v1770, 0
        %v1868 = vsel %vm452, %v1779, 0
        %v1871 = vsel %vm452, %v1788, 0
        %v1874 = vsel %vm452, %v1797, 0
        %v1877 = vsel %vm452, %v1806, 0
        %v1880 = vsel %vm452, %v1815, 0
        %v1883 = vsel %vm452, %v1824, 0
        %v1886 = vsel %vm452, %v1833, 0
        %v1889 = vsel %vm507, %v1659, 0
        %1891 = vmatprep.subr.bf16.mxu0 0
        %1892 = vmatpush1.bf16.msra.mxu0 0
        %1893 = vmatprep.subr.bf16.mxu0 0
        %1894 = vmatpush1.bf16.msra.mxu0 0
        %1895 = vmatprep.subr.bf16.mxu0 0
        %1896 = vmatpush1.bf16.msra.mxu0 0
        %1897 = vmatprep.subr.bf16.mxu0 0
        %1898 = vmatpush1.bf16.msra.mxu0 0
        %1899 = vmatprep.subr.bf16.mxu0 0
        %1900 = vmatpush1.bf16.msra.mxu0 0
        %1901 = vmatprep.subr.bf16.mxu0 0
        %1902 = vmatpush1.bf16.msra.mxu0 0
        %1903 = vmatprep.subr.bf16.mxu0 0
        %1904 = vmatpush1.bf16.msra.mxu0 0
        %1905 = vmatprep.subr.bf16.mxu0 0
        %1906 = vmatpush1.bf16.msra.mxu0 %v1889
        %1907 = vmatprep.subr.bf16.mxu0 0
        %1908 = vmatpush2.bf16.msra.mxu0 0
        %1909 = vmatprep.subr.bf16.mxu0 0
        %1910 = vmatpush2.bf16.msra.mxu0 0
        %1911 = vmatprep.subr.bf16.mxu0 0
        %1912 = vmatpush2.bf16.msra.mxu0 0
        %1913 = vmatprep.subr.bf16.mxu0 0
        %1914 = vmatpush2.bf16.msra.mxu0 0
        %1915 = vmatprep.subr.bf16.mxu0 0
        %1916 = vmatpush2.bf16.msra.mxu0 0
        %1917 = vmatprep.subr.bf16.mxu0 0
        %1918 = vmatpush2.bf16.msra.mxu0 0
        %1919 = vmatprep.subr.bf16.mxu0 0
        %1920 = vmatpush2.bf16.msra.mxu0 0
        %1921 = vmatprep.subr.bf16.mxu0 0
        %1922 = vmatpush2.bf16.msra.mxu0 0
        %1923 = vmatprep.mubr.bf16.mxu0 0
        %1924 = vmatmul.mubr.bf16.gmra.mxu0 %v1835
        %v1925 = vpop.f32.mrf.mxu0
        %v1926 = vadd.f32 0.0, %v1925
        %v1927 = vpop.f32.mrf.mxu0
        %v1928 = vpop.f32.mrf.mxu0
        %v1929 = vadd.f32 0.0, %v1928
        %v1930 = vpop.f32.mrf.mxu0
        %1931 = vmatprep.mubr.bf16.mxu0 0
        %1932 = vmatmul.mubr.bf16.gmra.mxu0 %v1838
        %v1933 = vpop.f32.mrf.mxu0
        %v1934 = vadd.f32 0.0, %v1933
        %v1935 = vpop.f32.mrf.mxu0
        %v1936 = vpop.f32.mrf.mxu0
        %v1937 = vadd.f32 0.0, %v1936
        %v1938 = vpop.f32.mrf.mxu0
        %1939 = vmatprep.mubr.bf16.mxu0 0
        %1940 = vmatmul.mubr.bf16.gmra.mxu0 %v1841
        %v1941 = vpop.f32.mrf.mxu0
        %v1942 = vadd.f32 0.0, %v1941
        %v1943 = vpop.f32.mrf.mxu0
        %v1944 = vpop.f32.mrf.mxu0
        %v1945 = vadd.f32 0.0, %v1944
        %v1946 = vpop.f32.mrf.mxu0
        %1947 = vmatprep.mubr.bf16.mxu0 0
        %1948 = vmatmul.mubr.bf16.gmra.mxu0 %v1844
        %v1949 = vpop.f32.mrf.mxu0
        %v1950 = vadd.f32 0.0, %v1949
        %v1951 = vpop.f32.mrf.mxu0
        %v1952 = vpop.f32.mrf.mxu0
        %v1953 = vadd.f32 0.0, %v1952
        %v1954 = vpop.f32.mrf.mxu0
        %1955 = vmatprep.mubr.bf16.mxu0 0
        %1956 = vmatmul.mubr.bf16.gmra.mxu0 %v1847
        %v1957 = vpop.f32.mrf.mxu0
        %v1958 = vadd.f32 0.0, %v1957
        %v1959 = vpop.f32.mrf.mxu0
        %v1960 = vpop.f32.mrf.mxu0
        %v1961 = vadd.f32 0.0, %v1960
        %v1962 = vpop.f32.mrf.mxu0
        %1963 = vmatprep.mubr.bf16.mxu0 0
        %1964 = vmatmul.mubr.bf16.gmra.mxu0 %v1850
        %v1965 = vpop.f32.mrf.mxu0
        %v1966 = vadd.f32 0.0, %v1965
        %v1967 = vpop.f32.mrf.mxu0
        %v1968 = vpop.f32.mrf.mxu0
        %v1969 = vadd.f32 0.0, %v1968
        %v1970 = vpop.f32.mrf.mxu0
        %1971 = vmatprep.mubr.bf16.mxu0 0
        %1972 = vmatmul.mubr.bf16.gmra.mxu0 %v1853
        %v1973 = vpop.f32.mrf.mxu0
        %v1974 = vadd.f32 0.0, %v1973
        %v1975 = vpop.f32.mrf.mxu0
        %v1976 = vpop.f32.mrf.mxu0
        %v1977 = vadd.f32 0.0, %v1976
        %v1978 = vpop.f32.mrf.mxu0
        %1979 = vmatprep.mubr.bf16.mxu0 0
        %1980 = vmatmul.mubr.bf16.gmra.mxu0 %v1856
        %v1981 = vpop.f32.mrf.mxu0
        %v1982 = vadd.f32 0.0, %v1981
        %v1983 = vpop.f32.mrf.mxu0
        %v1984 = vpop.f32.mrf.mxu0
        %v1985 = vadd.f32 0.0, %v1984
        %v1986 = vpop.f32.mrf.mxu0
        %1987 = vmatprep.mubr.bf16.mxu0 0
        %1988 = vmatmul.mubr.bf16.gmra.mxu0 %v1859
        %v1989 = vpop.f32.mrf.mxu0
        %v1990 = vadd.f32 0.0, %v1989
        %v1991 = vpop.f32.mrf.mxu0
        %v1992 = vpop.f32.mrf.mxu0
        %v1993 = vadd.f32 0.0, %v1992
        %v1994 = vpop.f32.mrf.mxu0
        %1995 = vmatprep.mubr.bf16.mxu0 0
        %1996 = vmatmul.mubr.bf16.gmra.mxu0 %v1862
        %v1997 = vpop.f32.mrf.mxu0
        %v1998 = vadd.f32 0.0, %v1997
        %v1999 = vpop.f32.mrf.mxu0
        %v2000 = vpop.f32.mrf.mxu0
        %v2001 = vadd.f32 0.0, %v2000
        %v2002 = vpop.f32.mrf.mxu0
        %2003 = vmatprep.mubr.bf16.mxu0 0
        %2004 = vmatmul.mubr.bf16.gmra.mxu0 %v1865
        %v2005 = vpop.f32.mrf.mxu0
        %v2006 = vadd.f32 0.0, %v2005
        %v2007 = vpop.f32.mrf.mxu0
        %v2008 = vpop.f32.mrf.mxu0
        %v2009 = vadd.f32 0.0, %v2008
        %v2010 = vpop.f32.mrf.mxu0
        %2011 = vmatprep.mubr.bf16.mxu0 0
        %2012 = vmatmul.mubr.bf16.gmra.mxu0 %v1868
        %v2013 = vpop.f32.mrf.mxu0
        %v2014 = vadd.f32 0.0, %v2013
        %v2015 = vpop.f32.mrf.mxu0
        %v2016 = vpop.f32.mrf.mxu0
        %v2017 = vadd.f32 0.0, %v2016
        %v2018 = vpop.f32.mrf.mxu0
        %2019 = vmatprep.mubr.bf16.mxu0 0
        %2020 = vmatmul.mubr.bf16.gmra.mxu0 %v1871
        %v2021 = vpop.f32.mrf.mxu0
        %v2022 = vadd.f32 0.0, %v2021
        %v2023 = vpop.f32.mrf.mxu0
        %v2024 = vpop.f32.mrf.mxu0
        %v2025 = vadd.f32 0.0, %v2024
        %v2026 = vpop.f32.mrf.mxu0
        %2027 = vmatprep.mubr.bf16.mxu0 0
        %2028 = vmatmul.mubr.bf16.gmra.mxu0 %v1874
        %v2029 = vpop.f32.mrf.mxu0
        %v2030 = vadd.f32 0.0, %v2029
        %v2031 = vpop.f32.mrf.mxu0
        %v2032 = vpop.f32.mrf.mxu0
        %v2033 = vadd.f32 0.0, %v2032
        %v2034 = vpop.f32.mrf.mxu0
        %2035 = vmatprep.mubr.bf16.mxu0 0
        %2036 = vmatmul.mubr.bf16.gmra.mxu0 %v1877
        %v2037 = vpop.f32.mrf.mxu0
        %v2038 = vadd.f32 0.0, %v2037
        %v2039 = vpop.f32.mrf.mxu0
        %v2040 = vpop.f32.mrf.mxu0
        %v2041 = vadd.f32 0.0, %v2040
        %v2042 = vpop.f32.mrf.mxu0
        %2043 = vmatprep.mubr.bf16.mxu0 0
        %2044 = vmatmul.mubr.bf16.gmra.mxu0 %v1880
        %v2045 = vpop.f32.mrf.mxu0
        %v2046 = vadd.f32 0.0, %v2045
        %v2047 = vpop.f32.mrf.mxu0
        %v2048 = vpop.f32.mrf.mxu0
        %v2049 = vadd.f32 0.0, %v2048
        %v2050 = vpop.f32.mrf.mxu0
        %2051 = vmatprep.mubr.bf16.mxu0 0
        %2052 = vmatmul.mubr.bf16.gmra.mxu0 %v1883
        %v2053 = vpop.f32.mrf.mxu0
        %v2054 = vadd.f32 0.0, %v2053
        %v2055 = vpop.f32.mrf.mxu0
        %v2056 = vpop.f32.mrf.mxu0
        %v2057 = vadd.f32 0.0, %v2056
        %v2058 = vpop.f32.mrf.mxu0
        %2059 = vmatprep.mubr.bf16.mxu0 0
        %2060 = vmatmul.mubr.bf16.gmra.mxu0 %v1886
        %v2061 = vpop.f32.mrf.mxu0
        %v2062 = vadd.f32 0.0, %v2061
        %v2063 = vpop.f32.mrf.mxu0
        %v2064 = vpop.f32.mrf.mxu0
        %v2065 = vadd.f32 0.0, %v2064
        %v2066 = vpop.f32.mrf.mxu0
        %2067 = vdwg.mxu0
        %v2068 = vadd.f32 %v1621, %v1926
        %v2069 = vadd.f32 %v1622, %v1929
        %v2070 = vadd.f32 %v1623, %v1934
        %v2071 = vadd.f32 %v1624, %v1937
        %v2072 = vadd.f32 %v1625, %v1942
        %v2073 = vadd.f32 %v1626, %v1945
        %v2074 = vadd.f32 %v1627, %v1950
        %v2075 = vadd.f32 %v1628, %v1953
        %v2076 = vadd.f32 %v1629, %v1958
        %v2077 = vadd.f32 %v1630, %v1961
        %v2078 = vadd.f32 %v1631, %v1966
        %v2079 = vadd.f32 %v1632, %v1969
        %v2080 = vadd.f32 %v1633, %v1974
        %v2081 = vadd.f32 %v1634, %v1977
        %v2082 = vadd.f32 %v1635, %v1982
        %v2083 = vadd.f32 %v1636, %v1985
        %v2084 = vadd.f32 %v1637, %v1990
        %v2085 = vadd.f32 %v1638, %v1993
        %v2086 = vadd.f32 %v1639, %v1998
        %v2087 = vadd.f32 %v1640, %v2001
        %v2088 = vadd.f32 %v1641, %v2006
        %v2089 = vadd.f32 %v1642, %v2009
        %v2090 = vadd.f32 %v1643, %v2014
        %v2091 = vadd.f32 %v1644, %v2017
        %v2092 = vadd.f32 %v1645, %v2022
        %v2093 = vadd.f32 %v1646, %v2025
        %v2094 = vadd.f32 %v1647, %v2030
        %v2095 = vadd.f32 %v1648, %v2033
        %v2096 = vadd.f32 %v1649, %v2038
        %v2097 = vadd.f32 %v1650, %v2041
        %v2098 = vadd.f32 %v1651, %v2046
        %v2099 = vadd.f32 %v1652, %v2049
        %v2100 = vadd.f32 %v1653, %v2054
        %v2101 = vadd.f32 %v1654, %v2057
        %v2102 = vadd.f32 %v1655, %v2062
        %v2103 = vadd.f32 %v1656, %v2065
        %v2104 = vld [vmem:[%s168 + $0x8] sm:$0xc]
        %s2105 = scalar_lea.vmem %s1, 10
        %v2106 = vld [vmem:[%s2105] sm:$0x3]
        %v2108 = vunpack.c.l.b16 %v2104
        %v2109 = vpack.c.b16 %v1295, %v2108
        %vm2110 = vcmask 1045504
        %v2111 = vrot.slane %v2109, 2
        %v2112 = vrot.slane %v1332, 2
        %v2113 = vsel %vm2110, %v2111, %v2112
        %v2114 = vrot.slane %v1333, 2
        %v2115 = vsel %vm2110, %v2112, %v2114
        %v2116 = vrot.slane %v1334, 2
        %v2117 = vsel %vm2110, %v2114, %v2116
        %v2118 = vrot.slane %v1335, 2
        %v2119 = vsel %vm2110, %v2116, %v2118
        %v2120 = vrot.slane %v1336, 2
        %v2121 = vsel %vm2110, %v2118, %v2120
        %v2122 = vrot.slane %v1337, 2
        %v2123 = vsel %vm2110, %v2120, %v2122
        %v2124 = vrot.slane %v1338, 2
        %v2125 = vsel %vm2110, %v2122, %v2124
        %v2126 = vrot.slane %v1339, 2
        %v2127 = vsel %vm2110, %v2124, %v2126
        %v2128 = vrot.slane %v1340, 2
        %v2129 = vsel %vm2110, %v2126, %v2128
        %v2130 = vrot.slane %v1341, 2
        %v2131 = vsel %vm2110, %v2128, %v2130
        %v2132 = vrot.slane %v1342, 2
        %v2133 = vsel %vm2110, %v2130, %v2132
        %v2134 = vrot.slane %v1343, 2
        %v2135 = vsel %vm2110, %v2132, %v2134
        %v2136 = vrot.slane %v1344, 2
        %v2137 = vsel %vm2110, %v2134, %v2136
        %v2138 = vrot.slane %v1345, 2
        %v2139 = vsel %vm2110, %v2136, %v2138
        %v2140 = vrot.slane %v1346, 2
        %v2141 = vsel %vm2110, %v2138, %v2140
        %v2142 = vrot.slane %v1347, 2
        %v2143 = vsel %vm2110, %v2140, %v2142
        %v2144 = vrot.slane %v1348, 2
        %v2145 = vsel %vm2110, %v2142, %v2144
        %v2146 = vrot.slane %v1662, 2
        %v2147 = vsel %vm2110, %v2144, %v2146
        %v2149 = vsel %vm452, %v2113, 0
        %v2152 = vsel %vm452, %v2115, 0
        %v2155 = vsel %vm452, %v2117, 0
        %v2158 = vsel %vm452, %v2119, 0
        %v2161 = vsel %vm452, %v2121, 0
        %v2164 = vsel %vm452, %v2123, 0
        %v2167 = vsel %vm452, %v2125, 0
        %v2170 = vsel %vm452, %v2127, 0
        %v2173 = vsel %vm452, %v2129, 0
        %v2176 = vsel %vm452, %v2131, 0
        %v2179 = vsel %vm452, %v2133, 0
        %v2182 = vsel %vm452, %v2135, 0
        %v2185 = vsel %vm452, %v2137, 0
        %v2188 = vsel %vm452, %v2139, 0
        %v2191 = vsel %vm452, %v2141, 0
        %v2194 = vsel %vm452, %v2143, 0
        %v2197 = vsel %vm452, %v2145, 0
        %v2200 = vsel %vm452, %v2147, 0
        %v2203 = vsel %vm507, %v2106, 0
        %2205 = vmatprep.subr.bf16.mxu0 0
        %2206 = vmatpush1.bf16.msra.mxu0 0
        %2207 = vmatprep.subr.bf16.mxu0 0
        %2208 = vmatpush1.bf16.msra.mxu0 0
        %2209 = vmatprep.subr.bf16.mxu0 0
        %2210 = vmatpush1.bf16.msra.mxu0 0
        %2211 = vmatprep.subr.bf16.mxu0 0
        %2212 = vmatpush1.bf16.msra.mxu0 0
        %2213 = vmatprep.subr.bf16.mxu0 0
        %2214 = vmatpush1.bf16.msra.mxu0 0
        %2215 = vmatprep.subr.bf16.mxu0 0
        %2216 = vmatpush1.bf16.msra.mxu0 0
        %2217 = vmatprep.subr.bf16.mxu0 0
        %2218 = vmatpush1.bf16.msra.mxu0 0
        %2219 = vmatprep.subr.bf16.mxu0 0
        %2220 = vmatpush1.bf16.msra.mxu0 %v2203
        %2221 = vmatprep.subr.bf16.mxu0 0
        %2222 = vmatpush2.bf16.msra.mxu0 0
        %2223 = vmatprep.subr.bf16.mxu0 0
        %2224 = vmatpush2.bf16.msra.mxu0 0
        %2225 = vmatprep.subr.bf16.mxu0 0
        %2226 = vmatpush2.bf16.msra.mxu0 0
        %2227 = vmatprep.subr.bf16.mxu0 0
        %2228 = vmatpush2.bf16.msra.mxu0 0
        %2229 = vmatprep.subr.bf16.mxu0 0
        %2230 = vmatpush2.bf16.msra.mxu0 0
        %2231 = vmatprep.subr.bf16.mxu0 0
        %2232 = vmatpush2.bf16.msra.mxu0 0
        %2233 = vmatprep.subr.bf16.mxu0 0
        %2234 = vmatpush2.bf16.msra.mxu0 0
        %2235 = vmatprep.subr.bf16.mxu0 0
        %2236 = vmatpush2.bf16.msra.mxu0 0
        %2237 = vmatprep.mubr.bf16.mxu0 0
        %2238 = vmatmul.mubr.bf16.gmra.mxu0 %v2149
        %v2239 = vpop.f32.mrf.mxu0
        %v2240 = vadd.f32 0.0, %v2239
        %v2241 = vpop.f32.mrf.mxu0
        %v2242 = vpop.f32.mrf.mxu0
        %v2243 = vadd.f32 0.0, %v2242
        %v2244 = vpop.f32.mrf.mxu0
        %2245 = vmatprep.mubr.bf16.mxu0 0
        %2246 = vmatmul.mubr.bf16.gmra.mxu0 %v2152
        %v2247 = vpop.f32.mrf.mxu0
        %v2248 = vadd.f32 0.0, %v2247
        %v2249 = vpop.f32.mrf.mxu0
        %v2250 = vpop.f32.mrf.mxu0
        %v2251 = vadd.f32 0.0, %v2250
        %v2252 = vpop.f32.mrf.mxu0
        %2253 = vmatprep.mubr.bf16.mxu0 0
        %2254 = vmatmul.mubr.bf16.gmra.mxu0 %v2155
        %v2255 = vpop.f32.mrf.mxu0
        %v2256 = vadd.f32 0.0, %v2255
        %v2257 = vpop.f32.mrf.mxu0
        %v2258 = vpop.f32.mrf.mxu0
        %v2259 = vadd.f32 0.0, %v2258
        %v2260 = vpop.f32.mrf.mxu0
        %2261 = vmatprep.mubr.bf16.mxu0 0
        %2262 = vmatmul.mubr.bf16.gmra.mxu0 %v2158
        %v2263 = vpop.f32.mrf.mxu0
        %v2264 = vadd.f32 0.0, %v2263
        %v2265 = vpop.f32.mrf.mxu0
        %v2266 = vpop.f32.mrf.mxu0
        %v2267 = vadd.f32 0.0, %v2266
        %v2268 = vpop.f32.mrf.mxu0
        %2269 = vmatprep.mubr.bf16.mxu0 0
        %2270 = vmatmul.mubr.bf16.gmra.mxu0 %v2161
        %v2271 = vpop.f32.mrf.mxu0
        %v2272 = vadd.f32 0.0, %v2271
        %v2273 = vpop.f32.mrf.mxu0
        %v2274 = vpop.f32.mrf.mxu0
        %v2275 = vadd.f32 0.0, %v2274
        %v2276 = vpop.f32.mrf.mxu0
        %2277 = vmatprep.mubr.bf16.mxu0 0
        %2278 = vmatmul.mubr.bf16.gmra.mxu0 %v2164
        %v2279 = vpop.f32.mrf.mxu0
        %v2280 = vadd.f32 0.0, %v2279
        %v2281 = vpop.f32.mrf.mxu0
        %v2282 = vpop.f32.mrf.mxu0
        %v2283 = vadd.f32 0.0, %v2282
        %v2284 = vpop.f32.mrf.mxu0
        %2285 = vmatprep.mubr.bf16.mxu0 0
        %2286 = vmatmul.mubr.bf16.gmra.mxu0 %v2167
        %v2287 = vpop.f32.mrf.mxu0
        %v2288 = vadd.f32 0.0, %v2287
        %v2289 = vpop.f32.mrf.mxu0
        %v2290 = vpop.f32.mrf.mxu0
        %v2291 = vadd.f32 0.0, %v2290
        %v2292 = vpop.f32.mrf.mxu0
        %2293 = vmatprep.mubr.bf16.mxu0 0
        %2294 = vmatmul.mubr.bf16.gmra.mxu0 %v2170
        %v2295 = vpop.f32.mrf.mxu0
        %v2296 = vadd.f32 0.0, %v2295
        %v2297 = vpop.f32.mrf.mxu0
        %v2298 = vpop.f32.mrf.mxu0
        %v2299 = vadd.f32 0.0, %v2298
        %v2300 = vpop.f32.mrf.mxu0
        %2301 = vmatprep.mubr.bf16.mxu0 0
        %2302 = vmatmul.mubr.bf16.gmra.mxu0 %v2173
        %v2303 = vpop.f32.mrf.mxu0
        %v2304 = vadd.f32 0.0, %v2303
        %v2305 = vpop.f32.mrf.mxu0
        %v2306 = vpop.f32.mrf.mxu0
        %v2307 = vadd.f32 0.0, %v2306
        %v2308 = vpop.f32.mrf.mxu0
        %2309 = vmatprep.mubr.bf16.mxu0 0
        %2310 = vmatmul.mubr.bf16.gmra.mxu0 %v2176
        %v2311 = vpop.f32.mrf.mxu0
        %v2312 = vadd.f32 0.0, %v2311
        %v2313 = vpop.f32.mrf.mxu0
        %v2314 = vpop.f32.mrf.mxu0
        %v2315 = vadd.f32 0.0, %v2314
        %v2316 = vpop.f32.mrf.mxu0
        %2317 = vmatprep.mubr.bf16.mxu0 0
        %2318 = vmatmul.mubr.bf16.gmra.mxu0 %v2179
        %v2319 = vpop.f32.mrf.mxu0
        %v2320 = vadd.f32 0.0, %v2319
        %v2321 = vpop.f32.mrf.mxu0
        %v2322 = vpop.f32.mrf.mxu0
        %v2323 = vadd.f32 0.0, %v2322
        %v2324 = vpop.f32.mrf.mxu0
        %2325 = vmatprep.mubr.bf16.mxu0 0
        %2326 = vmatmul.mubr.bf16.gmra.mxu0 %v2182
        %v2327 = vpop.f32.mrf.mxu0
        %v2328 = vadd.f32 0.0, %v2327
        %v2329 = vpop.f32.mrf.mxu0
        %v2330 = vpop.f32.mrf.mxu0
        %v2331 = vadd.f32 0.0, %v2330
        %v2332 = vpop.f32.mrf.mxu0
        %2333 = vmatprep.mubr.bf16.mxu0 0
        %2334 = vmatmul.mubr.bf16.gmra.mxu0 %v2185
        %v2335 = vpop.f32.mrf.mxu0
        %v2336 = vadd.f32 0.0, %v2335
        %v2337 = vpop.f32.mrf.mxu0
        %v2338 = vpop.f32.mrf.mxu0
        %v2339 = vadd.f32 0.0, %v2338
        %v2340 = vpop.f32.mrf.mxu0
        %2341 = vmatprep.mubr.bf16.mxu0 0
        %2342 = vmatmul.mubr.bf16.gmra.mxu0 %v2188
        %v2343 = vpop.f32.mrf.mxu0
        %v2344 = vadd.f32 0.0, %v2343
        %v2345 = vpop.f32.mrf.mxu0
        %v2346 = vpop.f32.mrf.mxu0
        %v2347 = vadd.f32 0.0, %v2346
        %v2348 = vpop.f32.mrf.mxu0
        %2349 = vmatprep.mubr.bf16.mxu0 0
        %2350 = vmatmul.mubr.bf16.gmra.mxu0 %v2191
        %v2351 = vpop.f32.mrf.mxu0
        %v2352 = vadd.f32 0.0, %v2351
        %v2353 = vpop.f32.mrf.mxu0
        %v2354 = vpop.f32.mrf.mxu0
        %v2355 = vadd.f32 0.0, %v2354
        %v2356 = vpop.f32.mrf.mxu0
        %2357 = vmatprep.mubr.bf16.mxu0 0
        %2358 = vmatmul.mubr.bf16.gmra.mxu0 %v2194
        %v2359 = vpop.f32.mrf.mxu0
        %v2360 = vadd.f32 0.0, %v2359
        %v2361 = vpop.f32.mrf.mxu0
        %v2362 = vpop.f32.mrf.mxu0
        %v2363 = vadd.f32 0.0, %v2362
        %v2364 = vpop.f32.mrf.mxu0
        %2365 = vmatprep.mubr.bf16.mxu0 0
        %2366 = vmatmul.mubr.bf16.gmra.mxu0 %v2197
        %v2367 = vpop.f32.mrf.mxu0
        %v2368 = vadd.f32 0.0, %v2367
        %v2369 = vpop.f32.mrf.mxu0
        %v2370 = vpop.f32.mrf.mxu0
        %v2371 = vadd.f32 0.0, %v2370
        %v2372 = vpop.f32.mrf.mxu0
        %2373 = vmatprep.mubr.bf16.mxu0 0
        %2374 = vmatmul.mubr.bf16.gmra.mxu0 %v2200
        %v2375 = vpop.f32.mrf.mxu0
        %v2376 = vadd.f32 0.0, %v2375
        %v2377 = vpop.f32.mrf.mxu0
        %v2378 = vpop.f32.mrf.mxu0
        %v2379 = vadd.f32 0.0, %v2378
        %v2380 = vpop.f32.mrf.mxu0
        %2381 = vdwg.mxu0
        %v2382 = vadd.f32 %v2068, %v2240
        %v2383 = vadd.f32 %v2069, %v2243
        %v2384 = vadd.f32 %v2070, %v2248
        %v2385 = vadd.f32 %v2071, %v2251
        %v2386 = vadd.f32 %v2072, %v2256
        %v2387 = vadd.f32 %v2073, %v2259
        %v2388 = vadd.f32 %v2074, %v2264
        %v2389 = vadd.f32 %v2075, %v2267
        %v2390 = vadd.f32 %v2076, %v2272
        %v2391 = vadd.f32 %v2077, %v2275
        %v2392 = vadd.f32 %v2078, %v2280
        %v2393 = vadd.f32 %v2079, %v2283
        %v2394 = vadd.f32 %v2080, %v2288
        %v2395 = vadd.f32 %v2081, %v2291
        %v2396 = vadd.f32 %v2082, %v2296
        %v2397 = vadd.f32 %v2083, %v2299
        %v2398 = vadd.f32 %v2084, %v2304
        %v2399 = vadd.f32 %v2085, %v2307
        %v2400 = vadd.f32 %v2086, %v2312
        %v2401 = vadd.f32 %v2087, %v2315
        %v2402 = vadd.f32 %v2088, %v2320
        %v2403 = vadd.f32 %v2089, %v2323
        %v2404 = vadd.f32 %v2090, %v2328
        %v2405 = vadd.f32 %v2091, %v2331
        %v2406 = vadd.f32 %v2092, %v2336
        %v2407 = vadd.f32 %v2093, %v2339
        %v2408 = vadd.f32 %v2094, %v2344
        %v2409 = vadd.f32 %v2095, %v2347
        %v2410 = vadd.f32 %v2096, %v2352
        %v2411 = vadd.f32 %v2097, %v2355
        %v2412 = vadd.f32 %v2098, %v2360
        %v2413 = vadd.f32 %v2099, %v2363
        %v2414 = vadd.f32 %v2100, %v2368
        %v2415 = vadd.f32 %v2101, %v2371
        %v2416 = vadd.f32 %v2102, %v2376
        %v2417 = vadd.f32 %v2103, %v2379
        %v2418 = vld [vmem:[%s168 + $0x10] sm:$0xc]
        %v2419 = vld [vmem:[%s168 + $0x14] sm:$0xf]
        %v2420 = vld [vmem:[%s168 + $0x18] sm:$0xf]
        %v2421 = vld [vmem:[%s168 + $0x1c] sm:$0xf]
        %v2422 = vld [vmem:[%s168 + $0x20] sm:$0xf]
        %v2423 = vld [vmem:[%s168 + $0x24] sm:$0xf]
        %v2424 = vld [vmem:[%s168 + $0x28] sm:$0xf]
        %v2425 = vld [vmem:[%s168 + $0x2c] sm:$0xf]
        %v2426 = vld [vmem:[%s168 + $0x30] sm:$0xf]
        %v2427 = vld [vmem:[%s168 + $0x34] sm:$0xf]
        %v2428 = vld [vmem:[%s168 + $0x38] sm:$0xf]
        %v2429 = vld [vmem:[%s168 + $0x3c] sm:$0xf]
        %v2430 = vld [vmem:[%s168 + $0x40] sm:$0xf]
        %v2431 = vld [vmem:[%s168 + $0x44] sm:$0xf]
        %v2432 = vld [vmem:[%s168 + $0x48] sm:$0xf]
        %v2433 = vld [vmem:[%s168 + $0x4c] sm:$0xf]
        %v2434 = vld [vmem:[%s168 + $0x50] sm:$0xf]
        %v2435 = vld [vmem:[%s168 + $0x54] sm:$0xf]
        %v2436 = vld [vmem:[%s168 + $0x58] sm:$0xf]
        %v2437 = vld [vmem:[%s168 + $0x5c] sm:$0xf]
        %v2438 = vld [vmem:[%s168 + $0x60] sm:$0xf]
        %v2439 = vld [vmem:[%s168 + $0x64] sm:$0xf]
        %v2440 = vld [vmem:[%s168 + $0x68] sm:$0xf]
        %v2441 = vld [vmem:[%s168 + $0x6c] sm:$0xf]
        %v2442 = vld [vmem:[%s168 + $0x70] sm:$0xf]
        %v2443 = vld [vmem:[%s168 + $0x74] sm:$0xf]
        %v2444 = vld [vmem:[%s168 + $0x78] sm:$0xf]
        %v2445 = vld [vmem:[%s168 + $0x7c] sm:$0xf]
        %v2446 = vld [vmem:[%s168 + $0x80] sm:$0xf]
        %v2447 = vld [vmem:[%s168 + $0x84] sm:$0xf]
        %v2448 = vld [vmem:[%s168 + $0x88] sm:$0xf]
        %v2449 = vld [vmem:[%s168 + $0x8c] sm:$0xf]
        %v2450 = vld [vmem:[%s168 + $0x90] sm:$0xf]
        %v2451 = vld [vmem:[%s168 + $0x94] sm:$0xf]
        %v2452 = vld [vmem:[%s168 + $0x98] sm:$0xf]
        %v2453 = vld [vmem:[%s168 + $0x9c] sm:$0xf]
        %v2454 = vld [vmem:[%s168 + $0xa0] sm:$0x3]
        %s2455 = scalar_lea.vmem %s1, 12
        %v2456 = vld [vmem:[%s2455] sm:$0x3]
        %v2494 = vunpack.c.l.b16 %v2418
        %v2495 = vunpack.c.l.b16 %v2419
        %v2496 = vunpack.c.l.b16 %v2420
        %v2497 = vunpack.c.l.b16 %v2421
        %v2498 = vunpack.c.l.b16 %v2422
        %v2499 = vunpack.c.l.b16 %v2423
        %v2500 = vunpack.c.l.b16 %v2424
        %v2501 = vunpack.c.l.b16 %v2425
        %v2502 = vunpack.c.l.b16 %v2426
        %v2503 = vunpack.c.l.b16 %v2427
        %v2504 = vunpack.c.l.b16 %v2428
        %v2505 = vunpack.c.l.b16 %v2429
        %v2506 = vunpack.c.l.b16 %v2430
        %v2507 = vunpack.c.l.b16 %v2431
        %v2508 = vunpack.c.l.b16 %v2432
        %v2509 = vunpack.c.l.b16 %v2433
        %v2510 = vunpack.c.l.b16 %v2434
        %v2511 = vunpack.c.l.b16 %v2435
        %v2512 = vunpack.c.l.b16 %v2436
        %v2513 = vunpack.c.l.b16 %v2437
        %v2514 = vunpack.c.l.b16 %v2438
        %v2515 = vunpack.c.l.b16 %v2439
        %v2516 = vunpack.c.l.b16 %v2440
        %v2517 = vunpack.c.l.b16 %v2441
        %v2518 = vunpack.c.l.b16 %v2442
        %v2519 = vunpack.c.l.b16 %v2443
        %v2520 = vunpack.c.l.b16 %v2444
        %v2521 = vunpack.c.l.b16 %v2445
        %v2522 = vunpack.c.l.b16 %v2446
        %v2523 = vunpack.c.l.b16 %v2447
        %v2524 = vunpack.c.l.b16 %v2448
        %v2525 = vunpack.c.l.b16 %v2449
        %v2526 = vunpack.c.l.b16 %v2450
        %v2527 = vunpack.c.l.b16 %v2451
        %v2528 = vunpack.c.l.b16 %v2452
        %v2529 = vunpack.c.l.b16 %v2453
        %v2530 = vunpack.c.l.b16 %v2454
        %v2531 = vpack.c.b16 %v2495, %v2494
        %v2532 = vpack.c.b16 %v2497, %v2496
        %v2533 = vpack.c.b16 %v2499, %v2498
        %v2534 = vpack.c.b16 %v2501, %v2500
        %v2535 = vpack.c.b16 %v2503, %v2502
        %v2536 = vpack.c.b16 %v2505, %v2504
        %v2537 = vpack.c.b16 %v2507, %v2506
        %v2538 = vpack.c.b16 %v2509, %v2508
        %v2539 = vpack.c.b16 %v2511, %v2510
        %v2540 = vpack.c.b16 %v2513, %v2512
        %v2541 = vpack.c.b16 %v2515, %v2514
        %v2542 = vpack.c.b16 %v2517, %v2516
        %v2543 = vpack.c.b16 %v2519, %v2518
        %v2544 = vpack.c.b16 %v2521, %v2520
        %v2545 = vpack.c.b16 %v2523, %v2522
        %v2546 = vpack.c.b16 %v2525, %v2524
        %v2547 = vpack.c.b16 %v2527, %v2526
        %v2548 = vpack.c.b16 %v2529, %v2528
        %v2549 = vpack.c.b16 %v2530, %v2530
        %v2550 = vrot.slane %v2531, 2
        %v2551 = vrot.slane %v2532, 2
        %v2552 = vsel %vm2110, %v2550, %v2551
        %v2553 = vrot.slane %v2533, 2
        %v2554 = vsel %vm2110, %v2551, %v2553
        %v2555 = vrot.slane %v2534, 2
        %v2556 = vsel %vm2110, %v2553, %v2555
        %v2557 = vrot.slane %v2535, 2
        %v2558 = vsel %vm2110, %v2555, %v2557
        %v2559 = vrot.slane %v2536, 2
        %v2560 = vsel %vm2110, %v2557, %v2559
        %v2561 = vrot.slane %v2537, 2
        %v2562 = vsel %vm2110, %v2559, %v2561
        %v2563 = vrot.slane %v2538, 2
        %v2564 = vsel %vm2110, %v2561, %v2563
        %v2565 = vrot.slane %v2539, 2
        %v2566 = vsel %vm2110, %v2563, %v2565
        %v2567 = vrot.slane %v2540, 2
        %v2568 = vsel %vm2110, %v2565, %v2567
        %v2569 = vrot.slane %v2541, 2
        %v2570 = vsel %vm2110, %v2567, %v2569
        %v2571 = vrot.slane %v2542, 2
        %v2572 = vsel %vm2110, %v2569, %v2571
        %v2573 = vrot.slane %v2543, 2
        %v2574 = vsel %vm2110, %v2571, %v2573
        %v2575 = vrot.slane %v2544, 2
        %v2576 = vsel %vm2110, %v2573, %v2575
        %v2577 = vrot.slane %v2545, 2
        %v2578 = vsel %vm2110, %v2575, %v2577
        %v2579 = vrot.slane %v2546, 2
        %v2580 = vsel %vm2110, %v2577, %v2579
        %v2581 = vrot.slane %v2547, 2
        %v2582 = vsel %vm2110, %v2579, %v2581
        %v2583 = vrot.slane %v2548, 2
        %v2584 = vsel %vm2110, %v2581, %v2583
        %v2585 = vrot.slane %v2549, 2
        %v2586 = vsel %vm2110, %v2583, %v2585
        %v2588 = vsel %vm452, %v2552, 0
        %v2591 = vsel %vm452, %v2554, 0
        %v2594 = vsel %vm452, %v2556, 0
        %v2597 = vsel %vm452, %v2558, 0
        %v2600 = vsel %vm452, %v2560, 0
        %v2603 = vsel %vm452, %v2562, 0
        %v2606 = vsel %vm452, %v2564, 0
        %v2609 = vsel %vm452, %v2566, 0
        %v2612 = vsel %vm452, %v2568, 0
        %v2615 = vsel %vm452, %v2570, 0
        %v2618 = vsel %vm452, %v2572, 0
        %v2621 = vsel %vm452, %v2574, 0
        %v2624 = vsel %vm452, %v2576, 0
        %v2627 = vsel %vm452, %v2578, 0
        %v2630 = vsel %vm452, %v2580, 0
        %v2633 = vsel %vm452, %v2582, 0
        %v2636 = vsel %vm452, %v2584, 0
        %v2639 = vsel %vm452, %v2586, 0
        %v2642 = vsel %vm507, %v2456, 0
        %2644 = vmatprep.subr.bf16.mxu0 0
        %2645 = vmatpush1.bf16.msra.mxu0 0
        %2646 = vmatprep.subr.bf16.mxu0 0
        %2647 = vmatpush1.bf16.msra.mxu0 0
        %2648 = vmatprep.subr.bf16.mxu0 0
        %2649 = vmatpush1.bf16.msra.mxu0 0
        %2650 = vmatprep.subr.bf16.mxu0 0
        %2651 = vmatpush1.bf16.msra.mxu0 0
        %2652 = vmatprep.subr.bf16.mxu0 0
        %2653 = vmatpush1.bf16.msra.mxu0 0
        %2654 = vmatprep.subr.bf16.mxu0 0
        %2655 = vmatpush1.bf16.msra.mxu0 0
        %2656 = vmatprep.subr.bf16.mxu0 0
        %2657 = vmatpush1.bf16.msra.mxu0 0
        %2658 = vmatprep.subr.bf16.mxu0 0
        %2659 = vmatpush1.bf16.msra.mxu0 %v2642
        %2660 = vmatprep.subr.bf16.mxu0 0
        %2661 = vmatpush2.bf16.msra.mxu0 0
        %2662 = vmatprep.subr.bf16.mxu0 0
        %2663 = vmatpush2.bf16.msra.mxu0 0
        %2664 = vmatprep.subr.bf16.mxu0 0
        %2665 = vmatpush2.bf16.msra.mxu0 0
        %2666 = vmatprep.subr.bf16.mxu0 0
        %2667 = vmatpush2.bf16.msra.mxu0 0
        %2668 = vmatprep.subr.bf16.mxu0 0
        %2669 = vmatpush2.bf16.msra.mxu0 0
        %2670 = vmatprep.subr.bf16.mxu0 0
        %2671 = vmatpush2.bf16.msra.mxu0 0
        %2672 = vmatprep.subr.bf16.mxu0 0
        %2673 = vmatpush2.bf16.msra.mxu0 0
        %2674 = vmatprep.subr.bf16.mxu0 0
        %2675 = vmatpush2.bf16.msra.mxu0 0
        %2676 = vmatprep.mubr.bf16.mxu0 0
        %2677 = vmatmul.mubr.bf16.gmra.mxu0 %v2588
        %v2678 = vpop.f32.mrf.mxu0
        %v2679 = vadd.f32 0.0, %v2678
        %v2680 = vpop.f32.mrf.mxu0
        %v2681 = vpop.f32.mrf.mxu0
        %v2682 = vadd.f32 0.0, %v2681
        %v2683 = vpop.f32.mrf.mxu0
        %2684 = vmatprep.mubr.bf16.mxu0 0
        %2685 = vmatmul.mubr.bf16.gmra.mxu0 %v2591
        %v2686 = vpop.f32.mrf.mxu0
        %v2687 = vadd.f32 0.0, %v2686
        %v2688 = vpop.f32.mrf.mxu0
        %v2689 = vpop.f32.mrf.mxu0
        %v2690 = vadd.f32 0.0, %v2689
        %v2691 = vpop.f32.mrf.mxu0
        %2692 = vmatprep.mubr.bf16.mxu0 0
        %2693 = vmatmul.mubr.bf16.gmra.mxu0 %v2594
        %v2694 = vpop.f32.mrf.mxu0
        %v2695 = vadd.f32 0.0, %v2694
        %v2696 = vpop.f32.mrf.mxu0
        %v2697 = vpop.f32.mrf.mxu0
        %v2698 = vadd.f32 0.0, %v2697
        %v2699 = vpop.f32.mrf.mxu0
        %2700 = vmatprep.mubr.bf16.mxu0 0
        %2701 = vmatmul.mubr.bf16.gmra.mxu0 %v2597
        %v2702 = vpop.f32.mrf.mxu0
        %v2703 = vadd.f32 0.0, %v2702
        %v2704 = vpop.f32.mrf.mxu0
        %v2705 = vpop.f32.mrf.mxu0
        %v2706 = vadd.f32 0.0, %v2705
        %v2707 = vpop.f32.mrf.mxu0
        %2708 = vmatprep.mubr.bf16.mxu0 0
        %2709 = vmatmul.mubr.bf16.gmra.mxu0 %v2600
        %v2710 = vpop.f32.mrf.mxu0
        %v2711 = vadd.f32 0.0, %v2710
        %v2712 = vpop.f32.mrf.mxu0
        %v2713 = vpop.f32.mrf.mxu0
        %v2714 = vadd.f32 0.0, %v2713
        %v2715 = vpop.f32.mrf.mxu0
        %2716 = vmatprep.mubr.bf16.mxu0 0
        %2717 = vmatmul.mubr.bf16.gmra.mxu0 %v2603
        %v2718 = vpop.f32.mrf.mxu0
        %v2719 = vadd.f32 0.0, %v2718
        %v2720 = vpop.f32.mrf.mxu0
        %v2721 = vpop.f32.mrf.mxu0
        %v2722 = vadd.f32 0.0, %v2721
        %v2723 = vpop.f32.mrf.mxu0
        %2724 = vmatprep.mubr.bf16.mxu0 0
        %2725 = vmatmul.mubr.bf16.gmra.mxu0 %v2606
        %v2726 = vpop.f32.mrf.mxu0
        %v2727 = vadd.f32 0.0, %v2726
        %v2728 = vpop.f32.mrf.mxu0
        %v2729 = vpop.f32.mrf.mxu0
        %v2730 = vadd.f32 0.0, %v2729
        %v2731 = vpop.f32.mrf.mxu0
        %2732 = vmatprep.mubr.bf16.mxu0 0
        %2733 = vmatmul.mubr.bf16.gmra.mxu0 %v2609
        %v2734 = vpop.f32.mrf.mxu0
        %v2735 = vadd.f32 0.0, %v2734
        %v2736 = vpop.f32.mrf.mxu0
        %v2737 = vpop.f32.mrf.mxu0
        %v2738 = vadd.f32 0.0, %v2737
        %v2739 = vpop.f32.mrf.mxu0
        %2740 = vmatprep.mubr.bf16.mxu0 0
        %2741 = vmatmul.mubr.bf16.gmra.mxu0 %v2612
        %v2742 = vpop.f32.mrf.mxu0
        %v2743 = vadd.f32 0.0, %v2742
        %v2744 = vpop.f32.mrf.mxu0
        %v2745 = vpop.f32.mrf.mxu0
        %v2746 = vadd.f32 0.0, %v2745
        %v2747 = vpop.f32.mrf.mxu0
        %2748 = vmatprep.mubr.bf16.mxu0 0
        %2749 = vmatmul.mubr.bf16.gmra.mxu0 %v2615
        %v2750 = vpop.f32.mrf.mxu0
        %v2751 = vadd.f32 0.0, %v2750
        %v2752 = vpop.f32.mrf.mxu0
        %v2753 = vpop.f32.mrf.mxu0
        %v2754 = vadd.f32 0.0, %v2753
        %v2755 = vpop.f32.mrf.mxu0
        %2756 = vmatprep.mubr.bf16.mxu0 0
        %2757 = vmatmul.mubr.bf16.gmra.mxu0 %v2618
        %v2758 = vpop.f32.mrf.mxu0
        %v2759 = vadd.f32 0.0, %v2758
        %v2760 = vpop.f32.mrf.mxu0
        %v2761 = vpop.f32.mrf.mxu0
        %v2762 = vadd.f32 0.0, %v2761
        %v2763 = vpop.f32.mrf.mxu0
        %2764 = vmatprep.mubr.bf16.mxu0 0
        %2765 = vmatmul.mubr.bf16.gmra.mxu0 %v2621
        %v2766 = vpop.f32.mrf.mxu0
        %v2767 = vadd.f32 0.0, %v2766
        %v2768 = vpop.f32.mrf.mxu0
        %v2769 = vpop.f32.mrf.mxu0
        %v2770 = vadd.f32 0.0, %v2769
        %v2771 = vpop.f32.mrf.mxu0
        %2772 = vmatprep.mubr.bf16.mxu0 0
        %2773 = vmatmul.mubr.bf16.gmra.mxu0 %v2624
        %v2774 = vpop.f32.mrf.mxu0
        %v2775 = vadd.f32 0.0, %v2774
        %v2776 = vpop.f32.mrf.mxu0
        %v2777 = vpop.f32.mrf.mxu0
        %v2778 = vadd.f32 0.0, %v2777
        %v2779 = vpop.f32.mrf.mxu0
        %2780 = vmatprep.mubr.bf16.mxu0 0
        %2781 = vmatmul.mubr.bf16.gmra.mxu0 %v2627
        %v2782 = vpop.f32.mrf.mxu0
        %v2783 = vadd.f32 0.0, %v2782
        %v2784 = vpop.f32.mrf.mxu0
        %v2785 = vpop.f32.mrf.mxu0
        %v2786 = vadd.f32 0.0, %v2785
        %v2787 = vpop.f32.mrf.mxu0
        %2788 = vmatprep.mubr.bf16.mxu0 0
        %2789 = vmatmul.mubr.bf16.gmra.mxu0 %v2630
        %v2790 = vpop.f32.mrf.mxu0
        %v2791 = vadd.f32 0.0, %v2790
        %v2792 = vpop.f32.mrf.mxu0
        %v2793 = vpop.f32.mrf.mxu0
        %v2794 = vadd.f32 0.0, %v2793
        %v2795 = vpop.f32.mrf.mxu0
        %2796 = vmatprep.mubr.bf16.mxu0 0
        %2797 = vmatmul.mubr.bf16.gmra.mxu0 %v2633
        %v2798 = vpop.f32.mrf.mxu0
        %v2799 = vadd.f32 0.0, %v2798
        %v2800 = vpop.f32.mrf.mxu0
        %v2801 = vpop.f32.mrf.mxu0
        %v2802 = vadd.f32 0.0, %v2801
        %v2803 = vpop.f32.mrf.mxu0
        %2804 = vmatprep.mubr.bf16.mxu0 0
        %2805 = vmatmul.mubr.bf16.gmra.mxu0 %v2636
        %v2806 = vpop.f32.mrf.mxu0
        %v2807 = vadd.f32 0.0, %v2806
        %v2808 = vpop.f32.mrf.mxu0
        %v2809 = vpop.f32.mrf.mxu0
        %v2810 = vadd.f32 0.0, %v2809
        %v2811 = vpop.f32.mrf.mxu0
        %2812 = vmatprep.mubr.bf16.mxu0 0
        %2813 = vmatmul.mubr.bf16.gmra.mxu0 %v2639
        %v2814 = vpop.f32.mrf.mxu0
        %v2815 = vadd.f32 0.0, %v2814
        %v2816 = vpop.f32.mrf.mxu0
        %v2817 = vpop.f32.mrf.mxu0
        %v2818 = vadd.f32 0.0, %v2817
        %v2819 = vpop.f32.mrf.mxu0
        %2820 = vdwg.mxu0
        %v2821 = vadd.f32 %v2382, %v2679
        %v2822 = vadd.f32 %v2383, %v2682
        %v2823 = vadd.f32 %v2384, %v2687
        %v2824 = vadd.f32 %v2385, %v2690
        %v2825 = vadd.f32 %v2386, %v2695
        %v2826 = vadd.f32 %v2387, %v2698
        %v2827 = vadd.f32 %v2388, %v2703
        %v2828 = vadd.f32 %v2389, %v2706
        %v2829 = vadd.f32 %v2390, %v2711
        %v2830 = vadd.f32 %v2391, %v2714
        %v2831 = vadd.f32 %v2392, %v2719
        %v2832 = vadd.f32 %v2393, %v2722
        %v2833 = vadd.f32 %v2394, %v2727
        %v2834 = vadd.f32 %v2395, %v2730
        %v2835 = vadd.f32 %v2396, %v2735
        %v2836 = vadd.f32 %v2397, %v2738
        %v2837 = vadd.f32 %v2398, %v2743
        %v2838 = vadd.f32 %v2399, %v2746
        %v2839 = vadd.f32 %v2400, %v2751
        %v2840 = vadd.f32 %v2401, %v2754
        %v2841 = vadd.f32 %v2402, %v2759
        %v2842 = vadd.f32 %v2403, %v2762
        %v2843 = vadd.f32 %v2404, %v2767
        %v2844 = vadd.f32 %v2405, %v2770
        %v2845 = vadd.f32 %v2406, %v2775
        %v2846 = vadd.f32 %v2407, %v2778
        %v2847 = vadd.f32 %v2408, %v2783
        %v2848 = vadd.f32 %v2409, %v2786
        %v2849 = vadd.f32 %v2410, %v2791
        %v2850 = vadd.f32 %v2411, %v2794
        %v2851 = vadd.f32 %v2412, %v2799
        %v2852 = vadd.f32 %v2413, %v2802
        %v2853 = vadd.f32 %v2414, %v2807
        %v2854 = vadd.f32 %v2415, %v2810
        %v2855 = vadd.f32 %v2416, %v2815
        %v2856 = vadd.f32 %v2417, %v2818
        %v2857 = vld [vmem:[%s168 + $0xa0] sm:$0x7]
        %s2858 = scalar_lea.vmem %s1, 14
        %v2859 = vld [vmem:[%s2858] sm:$0x3]
        %v2861 = vunpack.c.l.b16 %v2857
        %v2862 = vpack.c.b16 %v2861, %v2861
        %vm2863 = vsmask.f32 5376
        %v2865 = vshrl.u32 %v2531, 16
        %v2867 = vrot.slane %v2865, 2
        %v2868 = vshll.u32 %v2531, 16
        %v2870 = vrot.slane %v2868, 3
        %v2871 = vor.u32 %v2867, %v2870
        %v2873 = vshrl.u32 %v2532, 16
        %v2875 = vrot.slane %v2873, 2
        %v2876 = vshll.u32 %v2532, 16
        %v2878 = vrot.slane %v2876, 3
        %v2879 = vor.u32 %v2875, %v2878
        %v2880 = vsel %vm2863, %v2871, %v2879
        %v2882 = vshrl.u32 %v2533, 16
        %v2884 = vrot.slane %v2882, 2
        %v2885 = vshll.u32 %v2533, 16
        %v2887 = vrot.slane %v2885, 3
        %v2888 = vor.u32 %v2884, %v2887
        %v2889 = vsel %vm2863, %v2879, %v2888
        %v2891 = vshrl.u32 %v2534, 16
        %v2893 = vrot.slane %v2891, 2
        %v2894 = vshll.u32 %v2534, 16
        %v2896 = vrot.slane %v2894, 3
        %v2897 = vor.u32 %v2893, %v2896
        %v2898 = vsel %vm2863, %v2888, %v2897
        %v2900 = vshrl.u32 %v2535, 16
        %v2902 = vrot.slane %v2900, 2
        %v2903 = vshll.u32 %v2535, 16
        %v2905 = vrot.slane %v2903, 3
        %v2906 = vor.u32 %v2902, %v2905
        %v2907 = vsel %vm2863, %v2897, %v2906
        %v2909 = vshrl.u32 %v2536, 16
        %v2911 = vrot.slane %v2909, 2
        %v2912 = vshll.u32 %v2536, 16
        %v2914 = vrot.slane %v2912, 3
        %v2915 = vor.u32 %v2911, %v2914
        %v2916 = vsel %vm2863, %v2906, %v2915
        %v2918 = vshrl.u32 %v2537, 16
        %v2920 = vrot.slane %v2918, 2
        %v2921 = vshll.u32 %v2537, 16
        %v2923 = vrot.slane %v2921, 3
        %v2924 = vor.u32 %v2920, %v2923
        %v2925 = vsel %vm2863, %v2915, %v2924
        %v2927 = vshrl.u32 %v2538, 16
        %v2929 = vrot.slane %v2927, 2
        %v2930 = vshll.u32 %v2538, 16
        %v2932 = vrot.slane %v2930, 3
        %v2933 = vor.u32 %v2929, %v2932
        %v2934 = vsel %vm2863, %v2924, %v2933
        %v2936 = vshrl.u32 %v2539, 16
        %v2938 = vrot.slane %v2936, 2
        %v2939 = vshll.u32 %v2539, 16
        %v2941 = vrot.slane %v2939, 3
        %v2942 = vor.u32 %v2938, %v2941
        %v2943 = vsel %vm2863, %v2933, %v2942
        %v2945 = vshrl.u32 %v2540, 16
        %v2947 = vrot.slane %v2945, 2
        %v2948 = vshll.u32 %v2540, 16
        %v2950 = vrot.slane %v2948, 3
        %v2951 = vor.u32 %v2947, %v2950
        %v2952 = vsel %vm2863, %v2942, %v2951
        %v2954 = vshrl.u32 %v2541, 16
        %v2956 = vrot.slane %v2954, 2
        %v2957 = vshll.u32 %v2541, 16
        %v2959 = vrot.slane %v2957, 3
        %v2960 = vor.u32 %v2956, %v2959
        %v2961 = vsel %vm2863, %v2951, %v2960
        %v2963 = vshrl.u32 %v2542, 16
        %v2965 = vrot.slane %v2963, 2
        %v2966 = vshll.u32 %v2542, 16
        %v2968 = vrot.slane %v2966, 3
        %v2969 = vor.u32 %v2965, %v2968
        %v2970 = vsel %vm2863, %v2960, %v2969
        %v2972 = vshrl.u32 %v2543, 16
        %v2974 = vrot.slane %v2972, 2
        %v2975 = vshll.u32 %v2543, 16
        %v2977 = vrot.slane %v2975, 3
        %v2978 = vor.u32 %v2974, %v2977
        %v2979 = vsel %vm2863, %v2969, %v2978
        %v2981 = vshrl.u32 %v2544, 16
        %v2983 = vrot.slane %v2981, 2
        %v2984 = vshll.u32 %v2544, 16
        %v2986 = vrot.slane %v2984, 3
        %v2987 = vor.u32 %v2983, %v2986
        %v2988 = vsel %vm2863, %v2978, %v2987
        %v2990 = vshrl.u32 %v2545, 16
        %v2992 = vrot.slane %v2990, 2
        %v2993 = vshll.u32 %v2545, 16
        %v2995 = vrot.slane %v2993, 3
        %v2996 = vor.u32 %v2992, %v2995
        %v2997 = vsel %vm2863, %v2987, %v2996
        %v2999 = vshrl.u32 %v2546, 16
        %v3001 = vrot.slane %v2999, 2
        %v3002 = vshll.u32 %v2546, 16
        %v3004 = vrot.slane %v3002, 3
        %v3005 = vor.u32 %v3001, %v3004
        %v3006 = vsel %vm2863, %v2996, %v3005
        %v3008 = vshrl.u32 %v2547, 16
        %v3010 = vrot.slane %v3008, 2
        %v3011 = vshll.u32 %v2547, 16
        %v3013 = vrot.slane %v3011, 3
        %v3014 = vor.u32 %v3010, %v3013
        %v3015 = vsel %vm2863, %v3005, %v3014
        %v3017 = vshrl.u32 %v2548, 16
        %v3019 = vrot.slane %v3017, 2
        %v3020 = vshll.u32 %v2548, 16
        %v3022 = vrot.slane %v3020, 3
        %v3023 = vor.u32 %v3019, %v3022
        %v3024 = vsel %vm2863, %v3014, %v3023
        %v3026 = vshrl.u32 %v2862, 16
        %v3028 = vrot.slane %v3026, 2
        %v3029 = vshll.u32 %v2862, 16
        %v3031 = vrot.slane %v3029, 3
        %v3032 = vor.u32 %v3028, %v3031
        %v3033 = vsel %vm2863, %v3023, %v3032
        %v3035 = vsel %vm452, %v2880, 0
        %v3038 = vsel %vm452, %v2889, 0
        %v3041 = vsel %vm452, %v2898, 0
        %v3044 = vsel %vm452, %v2907, 0
        %v3047 = vsel %vm452, %v2916, 0
        %v3050 = vsel %vm452, %v2925, 0
        %v3053 = vsel %vm452, %v2934, 0
        %v3056 = vsel %vm452, %v2943, 0
        %v3059 = vsel %vm452, %v2952, 0
        %v3062 = vsel %vm452, %v2961, 0
        %v3065 = vsel %vm452, %v2970, 0
        %v3068 = vsel %vm452, %v2979, 0
        %v3071 = vsel %vm452, %v2988, 0
        %v3074 = vsel %vm452, %v2997, 0
        %v3077 = vsel %vm452, %v3006, 0
        %v3080 = vsel %vm452, %v3015, 0
        %v3083 = vsel %vm452, %v3024, 0
        %v3086 = vsel %vm452, %v3033, 0
        %v3089 = vsel %vm507, %v2859, 0
        %3091 = vmatprep.subr.bf16.mxu0 0
        %3092 = vmatpush1.bf16.msra.mxu0 0
        %3093 = vmatprep.subr.bf16.mxu0 0
        %3094 = vmatpush1.bf16.msra.mxu0 0
        %3095 = vmatprep.subr.bf16.mxu0 0
        %3096 = vmatpush1.bf16.msra.mxu0 0
        %3097 = vmatprep.subr.bf16.mxu0 0
        %3098 = vmatpush1.bf16.msra.mxu0 0
        %3099 = vmatprep.subr.bf16.mxu0 0
        %3100 = vmatpush1.bf16.msra.mxu0 0
        %3101 = vmatprep.subr.bf16.mxu0 0
        %3102 = vmatpush1.bf16.msra.mxu0 0
        %3103 = vmatprep.subr.bf16.mxu0 0
        %3104 = vmatpush1.bf16.msra.mxu0 0
        %3105 = vmatprep.subr.bf16.mxu0 0
        %3106 = vmatpush1.bf16.msra.mxu0 %v3089
        %3107 = vmatprep.subr.bf16.mxu0 0
        %3108 = vmatpush2.bf16.msra.mxu0 0
        %3109 = vmatprep.subr.bf16.mxu0 0
        %3110 = vmatpush2.bf16.msra.mxu0 0
        %3111 = vmatprep.subr.bf16.mxu0 0
        %3112 = vmatpush2.bf16.msra.mxu0 0
        %3113 = vmatprep.subr.bf16.mxu0 0
        %3114 = vmatpush2.bf16.msra.mxu0 0
        %3115 = vmatprep.subr.bf16.mxu0 0
        %3116 = vmatpush2.bf16.msra.mxu0 0
        %3117 = vmatprep.subr.bf16.mxu0 0
        %3118 = vmatpush2.bf16.msra.mxu0 0
        %3119 = vmatprep.subr.bf16.mxu0 0
        %3120 = vmatpush2.bf16.msra.mxu0 0
        %3121 = vmatprep.subr.bf16.mxu0 0
        %3122 = vmatpush2.bf16.msra.mxu0 0
        %3123 = vmatprep.mubr.bf16.mxu0 0
        %3124 = vmatmul.mubr.bf16.gmra.mxu0 %v3035
        %v3125 = vpop.f32.mrf.mxu0
        %v3126 = vadd.f32 0.0, %v3125
        %v3127 = vpop.f32.mrf.mxu0
        %v3128 = vpop.f32.mrf.mxu0
        %v3129 = vadd.f32 0.0, %v3128
        %v3130 = vpop.f32.mrf.mxu0
        %3131 = vmatprep.mubr.bf16.mxu0 0
        %3132 = vmatmul.mubr.bf16.gmra.mxu0 %v3038
        %v3133 = vpop.f32.mrf.mxu0
        %v3134 = vadd.f32 0.0, %v3133
        %v3135 = vpop.f32.mrf.mxu0
        %v3136 = vpop.f32.mrf.mxu0
        %v3137 = vadd.f32 0.0, %v3136
        %v3138 = vpop.f32.mrf.mxu0
        %3139 = vmatprep.mubr.bf16.mxu0 0
        %3140 = vmatmul.mubr.bf16.gmra.mxu0 %v3041
        %v3141 = vpop.f32.mrf.mxu0
        %v3142 = vadd.f32 0.0, %v3141
        %v3143 = vpop.f32.mrf.mxu0
        %v3144 = vpop.f32.mrf.mxu0
        %v3145 = vadd.f32 0.0, %v3144
        %v3146 = vpop.f32.mrf.mxu0
        %3147 = vmatprep.mubr.bf16.mxu0 0
        %3148 = vmatmul.mubr.bf16.gmra.mxu0 %v3044
        %v3149 = vpop.f32.mrf.mxu0
        %v3150 = vadd.f32 0.0, %v3149
        %v3151 = vpop.f32.mrf.mxu0
        %v3152 = vpop.f32.mrf.mxu0
        %v3153 = vadd.f32 0.0, %v3152
        %v3154 = vpop.f32.mrf.mxu0
        %3155 = vmatprep.mubr.bf16.mxu0 0
        %3156 = vmatmul.mubr.bf16.gmra.mxu0 %v3047
        %v3157 = vpop.f32.mrf.mxu0
        %v3158 = vadd.f32 0.0, %v3157
        %v3159 = vpop.f32.mrf.mxu0
        %v3160 = vpop.f32.mrf.mxu0
        %v3161 = vadd.f32 0.0, %v3160
        %v3162 = vpop.f32.mrf.mxu0
        %3163 = vmatprep.mubr.bf16.mxu0 0
        %3164 = vmatmul.mubr.bf16.gmra.mxu0 %v3050
        %v3165 = vpop.f32.mrf.mxu0
        %v3166 = vadd.f32 0.0, %v3165
        %v3167 = vpop.f32.mrf.mxu0
        %v3168 = vpop.f32.mrf.mxu0
        %v3169 = vadd.f32 0.0, %v3168
        %v3170 = vpop.f32.mrf.mxu0
        %3171 = vmatprep.mubr.bf16.mxu0 0
        %3172 = vmatmul.mubr.bf16.gmra.mxu0 %v3053
        %v3173 = vpop.f32.mrf.mxu0
        %v3174 = vadd.f32 0.0, %v3173
        %v3175 = vpop.f32.mrf.mxu0
        %v3176 = vpop.f32.mrf.mxu0
        %v3177 = vadd.f32 0.0, %v3176
        %v3178 = vpop.f32.mrf.mxu0
        %3179 = vmatprep.mubr.bf16.mxu0 0
        %3180 = vmatmul.mubr.bf16.gmra.mxu0 %v3056
        %v3181 = vpop.f32.mrf.mxu0
        %v3182 = vadd.f32 0.0, %v3181
        %v3183 = vpop.f32.mrf.mxu0
        %v3184 = vpop.f32.mrf.mxu0
        %v3185 = vadd.f32 0.0, %v3184
        %v3186 = vpop.f32.mrf.mxu0
        %3187 = vmatprep.mubr.bf16.mxu0 0
        %3188 = vmatmul.mubr.bf16.gmra.mxu0 %v3059
        %v3189 = vpop.f32.mrf.mxu0
        %v3190 = vadd.f32 0.0, %v3189
        %v3191 = vpop.f32.mrf.mxu0
        %v3192 = vpop.f32.mrf.mxu0
        %v3193 = vadd.f32 0.0, %v3192
        %v3194 = vpop.f32.mrf.mxu0
        %3195 = vmatprep.mubr.bf16.mxu0 0
        %3196 = vmatmul.mubr.bf16.gmra.mxu0 %v3062
        %v3197 = vpop.f32.mrf.mxu0
        %v3198 = vadd.f32 0.0, %v3197
        %v3199 = vpop.f32.mrf.mxu0
        %v3200 = vpop.f32.mrf.mxu0
        %v3201 = vadd.f32 0.0, %v3200
        %v3202 = vpop.f32.mrf.mxu0
        %3203 = vmatprep.mubr.bf16.mxu0 0
        %3204 = vmatmul.mubr.bf16.gmra.mxu0 %v3065
        %v3205 = vpop.f32.mrf.mxu0
        %v3206 = vadd.f32 0.0, %v3205
        %v3207 = vpop.f32.mrf.mxu0
        %v3208 = vpop.f32.mrf.mxu0
        %v3209 = vadd.f32 0.0, %v3208
        %v3210 = vpop.f32.mrf.mxu0
        %3211 = vmatprep.mubr.bf16.mxu0 0
        %3212 = vmatmul.mubr.bf16.gmra.mxu0 %v3068
        %v3213 = vpop.f32.mrf.mxu0
        %v3214 = vadd.f32 0.0, %v3213
        %v3215 = vpop.f32.mrf.mxu0
        %v3216 = vpop.f32.mrf.mxu0
        %v3217 = vadd.f32 0.0, %v3216
        %v3218 = vpop.f32.mrf.mxu0
        %3219 = vmatprep.mubr.bf16.mxu0 0
        %3220 = vmatmul.mubr.bf16.gmra.mxu0 %v3071
        %v3221 = vpop.f32.mrf.mxu0
        %v3222 = vadd.f32 0.0, %v3221
        %v3223 = vpop.f32.mrf.mxu0
        %v3224 = vpop.f32.mrf.mxu0
        %v3225 = vadd.f32 0.0, %v3224
        %v3226 = vpop.f32.mrf.mxu0
        %3227 = vmatprep.mubr.bf16.mxu0 0
        %3228 = vmatmul.mubr.bf16.gmra.mxu0 %v3074
        %v3229 = vpop.f32.mrf.mxu0
        %v3230 = vadd.f32 0.0, %v3229
        %v3231 = vpop.f32.mrf.mxu0
        %v3232 = vpop.f32.mrf.mxu0
        %v3233 = vadd.f32 0.0, %v3232
        %v3234 = vpop.f32.mrf.mxu0
        %3235 = vmatprep.mubr.bf16.mxu0 0
        %3236 = vmatmul.mubr.bf16.gmra.mxu0 %v3077
        %v3237 = vpop.f32.mrf.mxu0
        %v3238 = vadd.f32 0.0, %v3237
        %v3239 = vpop.f32.mrf.mxu0
        %v3240 = vpop.f32.mrf.mxu0
        %v3241 = vadd.f32 0.0, %v3240
        %v3242 = vpop.f32.mrf.mxu0
        %3243 = vmatprep.mubr.bf16.mxu0 0
        %3244 = vmatmul.mubr.bf16.gmra.mxu0 %v3080
        %v3245 = vpop.f32.mrf.mxu0
        %v3246 = vadd.f32 0.0, %v3245
        %v3247 = vpop.f32.mrf.mxu0
        %v3248 = vpop.f32.mrf.mxu0
        %v3249 = vadd.f32 0.0, %v3248
        %v3250 = vpop.f32.mrf.mxu0
        %3251 = vmatprep.mubr.bf16.mxu0 0
        %3252 = vmatmul.mubr.bf16.gmra.mxu0 %v3083
        %v3253 = vpop.f32.mrf.mxu0
        %v3254 = vadd.f32 0.0, %v3253
        %v3255 = vpop.f32.mrf.mxu0
        %v3256 = vpop.f32.mrf.mxu0
        %v3257 = vadd.f32 0.0, %v3256
        %v3258 = vpop.f32.mrf.mxu0
        %3259 = vmatprep.mubr.bf16.mxu0 0
        %3260 = vmatmul.mubr.bf16.gmra.mxu0 %v3086
        %v3261 = vpop.f32.mrf.mxu0
        %v3262 = vadd.f32 0.0, %v3261
        %v3263 = vpop.f32.mrf.mxu0
        %v3264 = vpop.f32.mrf.mxu0
        %v3265 = vadd.f32 0.0, %v3264
        %v3266 = vpop.f32.mrf.mxu0
        %3267 = vdwg.mxu0
        %v3268 = vadd.f32 %v2821, %v3126
        %v3269 = vadd.f32 %v2822, %v3129
        %v3270 = vadd.f32 %v2823, %v3134
        %v3271 = vadd.f32 %v2824, %v3137
        %v3272 = vadd.f32 %v2825, %v3142
        %v3273 = vadd.f32 %v2826, %v3145
        %v3274 = vadd.f32 %v2827, %v3150
        %v3275 = vadd.f32 %v2828, %v3153
        %v3276 = vadd.f32 %v2829, %v3158
        %v3277 = vadd.f32 %v2830, %v3161
        %v3278 = vadd.f32 %v2831, %v3166
        %v3279 = vadd.f32 %v2832, %v3169
        %v3280 = vadd.f32 %v2833, %v3174
        %v3281 = vadd.f32 %v2834, %v3177
        %v3282 = vadd.f32 %v2835, %v3182
        %v3283 = vadd.f32 %v2836, %v3185
        %v3284 = vadd.f32 %v2837, %v3190
        %v3285 = vadd.f32 %v2838, %v3193
        %v3286 = vadd.f32 %v2839, %v3198
        %v3287 = vadd.f32 %v2840, %v3201
        %v3288 = vadd.f32 %v2841, %v3206
        %v3289 = vadd.f32 %v2842, %v3209
        %v3290 = vadd.f32 %v2843, %v3214
        %v3291 = vadd.f32 %v2844, %v3217
        %v3292 = vadd.f32 %v2845, %v3222
        %v3293 = vadd.f32 %v2846, %v3225
        %v3294 = vadd.f32 %v2847, %v3230
        %v3295 = vadd.f32 %v2848, %v3233
        %v3296 = vadd.f32 %v2849, %v3238
        %v3297 = vadd.f32 %v2850, %v3241
        %v3298 = vadd.f32 %v2851, %v3246
        %v3299 = vadd.f32 %v2852, %v3249
        %v3300 = vadd.f32 %v2853, %v3254
        %v3301 = vadd.f32 %v2854, %v3257
        %v3302 = vadd.f32 %v2855, %v3262
        %v3303 = vadd.f32 %v2856, %v3265
        %v3304 = vld [vmem:[%s168 + $0x10] sm:$0x8]
        %s3305 = scalar_lea.vmem %s1, 16
        %v3306 = vld [vmem:[%s3305] sm:$0x3]
        %v3308 = vunpack.c.l.b16 %v3304
        %v3309 = vpack.c.b16 %v2495, %v3308
        %vm3310 = vcmask 1044480
        %v3311 = vrot.slane %v3309, 3
        %v3312 = vrot.slane %v2532, 3
        %v3313 = vsel %vm3310, %v3311, %v3312
        %v3314 = vrot.slane %v2533, 3
        %v3315 = vsel %vm3310, %v3312, %v3314
        %v3316 = vrot.slane %v2534, 3
        %v3317 = vsel %vm3310, %v3314, %v3316
        %v3318 = vrot.slane %v2535, 3
        %v3319 = vsel %vm3310, %v3316, %v3318
        %v3320 = vrot.slane %v2536, 3
        %v3321 = vsel %vm3310, %v3318, %v3320
        %v3322 = vrot.slane %v2537, 3
        %v3323 = vsel %vm3310, %v3320, %v3322
        %v3324 = vrot.slane %v2538, 3
        %v3325 = vsel %vm3310, %v3322, %v3324
        %v3326 = vrot.slane %v2539, 3
        %v3327 = vsel %vm3310, %v3324, %v3326
        %v3328 = vrot.slane %v2540, 3
        %v3329 = vsel %vm3310, %v3326, %v3328
        %v3330 = vrot.slane %v2541, 3
        %v3331 = vsel %vm3310, %v3328, %v3330
        %v3332 = vrot.slane %v2542, 3
        %v3333 = vsel %vm3310, %v3330, %v3332
        %v3334 = vrot.slane %v2543, 3
        %v3335 = vsel %vm3310, %v3332, %v3334
        %v3336 = vrot.slane %v2544, 3
        %v3337 = vsel %vm3310, %v3334, %v3336
        %v3338 = vrot.slane %v2545, 3
        %v3339 = vsel %vm3310, %v3336, %v3338
        %v3340 = vrot.slane %v2546, 3
        %v3341 = vsel %vm3310, %v3338, %v3340
        %v3342 = vrot.slane %v2547, 3
        %v3343 = vsel %vm3310, %v3340, %v3342
        %v3344 = vrot.slane %v2548, 3
        %v3345 = vsel %vm3310, %v3342, %v3344
        %v3346 = vrot.slane %v2862, 3
        %v3347 = vsel %vm3310, %v3344, %v3346
        %v3349 = vsel %vm452, %v3313, 0
        %v3352 = vsel %vm452, %v3315, 0
        %v3355 = vsel %vm452, %v3317, 0
        %v3358 = vsel %vm452, %v3319, 0
        %v3361 = vsel %vm452, %v3321, 0
        %v3364 = vsel %vm452, %v3323, 0
        %v3367 = vsel %vm452, %v3325, 0
        %v3370 = vsel %vm452, %v3327, 0
        %v3373 = vsel %vm452, %v3329, 0
        %v3376 = vsel %vm452, %v3331, 0
        %v3379 = vsel %vm452, %v3333, 0
        %v3382 = vsel %vm452, %v3335, 0
        %v3385 = vsel %vm452, %v3337, 0
        %v3388 = vsel %vm452, %v3339, 0
        %v3391 = vsel %vm452, %v3341, 0
        %v3394 = vsel %vm452, %v3343, 0
        %v3397 = vsel %vm452, %v3345, 0
        %v3400 = vsel %vm452, %v3347, 0
        %v3403 = vsel %vm507, %v3306, 0
        %3405 = vmatprep.subr.bf16.mxu0 0
        %3406 = vmatpush1.bf16.msra.mxu0 0
        %3407 = vmatprep.subr.bf16.mxu0 0
        %3408 = vmatpush1.bf16.msra.mxu0 0
        %3409 = vmatprep.subr.bf16.mxu0 0
        %3410 = vmatpush1.bf16.msra.mxu0 0
        %3411 = vmatprep.subr.bf16.mxu0 0
        %3412 = vmatpush1.bf16.msra.mxu0 0
        %3413 = vmatprep.subr.bf16.mxu0 0
        %3414 = vmatpush1.bf16.msra.mxu0 0
        %3415 = vmatprep.subr.bf16.mxu0 0
        %3416 = vmatpush1.bf16.msra.mxu0 0
        %3417 = vmatprep.subr.bf16.mxu0 0
        %3418 = vmatpush1.bf16.msra.mxu0 0
        %3419 = vmatprep.subr.bf16.mxu0 0
        %3420 = vmatpush1.bf16.msra.mxu0 %v3403
        %3421 = vmatprep.subr.bf16.mxu0 0
        %3422 = vmatpush2.bf16.msra.mxu0 0
        %3423 = vmatprep.subr.bf16.mxu0 0
        %3424 = vmatpush2.bf16.msra.mxu0 0
        %3425 = vmatprep.subr.bf16.mxu0 0
        %3426 = vmatpush2.bf16.msra.mxu0 0
        %3427 = vmatprep.subr.bf16.mxu0 0
        %3428 = vmatpush2.bf16.msra.mxu0 0
        %3429 = vmatprep.subr.bf16.mxu0 0
        %3430 = vmatpush2.bf16.msra.mxu0 0
        %3431 = vmatprep.subr.bf16.mxu0 0
        %3432 = vmatpush2.bf16.msra.mxu0 0
        %3433 = vmatprep.subr.bf16.mxu0 0
        %3434 = vmatpush2.bf16.msra.mxu0 0
        %3435 = vmatprep.subr.bf16.mxu0 0
        %3436 = vmatpush2.bf16.msra.mxu0 0
        %3437 = vmatprep.mubr.bf16.mxu0 0
        %3438 = vmatmul.mubr.bf16.gmra.mxu0 %v3349
        %v3439 = vpop.f32.mrf.mxu0
        %v3440 = vadd.f32 0.0, %v3439
        %v3441 = vpop.f32.mrf.mxu0
        %v3442 = vpop.f32.mrf.mxu0
        %v3443 = vadd.f32 0.0, %v3442
        %v3444 = vpop.f32.mrf.mxu0
        %3445 = vmatprep.mubr.bf16.mxu0 0
        %3446 = vmatmul.mubr.bf16.gmra.mxu0 %v3352
        %v3447 = vpop.f32.mrf.mxu0
        %v3448 = vadd.f32 0.0, %v3447
        %v3449 = vpop.f32.mrf.mxu0
        %v3450 = vpop.f32.mrf.mxu0
        %v3451 = vadd.f32 0.0, %v3450
        %v3452 = vpop.f32.mrf.mxu0
        %3453 = vmatprep.mubr.bf16.mxu0 0
        %3454 = vmatmul.mubr.bf16.gmra.mxu0 %v3355
        %v3455 = vpop.f32.mrf.mxu0
        %v3456 = vadd.f32 0.0, %v3455
        %v3457 = vpop.f32.mrf.mxu0
        %v3458 = vpop.f32.mrf.mxu0
        %v3459 = vadd.f32 0.0, %v3458
        %v3460 = vpop.f32.mrf.mxu0
        %3461 = vmatprep.mubr.bf16.mxu0 0
        %3462 = vmatmul.mubr.bf16.gmra.mxu0 %v3358
        %v3463 = vpop.f32.mrf.mxu0
        %v3464 = vadd.f32 0.0, %v3463
        %v3465 = vpop.f32.mrf.mxu0
        %v3466 = vpop.f32.mrf.mxu0
        %v3467 = vadd.f32 0.0, %v3466
        %v3468 = vpop.f32.mrf.mxu0
        %3469 = vmatprep.mubr.bf16.mxu0 0
        %3470 = vmatmul.mubr.bf16.gmra.mxu0 %v3361
        %v3471 = vpop.f32.mrf.mxu0
        %v3472 = vadd.f32 0.0, %v3471
        %v3473 = vpop.f32.mrf.mxu0
        %v3474 = vpop.f32.mrf.mxu0
        %v3475 = vadd.f32 0.0, %v3474
        %v3476 = vpop.f32.mrf.mxu0
        %3477 = vmatprep.mubr.bf16.mxu0 0
        %3478 = vmatmul.mubr.bf16.gmra.mxu0 %v3364
        %v3479 = vpop.f32.mrf.mxu0
        %v3480 = vadd.f32 0.0, %v3479
        %v3481 = vpop.f32.mrf.mxu0
        %v3482 = vpop.f32.mrf.mxu0
        %v3483 = vadd.f32 0.0, %v3482
        %v3484 = vpop.f32.mrf.mxu0
        %3485 = vmatprep.mubr.bf16.mxu0 0
        %3486 = vmatmul.mubr.bf16.gmra.mxu0 %v3367
        %v3487 = vpop.f32.mrf.mxu0
        %v3488 = vadd.f32 0.0, %v3487
        %v3489 = vpop.f32.mrf.mxu0
        %v3490 = vpop.f32.mrf.mxu0
        %v3491 = vadd.f32 0.0, %v3490
        %v3492 = vpop.f32.mrf.mxu0
        %3493 = vmatprep.mubr.bf16.mxu0 0
        %3494 = vmatmul.mubr.bf16.gmra.mxu0 %v3370
        %v3495 = vpop.f32.mrf.mxu0
        %v3496 = vadd.f32 0.0, %v3495
        %v3497 = vpop.f32.mrf.mxu0
        %v3498 = vpop.f32.mrf.mxu0
        %v3499 = vadd.f32 0.0, %v3498
        %v3500 = vpop.f32.mrf.mxu0
        %3501 = vmatprep.mubr.bf16.mxu0 0
        %3502 = vmatmul.mubr.bf16.gmra.mxu0 %v3373
        %v3503 = vpop.f32.mrf.mxu0
        %v3504 = vadd.f32 0.0, %v3503
        %v3505 = vpop.f32.mrf.mxu0
        %v3506 = vpop.f32.mrf.mxu0
        %v3507 = vadd.f32 0.0, %v3506
        %v3508 = vpop.f32.mrf.mxu0
        %3509 = vmatprep.mubr.bf16.mxu0 0
        %3510 = vmatmul.mubr.bf16.gmra.mxu0 %v3376
        %v3511 = vpop.f32.mrf.mxu0
        %v3512 = vadd.f32 0.0, %v3511
        %v3513 = vpop.f32.mrf.mxu0
        %v3514 = vpop.f32.mrf.mxu0
        %v3515 = vadd.f32 0.0, %v3514
        %v3516 = vpop.f32.mrf.mxu0
        %3517 = vmatprep.mubr.bf16.mxu0 0
        %3518 = vmatmul.mubr.bf16.gmra.mxu0 %v3379
        %v3519 = vpop.f32.mrf.mxu0
        %v3520 = vadd.f32 0.0, %v3519
        %v3521 = vpop.f32.mrf.mxu0
        %v3522 = vpop.f32.mrf.mxu0
        %v3523 = vadd.f32 0.0, %v3522
        %v3524 = vpop.f32.mrf.mxu0
        %3525 = vmatprep.mubr.bf16.mxu0 0
        %3526 = vmatmul.mubr.bf16.gmra.mxu0 %v3382
        %v3527 = vpop.f32.mrf.mxu0
        %v3528 = vadd.f32 0.0, %v3527
        %v3529 = vpop.f32.mrf.mxu0
        %v3530 = vpop.f32.mrf.mxu0
        %v3531 = vadd.f32 0.0, %v3530
        %v3532 = vpop.f32.mrf.mxu0
        %3533 = vmatprep.mubr.bf16.mxu0 0
        %3534 = vmatmul.mubr.bf16.gmra.mxu0 %v3385
        %v3535 = vpop.f32.mrf.mxu0
        %v3536 = vadd.f32 0.0, %v3535
        %v3537 = vpop.f32.mrf.mxu0
        %v3538 = vpop.f32.mrf.mxu0
        %v3539 = vadd.f32 0.0, %v3538
        %v3540 = vpop.f32.mrf.mxu0
        %3541 = vmatprep.mubr.bf16.mxu0 0
        %3542 = vmatmul.mubr.bf16.gmra.mxu0 %v3388
        %v3543 = vpop.f32.mrf.mxu0
        %v3544 = vadd.f32 0.0, %v3543
        %v3545 = vpop.f32.mrf.mxu0
        %v3546 = vpop.f32.mrf.mxu0
        %v3547 = vadd.f32 0.0, %v3546
        %v3548 = vpop.f32.mrf.mxu0
        %3549 = vmatprep.mubr.bf16.mxu0 0
        %3550 = vmatmul.mubr.bf16.gmra.mxu0 %v3391
        %v3551 = vpop.f32.mrf.mxu0
        %v3552 = vadd.f32 0.0, %v3551
        %v3553 = vpop.f32.mrf.mxu0
        %v3554 = vpop.f32.mrf.mxu0
        %v3555 = vadd.f32 0.0, %v3554
        %v3556 = vpop.f32.mrf.mxu0
        %3557 = vmatprep.mubr.bf16.mxu0 0
        %3558 = vmatmul.mubr.bf16.gmra.mxu0 %v3394
        %v3559 = vpop.f32.mrf.mxu0
        %v3560 = vadd.f32 0.0, %v3559
        %v3561 = vpop.f32.mrf.mxu0
        %v3562 = vpop.f32.mrf.mxu0
        %v3563 = vadd.f32 0.0, %v3562
        %v3564 = vpop.f32.mrf.mxu0
        %3565 = vmatprep.mubr.bf16.mxu0 0
        %3566 = vmatmul.mubr.bf16.gmra.mxu0 %v3397
        %v3567 = vpop.f32.mrf.mxu0
        %v3568 = vadd.f32 0.0, %v3567
        %v3569 = vpop.f32.mrf.mxu0
        %v3570 = vpop.f32.mrf.mxu0
        %v3571 = vadd.f32 0.0, %v3570
        %v3572 = vpop.f32.mrf.mxu0
        %3573 = vmatprep.mubr.bf16.mxu0 0
        %3574 = vmatmul.mubr.bf16.gmra.mxu0 %v3400
        %v3575 = vpop.f32.mrf.mxu0
        %v3576 = vadd.f32 0.0, %v3575
        %v3577 = vpop.f32.mrf.mxu0
        %v3578 = vpop.f32.mrf.mxu0
        %v3579 = vadd.f32 0.0, %v3578
        %v3580 = vpop.f32.mrf.mxu0
        %3581 = vdwg.mxu0
        %v3582 = vadd.f32 %v3268, %v3440
        %v3583 = vadd.f32 %v3269, %v3443
        %v3584 = vadd.f32 %v3270, %v3448
        %v3585 = vadd.f32 %v3271, %v3451
        %v3586 = vadd.f32 %v3272, %v3456
        %v3587 = vadd.f32 %v3273, %v3459
        %v3588 = vadd.f32 %v3274, %v3464
        %v3589 = vadd.f32 %v3275, %v3467
        %v3590 = vadd.f32 %v3276, %v3472
        %v3591 = vadd.f32 %v3277, %v3475
        %v3592 = vadd.f32 %v3278, %v3480
        %v3593 = vadd.f32 %v3279, %v3483
        %v3594 = vadd.f32 %v3280, %v3488
        %v3595 = vadd.f32 %v3281, %v3491
        %v3596 = vadd.f32 %v3282, %v3496
        %v3597 = vadd.f32 %v3283, %v3499
        %v3598 = vadd.f32 %v3284, %v3504
        %v3599 = vadd.f32 %v3285, %v3507
        %v3600 = vadd.f32 %v3286, %v3512
        %v3601 = vadd.f32 %v3287, %v3515
        %v3602 = vadd.f32 %v3288, %v3520
        %v3603 = vadd.f32 %v3289, %v3523
        %v3604 = vadd.f32 %v3290, %v3528
        %v3605 = vadd.f32 %v3291, %v3531
        %v3606 = vadd.f32 %v3292, %v3536
        %v3607 = vadd.f32 %v3293, %v3539
        %v3608 = vadd.f32 %v3294, %v3544
        %v3609 = vadd.f32 %v3295, %v3547
        %v3610 = vadd.f32 %v3296, %v3552
        %v3611 = vadd.f32 %v3297, %v3555
        %v3612 = vadd.f32 %v3298, %v3560
        %v3613 = vadd.f32 %v3299, %v3563
        %v3614 = vadd.f32 %v3300, %v3568
        %v3615 = vadd.f32 %v3301, %v3571
        %v3616 = vadd.f32 %v3302, %v3576
        %v3617 = vadd.f32 %v3303, %v3579
        %v3618 = vld [vmem:[%s2] sm:$0x1]
        %v3620 = vlaneseq
        %v3621 = vshrl.u32 %v3620, 7
        %v3622 = vsub.s32 0, %v3621
        %v3623 = vrot.slane %v3618, %v3622
        %v3625 = vadd.f32 %v3582, %v3623
        %v3626 = vadd.f32 %v3583, %v3623
        %v3627 = vadd.f32 %v3584, %v3623
        %v3628 = vadd.f32 %v3585, %v3623
        %v3629 = vadd.f32 %v3586, %v3623
        %v3630 = vadd.f32 %v3587, %v3623
        %v3631 = vadd.f32 %v3588, %v3623
        %v3632 = vadd.f32 %v3589, %v3623
        %v3633 = vadd.f32 %v3590, %v3623
        %v3634 = vadd.f32 %v3591, %v3623
        %v3635 = vadd.f32 %v3592, %v3623
        %v3636 = vadd.f32 %v3593, %v3623
        %v3637 = vadd.f32 %v3594, %v3623
        %v3638 = vadd.f32 %v3595, %v3623
        %v3639 = vadd.f32 %v3596, %v3623
        %v3640 = vadd.f32 %v3597, %v3623
        %v3641 = vadd.f32 %v3598, %v3623
        %v3642 = vadd.f32 %v3599, %v3623
        %v3643 = vadd.f32 %v3600, %v3623
        %v3644 = vadd.f32 %v3601, %v3623
        %v3645 = vadd.f32 %v3602, %v3623
        %v3646 = vadd.f32 %v3603, %v3623
        %v3647 = vadd.f32 %v3604, %v3623
        %v3648 = vadd.f32 %v3605, %v3623
        %v3649 = vadd.f32 %v3606, %v3623
        %v3650 = vadd.f32 %v3607, %v3623
        %v3651 = vadd.f32 %v3608, %v3623
        %v3652 = vadd.f32 %v3609, %v3623
        %v3653 = vadd.f32 %v3610, %v3623
        %v3654 = vadd.f32 %v3611, %v3623
        %v3655 = vadd.f32 %v3612, %v3623
        %v3656 = vadd.f32 %v3613, %v3623
        %v3657 = vadd.f32 %v3614, %v3623
        %v3658 = vadd.f32 %v3615, %v3623
        %v3659 = vadd.f32 %v3616, %v3623
        %v3660 = vadd.f32 %v3617, %v3623
        %v3661 = vxor.u32 %v3625, 2147483648
        %v3662 = vxor.u32 %v3626, 2147483648
        %v3663 = vxor.u32 %v3627, 2147483648
        %v3664 = vxor.u32 %v3628, 2147483648
        %v3665 = vxor.u32 %v3629, 2147483648
        %v3666 = vxor.u32 %v3630, 2147483648
        %v3667 = vxor.u32 %v3631, 2147483648
        %v3668 = vxor.u32 %v3632, 2147483648
        %v3669 = vxor.u32 %v3633, 2147483648
        %v3670 = vxor.u32 %v3634, 2147483648
        %v3671 = vxor.u32 %v3635, 2147483648
        %v3672 = vxor.u32 %v3636, 2147483648
        %v3673 = vxor.u32 %v3637, 2147483648
        %v3674 = vxor.u32 %v3638, 2147483648
        %v3675 = vxor.u32 %v3639, 2147483648
        %v3676 = vxor.u32 %v3640, 2147483648
        %v3677 = vxor.u32 %v3641, 2147483648
        %v3678 = vxor.u32 %v3642, 2147483648
        %v3679 = vxor.u32 %v3643, 2147483648
        %v3680 = vxor.u32 %v3644, 2147483648
        %v3681 = vxor.u32 %v3645, 2147483648
        %v3682 = vxor.u32 %v3646, 2147483648
        %v3683 = vxor.u32 %v3647, 2147483648
        %v3684 = vxor.u32 %v3648, 2147483648
        %v3685 = vxor.u32 %v3649, 2147483648
        %v3686 = vxor.u32 %v3650, 2147483648
        %v3687 = vxor.u32 %v3651, 2147483648
        %v3688 = vxor.u32 %v3652, 2147483648
        %v3689 = vxor.u32 %v3653, 2147483648
        %v3690 = vxor.u32 %v3654, 2147483648
        %v3691 = vxor.u32 %v3655, 2147483648
        %v3692 = vxor.u32 %v3656, 2147483648
        %v3693 = vxor.u32 %v3657, 2147483648
        %v3694 = vxor.u32 %v3658, 2147483648
        %v3695 = vxor.u32 %v3659, 2147483648
        %v3696 = vxor.u32 %v3660, 2147483648
        %v3697 = vmul.f32 %v3661, 1.442695
        %v3698 = vpow.pop %v3697
        %v3699 = vmul.f32 %v3662, 1.442695
        %v3700 = vpow.pop %v3699
        %v3701 = vmul.f32 %v3663, 1.442695
        %v3702 = vpow.pop %v3701
        %v3703 = vmul.f32 %v3664, 1.442695
        %v3704 = vpow.pop %v3703
        %v3705 = vmul.f32 %v3665, 1.442695
        %v3706 = vpow.pop %v3705
        %v3707 = vmul.f32 %v3666, 1.442695
        %v3708 = vpow.pop %v3707
        %v3709 = vmul.f32 %v3667, 1.442695
        %v3710 = vpow.pop %v3709
        %v3711 = vmul.f32 %v3668, 1.442695
        %v3712 = vpow.pop %v3711
        %v3713 = vmul.f32 %v3669, 1.442695
        %v3714 = vpow.pop %v3713
        %v3715 = vmul.f32 %v3670, 1.442695
        %v3716 = vpow.pop %v3715
        %v3717 = vmul.f32 %v3671, 1.442695
        %v3718 = vpow.pop %v3717
        %v3719 = vmul.f32 %v3672, 1.442695
        %v3720 = vpow.pop %v3719
        %v3721 = vmul.f32 %v3673, 1.442695
        %v3722 = vpow.pop %v3721
        %v3723 = vmul.f32 %v3674, 1.442695
        %v3724 = vpow.pop %v3723
        %v3725 = vmul.f32 %v3675, 1.442695
        %v3726 = vpow.pop %v3725
        %v3727 = vmul.f32 %v3676, 1.442695
        %v3728 = vpow.pop %v3727
        %v3729 = vmul.f32 %v3677, 1.442695
        %v3730 = vpow.pop %v3729
        %v3731 = vmul.f32 %v3678, 1.442695
        %v3732 = vpow.pop %v3731
        %v3733 = vmul.f32 %v3679, 1.442695
        %v3734 = vpow.pop %v3733
        %v3735 = vmul.f32 %v3680, 1.442695
        %v3736 = vpow.pop %v3735
        %v3737 = vmul.f32 %v3681, 1.442695
        %v3738 = vpow.pop %v3737
        %v3739 = vmul.f32 %v3682, 1.442695
        %v3740 = vpow.pop %v3739
        %v3741 = vmul.f32 %v3683, 1.442695
        %v3742 = vpow.pop %v3741
        %v3743 = vmul.f32 %v3684, 1.442695
        %v3744 = vpow.pop %v3743
        %v3745 = vmul.f32 %v3685, 1.442695
        %v3746 = vpow.pop %v3745
        %v3747 = vmul.f32 %v3686, 1.442695
        %v3748 = vpow.pop %v3747
        %v3749 = vmul.f32 %v3687, 1.442695
        %v3750 = vpow.pop %v3749
        %v3751 = vmul.f32 %v3688, 1.442695
        %v3752 = vpow.pop %v3751
        %v3753 = vmul.f32 %v3689, 1.442695
        %v3754 = vpow.pop %v3753
        %v3755 = vmul.f32 %v3690, 1.442695
        %v3756 = vpow.pop %v3755
        %v3757 = vmul.f32 %v3691, 1.442695
        %v3758 = vpow.pop %v3757
        %v3759 = vmul.f32 %v3692, 1.442695
        %v3760 = vpow.pop %v3759
        %v3761 = vmul.f32 %v3693, 1.442695
        %v3762 = vpow.pop %v3761
        %v3763 = vmul.f32 %v3694, 1.442695
        %v3764 = vpow.pop %v3763
        %v3765 = vmul.f32 %v3695, 1.442695
        %v3766 = vpow.pop %v3765
        %v3767 = vmul.f32 %v3696, 1.442695
        %v3768 = vpow.pop %v3767
        %v3769 = vadd.f32 %v3698, 1.0
        %v3770 = vadd.f32 %v3700, 1.0
        %v3771 = vadd.f32 %v3702, 1.0
        %v3772 = vadd.f32 %v3704, 1.0
        %v3773 = vadd.f32 %v3706, 1.0
        %v3774 = vadd.f32 %v3708, 1.0
        %v3775 = vadd.f32 %v3710, 1.0
        %v3776 = vadd.f32 %v3712, 1.0
        %v3777 = vadd.f32 %v3714, 1.0
        %v3778 = vadd.f32 %v3716, 1.0
        %v3779 = vadd.f32 %v3718, 1.0
        %v3780 = vadd.f32 %v3720, 1.0
        %v3781 = vadd.f32 %v3722, 1.0
        %v3782 = vadd.f32 %v3724, 1.0
        %v3783 = vadd.f32 %v3726, 1.0
        %v3784 = vadd.f32 %v3728, 1.0
        %v3785 = vadd.f32 %v3730, 1.0
        %v3786 = vadd.f32 %v3732, 1.0
        %v3787 = vadd.f32 %v3734, 1.0
        %v3788 = vadd.f32 %v3736, 1.0
        %v3789 = vadd.f32 %v3738, 1.0
        %v3790 = vadd.f32 %v3740, 1.0
        %v3791 = vadd.f32 %v3742, 1.0
        %v3792 = vadd.f32 %v3744, 1.0
        %v3793 = vadd.f32 %v3746, 1.0
        %v3794 = vadd.f32 %v3748, 1.0
        %v3795 = vadd.f32 %v3750, 1.0
        %v3796 = vadd.f32 %v3752, 1.0
        %v3797 = vadd.f32 %v3754, 1.0
        %v3798 = vadd.f32 %v3756, 1.0
        %v3799 = vadd.f32 %v3758, 1.0
        %v3800 = vadd.f32 %v3760, 1.0
        %v3801 = vadd.f32 %v3762, 1.0
        %v3802 = vadd.f32 %v3764, 1.0
        %v3803 = vadd.f32 %v3766, 1.0
        %v3804 = vadd.f32 %v3768, 1.0
        %v3805 = vrcp.pop %v3769
        %v3806 = vmul.f32 1.0, %v3805
        %v3807 = vrcp.pop %v3770
        %v3808 = vmul.f32 1.0, %v3807
        %v3809 = vrcp.pop %v3771
        %v3810 = vmul.f32 1.0, %v3809
        %v3811 = vrcp.pop %v3772
        %v3812 = vmul.f32 1.0, %v3811
        %v3813 = vrcp.pop %v3773
        %v3814 = vmul.f32 1.0, %v3813
        %v3815 = vrcp.pop %v3774
        %v3816 = vmul.f32 1.0, %v3815
        %v3817 = vrcp.pop %v3775
        %v3818 = vmul.f32 1.0, %v3817
        %v3819 = vrcp.pop %v3776
        %v3820 = vmul.f32 1.0, %v3819
        %v3821 = vrcp.pop %v3777
        %v3822 = vmul.f32 1.0, %v3821
        %v3823 = vrcp.pop %v3778
        %v3824 = vmul.f32 1.0, %v3823
        %v3825 = vrcp.pop %v3779
        %v3826 = vmul.f32 1.0, %v3825
        %v3827 = vrcp.pop %v3780
        %v3828 = vmul.f32 1.0, %v3827
        %v3829 = vrcp.pop %v3781
        %v3830 = vmul.f32 1.0, %v3829
        %v3831 = vrcp.pop %v3782
        %v3832 = vmul.f32 1.0, %v3831
        %v3833 = vrcp.pop %v3783
        %v3834 = vmul.f32 1.0, %v3833
        %v3835 = vrcp.pop %v3784
        %v3836 = vmul.f32 1.0, %v3835
        %v3837 = vrcp.pop %v3785
        %v3838 = vmul.f32 1.0, %v3837
        %v3839 = vrcp.pop %v3786
        %v3840 = vmul.f32 1.0, %v3839
        %v3841 = vrcp.pop %v3787
        %v3842 = vmul.f32 1.0, %v3841
        %v3843 = vrcp.pop %v3788
        %v3844 = vmul.f32 1.0, %v3843
        %v3845 = vrcp.pop %v3789
        %v3846 = vmul.f32 1.0, %v3845
        %v3847 = vrcp.pop %v3790
        %v3848 = vmul.f32 1.0, %v3847
        %v3849 = vrcp.pop %v3791
        %v3850 = vmul.f32 1.0, %v3849
        %v3851 = vrcp.pop %v3792
        %v3852 = vmul.f32 1.0, %v3851
        %v3853 = vrcp.pop %v3793
        %v3854 = vmul.f32 1.0, %v3853
        %v3855 = vrcp.pop %v3794
        %v3856 = vmul.f32 1.0, %v3855
        %v3857 = vrcp.pop %v3795
        %v3858 = vmul.f32 1.0, %v3857
        %v3859 = vrcp.pop %v3796
        %v3860 = vmul.f32 1.0, %v3859
        %v3861 = vrcp.pop %v3797
        %v3862 = vmul.f32 1.0, %v3861
        %v3863 = vrcp.pop %v3798
        %v3864 = vmul.f32 1.0, %v3863
        %v3865 = vrcp.pop %v3799
        %v3866 = vmul.f32 1.0, %v3865
        %v3867 = vrcp.pop %v3800
        %v3868 = vmul.f32 1.0, %v3867
        %v3869 = vrcp.pop %v3801
        %v3870 = vmul.f32 1.0, %v3869
        %v3871 = vrcp.pop %v3802
        %v3872 = vmul.f32 1.0, %v3871
        %v3873 = vrcp.pop %v3803
        %v3874 = vmul.f32 1.0, %v3873
        %v3875 = vrcp.pop %v3804
        %v3876 = vmul.f32 1.0, %v3875
        %v3877 = vmul.f32 %v3625, %v3806
        %v3878 = vmul.f32 %v3626, %v3808
        %v3879 = vmul.f32 %v3627, %v3810
        %v3880 = vmul.f32 %v3628, %v3812
        %v3881 = vmul.f32 %v3629, %v3814
        %v3882 = vmul.f32 %v3630, %v3816
        %v3883 = vmul.f32 %v3631, %v3818
        %v3884 = vmul.f32 %v3632, %v3820
        %v3885 = vmul.f32 %v3633, %v3822
        %v3886 = vmul.f32 %v3634, %v3824
        %v3887 = vmul.f32 %v3635, %v3826
        %v3888 = vmul.f32 %v3636, %v3828
        %v3889 = vmul.f32 %v3637, %v3830
        %v3890 = vmul.f32 %v3638, %v3832
        %v3891 = vmul.f32 %v3639, %v3834
        %v3892 = vmul.f32 %v3640, %v3836
        %v3893 = vmul.f32 %v3641, %v3838
        %v3894 = vmul.f32 %v3642, %v3840
        %v3895 = vmul.f32 %v3643, %v3842
        %v3896 = vmul.f32 %v3644, %v3844
        %v3897 = vmul.f32 %v3645, %v3846
        %v3898 = vmul.f32 %v3646, %v3848
        %v3899 = vmul.f32 %v3647, %v3850
        %v3900 = vmul.f32 %v3648, %v3852
        %v3901 = vmul.f32 %v3649, %v3854
        %v3902 = vmul.f32 %v3650, %v3856
        %v3903 = vmul.f32 %v3651, %v3858
        %v3904 = vmul.f32 %v3652, %v3860
        %v3905 = vmul.f32 %v3653, %v3862
        %v3906 = vmul.f32 %v3654, %v3864
        %v3907 = vmul.f32 %v3655, %v3866
        %v3908 = vmul.f32 %v3656, %v3868
        %v3909 = vmul.f32 %v3657, %v3870
        %v3910 = vmul.f32 %v3658, %v3872
        %v3911 = vmul.f32 %v3659, %v3874
        %v3912 = vmul.f32 %v3660, %v3876
        %v3913 = vpack.c.bf16 %v3878, %v3877
        %v3914 = vpack.c.bf16 %v3880, %v3879
        %v3915 = vpack.c.bf16 %v3882, %v3881
        %v3916 = vpack.c.bf16 %v3884, %v3883
        %v3917 = vpack.c.bf16 %v3886, %v3885
        %v3918 = vpack.c.bf16 %v3888, %v3887
        %v3919 = vpack.c.bf16 %v3890, %v3889
        %v3920 = vpack.c.bf16 %v3892, %v3891
        %v3921 = vpack.c.bf16 %v3894, %v3893
        %v3922 = vpack.c.bf16 %v3896, %v3895
        %v3923 = vpack.c.bf16 %v3898, %v3897
        %v3924 = vpack.c.bf16 %v3900, %v3899
        %v3925 = vpack.c.bf16 %v3902, %v3901
        %v3926 = vpack.c.bf16 %v3904, %v3903
        %v3927 = vpack.c.bf16 %v3906, %v3905
        %v3928 = vpack.c.bf16 %v3908, %v3907
        %v3929 = vpack.c.bf16 %v3910, %v3909
        %v3930 = vpack.c.bf16 %v3912, %v3911
        %v3949 = vunpack.c.l.b16 %v3913
        %v3950 = vunpack.c.h.b16 %v3913
        %v3951 = vunpack.c.l.b16 %v3914
        %v3952 = vunpack.c.h.b16 %v3914
        %v3953 = vunpack.c.l.b16 %v3915
        %v3954 = vunpack.c.h.b16 %v3915
        %v3955 = vunpack.c.l.b16 %v3916
        %v3956 = vunpack.c.h.b16 %v3916
        %v3957 = vunpack.c.l.b16 %v3917
        %v3958 = vunpack.c.h.b16 %v3917
        %v3959 = vunpack.c.l.b16 %v3918
        %v3960 = vunpack.c.h.b16 %v3918
        %v3961 = vunpack.c.l.b16 %v3919
        %v3962 = vunpack.c.h.b16 %v3919
        %v3963 = vunpack.c.l.b16 %v3920
        %v3964 = vunpack.c.h.b16 %v3920
        %v3965 = vunpack.c.l.b16 %v3921
        %v3966 = vunpack.c.h.b16 %v3921
        %v3967 = vunpack.c.l.b16 %v3922
        %v3968 = vunpack.c.h.b16 %v3922
        %v3969 = vunpack.c.l.b16 %v3923
        %v3970 = vunpack.c.h.b16 %v3923
        %v3971 = vunpack.c.l.b16 %v3924
        %v3972 = vunpack.c.h.b16 %v3924
        %v3973 = vunpack.c.l.b16 %v3925
        %v3974 = vunpack.c.h.b16 %v3925
        %v3975 = vunpack.c.l.b16 %v3926
        %v3976 = vunpack.c.h.b16 %v3926
        %v3977 = vunpack.c.l.b16 %v3927
        %v3978 = vunpack.c.h.b16 %v3927
        %v3979 = vunpack.c.l.b16 %v3928
        %v3980 = vunpack.c.h.b16 %v3928
        %v3981 = vunpack.c.l.b16 %v3929
        %v3982 = vunpack.c.h.b16 %v3929
        %v3983 = vunpack.c.l.b16 %v3930
        %v3984 = vunpack.c.h.b16 %v3930
        %v3985 = vpack.c.b16 %v3949, %v3949
        %v3986 = vpack.c.b16 %v3950, %v3950
        %v3987 = vpack.c.b16 %v3951, %v3951
        %v3988 = vpack.c.b16 %v3952, %v3952
        %v3989 = vpack.c.b16 %v3953, %v3953
        %v3990 = vpack.c.b16 %v3954, %v3954
        %v3991 = vpack.c.b16 %v3955, %v3955
        %v3992 = vpack.c.b16 %v3956, %v3956
        %v3993 = vpack.c.b16 %v3957, %v3957
        %v3994 = vpack.c.b16 %v3958, %v3958
        %v3995 = vpack.c.b16 %v3959, %v3959
        %v3996 = vpack.c.b16 %v3960, %v3960
        %v3997 = vpack.c.b16 %v3961, %v3961
        %v3998 = vpack.c.b16 %v3962, %v3962
        %v3999 = vpack.c.b16 %v3963, %v3963
        %v4000 = vpack.c.b16 %v3964, %v3964
        %v4001 = vpack.c.b16 %v3965, %v3965
        %v4002 = vpack.c.b16 %v3966, %v3966
        %v4003 = vpack.c.b16 %v3967, %v3967
        %v4004 = vpack.c.b16 %v3968, %v3968
        %v4005 = vpack.c.b16 %v3969, %v3969
        %v4006 = vpack.c.b16 %v3970, %v3970
        %v4007 = vpack.c.b16 %v3971, %v3971
        %v4008 = vpack.c.b16 %v3972, %v3972
        %v4009 = vpack.c.b16 %v3973, %v3973
        %v4010 = vpack.c.b16 %v3974, %v3974
        %v4011 = vpack.c.b16 %v3975, %v3975
        %v4012 = vpack.c.b16 %v3976, %v3976
        %v4013 = vpack.c.b16 %v3977, %v3977
        %v4014 = vpack.c.b16 %v3978, %v3978
        %v4015 = vpack.c.b16 %v3979, %v3979
        %v4016 = vpack.c.b16 %v3980, %v3980
        %v4017 = vpack.c.b16 %v3981, %v3981
        %v4018 = vpack.c.b16 %v3982, %v3982
        %v4019 = vpack.c.b16 %v3983, %v3983
        %v4020 = vpack.c.b16 %v3984, %v3984
        %4057 = vst [vmem:[%s163] sm:$0xf] %v3985
        %4058 = vst [vmem:[%s163 + $0x4] sm:$0xf] %v3986
        %4059 = vst [vmem:[%s163 + $0x8] sm:$0xf] %v3987
        %4060 = vst [vmem:[%s163 + $0xc] sm:$0xf] %v3988
        %4061 = vst [vmem:[%s163 + $0x10] sm:$0xf] %v3989
        %4062 = vst [vmem:[%s163 + $0x14] sm:$0xf] %v3990
        %4063 = vst [vmem:[%s163 + $0x18] sm:$0xf] %v3991
        %4064 = vst [vmem:[%s163 + $0x1c] sm:$0xf] %v3992
        %4065 = vst [vmem:[%s163 + $0x20] sm:$0xf] %v3993
        %4066 = vst [vmem:[%s163 + $0x24] sm:$0xf] %v3994
        %4067 = vst [vmem:[%s163 + $0x28] sm:$0xf] %v3995
        %4068 = vst [vmem:[%s163 + $0x2c] sm:$0xf] %v3996
        %4069 = vst [vmem:[%s163 + $0x30] sm:$0xf] %v3997
        %4070 = vst [vmem:[%s163 + $0x34] sm:$0xf] %v3998
        %4071 = vst [vmem:[%s163 + $0x38] sm:$0xf] %v3999
        %4072 = vst [vmem:[%s163 + $0x3c] sm:$0xf] %v4000
        %4073 = vst [vmem:[%s163 + $0x40] sm:$0xf] %v4001
        %4074 = vst [vmem:[%s163 + $0x44] sm:$0xf] %v4002
        %4075 = vst [vmem:[%s163 + $0x48] sm:$0xf] %v4003
        %4076 = vst [vmem:[%s163 + $0x4c] sm:$0xf] %v4004
        %4077 = vst [vmem:[%s163 + $0x50] sm:$0xf] %v4005
        %4078 = vst [vmem:[%s163 + $0x54] sm:$0xf] %v4006
        %4079 = vst [vmem:[%s163 + $0x58] sm:$0xf] %v4007
        %4080 = vst [vmem:[%s163 + $0x5c] sm:$0xf] %v4008
        %4081 = vst [vmem:[%s163 + $0x60] sm:$0xf] %v4009
        %4082 = vst [vmem:[%s163 + $0x64] sm:$0xf] %v4010
        %4083 = vst [vmem:[%s163 + $0x68] sm:$0xf] %v4011
        %4084 = vst [vmem:[%s163 + $0x6c] sm:$0xf] %v4012
        %4085 = vst [vmem:[%s163 + $0x70] sm:$0xf] %v4013
        %4086 = vst [vmem:[%s163 + $0x74] sm:$0xf] %v4014
        %4087 = vst [vmem:[%s163 + $0x78] sm:$0xf] %v4015
        %4088 = vst [vmem:[%s163 + $0x7c] sm:$0xf] %v4016
        %4089 = vst [vmem:[%s163 + $0x80] sm:$0xf] %v4017
        %4090 = vst [vmem:[%s163 + $0x84] sm:$0xf] %v4018
        %4091 = vst [vmem:[%s163 + $0x88] sm:$0xf] %v4019
        %4092 = vst [vmem:[%s163 + $0x8c] sm:$0xf] %v4020
        %s4093 = sand.u32 %s93, 1
        %s4094 = scalar_lea.sflag [#allocation3], %s4093
        %s4095 = sand.u32 %s93, 1
        %s4096 = smul.addr %s4095, 144
        %s4097 = scalar_lea.vmem [#allocation2], %s4096
        // Predicated region
        $region33: #{tpu_custom_call.1} parent=31 // pred_check
          %p4098 = pneg %p103
        $region34: #{tpu_custom_call.1} parent=31 // pred_check_branch
          %4100 = sbr.rel (%p4098) target = $region36
        $region35: #{tpu_custom_call.1} parent=31 // pred_region
          %s4102 = ssub.s32 2304, 2304
          %4103 = vsyncadd %s4094, %s4102
          %s4104 = smul.addr %s17, 36
          %s4105 = smul.addr %s4104, 64
          %s4106 = scalar_lea.hbm %s3, %s4105
          %s4107 = sshll.u32 %s4097, 4
          %s4108 = int_to_ptr.vmem [resolvable:$true] %s4107
          %4113 = dma.vmem_to_hbm [thread:$0]  %s4108, 2304, %s4106, %s4094, 64, 64, 4
        $region36: #{tpu_custom_call.1} parent=31 // pred_fallthru
          _
      $region32: #{tpu_custom_call.1} parent=5 // pred_fallthru
        _
      %p4114 = scmp.le.s32.totalorder 2, %s12
      // Predicated region
      $region37: #{tpu_custom_call.1} parent=5 // pred_check
        %p4115 = pneg %p4114
      $region38: #{tpu_custom_call.1} parent=5 // pred_check_branch
        %4117 = sbr.rel (%p4115) target = $region40
      $region39: #{tpu_custom_call.1} parent=5 // pred_region
        %s4118 = ssub.s32 %s12, 2
        // Predicated region
        $region41: #{tpu_custom_call.1} parent=39 // pred_check
          %p4119 = pneg %p109
        $region42: #{tpu_custom_call.1} parent=39 // pred_check_branch
          %4121 = sbr.rel (%p4119) target = $region44
        $region43: #{tpu_custom_call.1} parent=39 // pred_region
          %s4122 = sand.u32 %s94, 1
          %s4123 = scalar_lea.sflag [#allocation3], %s4122
          %s4124 = sand.u32 %s94, 1
          %s4125 = smul.addr %s4124, 144
          %s4126 = scalar_lea.vmem [#allocation2], %s4125
          %4127 = dma.done %s4123, 2304
        $region44: #{tpu_custom_call.1} parent=39 // pred_fallthru
          _
      $region40: #{tpu_custom_call.1} parent=5 // pred_fallthru
        _
    $region6: #{tpu_custom_call.1} parent=1 // loop_footer
      %s16 = sadd.s32 1, %s12
    $region7: #{tpu_custom_call.1} parent=1 // loop_footer_branch
      %11 = sbr.rel target = $region3
    $region8: #{tpu_custom_call.1} parent=1 // loop_exit
      _
    %4128 = vsyncpa [#allocation3], 1
    %s4129 = scalar_lea.sflag [#allocation3], 1
    %4130 = vsyncpa %s4129, 1

</llo_original>
